<compile_context>
chip_gen: v6e
topology: v6e:2x2x1
jax: 0.10.0
libtpu: 0.0.40
codegen_flags: <defaults>
</compile_context>

<pallas_src>
import jax
import jax.numpy as jnp
from jax import lax
from jax.experimental import pallas as pl
from jax.experimental.pallas import tpu as pltpu


# ------------------------------- geometry ----------------------------------

def _round_up(x, m):
    return ((x + m - 1) // m) * m


def make_geometry(N, H, W, out_features):
    """Static spatial bookkeeping for the 4 convs (k=3) + 2 pools of the module."""
    def conv_out(h, k, s, p):
        return (h + 2 * p - k) // s + 1

    g = {'N': N, 'out': out_features}
    # conv1: k3 s2 p2
    H1, W1 = conv_out(H, 3, 2, 2), conv_out(W, 3, 2, 2)
    g['c1_out'] = (H1, W1)
    # conv2 consumes conv1 output zero-padded by 2 (stride 2), then ReLU + pool 2x2
    Hp2, Wp2 = H1 + 4, W1 + 4
    R2 = N * Hp2 * Wp2
    g['c2_pad'] = (Hp2, Wp2, R2, _round_up(R2 + 2 * Wp2 + 2, 128))
    H2, W2 = conv_out(H1, 3, 2, 2), conv_out(W1, 3, 2, 2)
    g['c2_pool'] = (H2 // 2, W2 // 2)
    # conv3: k3 s1 p2 on pooled conv2 output
    H2p, W2p = g['c2_pool']
    Hp3, Wp3 = H2p + 4, W2p + 4
    R3 = N * Hp3 * Wp3
    g['c3_pad'] = (Hp3, Wp3, R3, _round_up(R3 + 2 * Wp3 + 2, 128))
    H3, W3 = conv_out(H2p, 3, 1, 2), conv_out(W2p, 3, 1, 2)
    g['c3_out'] = (H3, W3)
    # conv4: k3 s1 p2, then pool 2x2
    Hp4, Wp4 = H3 + 4, W3 + 4
    R4 = N * Hp4 * Wp4
    g['c4_pad'] = (Hp4, Wp4, R4, _round_up(R4 + 2 * Wp4 + 2, 128))
    H4, W4 = conv_out(H3, 3, 1, 2), conv_out(W3, 3, 1, 2)
    g['c4_pool'] = (H4 // 2, W4 // 2)
    return g


# --------------------------- fused Pallas kernel ----------------------------

def _make_kernel(geo, C):
    N = geo['N']
    Hp2, Wp2, R2, _F2 = geo['c2_pad']
    Hp3, Wp3, R3, F3 = geo['c3_pad']
    Hp4, Wp4, R4, F4 = geo['c4_pad']
    H2p, W2p = geo['c2_pool']
    H3, W3 = geo['c3_out']
    H4p, W4p = geo['c4_pool']
    S4 = H4p * W4p
    M2 = N * H2p * W2p              # pooled conv2 columns (per phase block)
    M4 = N * S4                     # pooled conv4 columns (per phase block)

    def conv_taps(wstk, apad, Wp, R):
        # apad: (C, F) zero-padded, lane-flattened activation.
        # wstk: (9*C, C) with rows [q*C:(q+1)*C] = W[:, :, kh, kw], q = kh*3+kw.
        y = jnp.dot(wstk, apad, preferred_element_type=jnp.float32)     # (9C, F)
        acc = None
        for kh in range(3):
            for kw in range(3):
                q = kh * 3 + kw
                d = kh * Wp + kw
                t = y[q * C:(q + 1) * C, d:d + R]
                acc = t if acc is None else acc + t
        return acc                                                       # (C, R)

    def pool4(t, m):
        # max over the 4 contiguous pool-phase lane blocks of width m
        return jnp.maximum(jnp.maximum(t[:, 0:m], t[:, m:2 * m]),
                           jnp.maximum(t[:, 2 * m:3 * m], t[:, 3 * m:4 * m]))

    def kernel(p1_ref, w1_ref,
               w2_ref, b2_ref, g2_ref,
               w3_ref, b3_ref, g3_ref,
               w4_ref, b4_ref, g4_ref,
               wfc_ref, bfc_ref,
               out_ref,
               a2p_ref, a3p_ref, fc_ref):
        f32 = jnp.float32

        # ---- conv1 + ReLU: output lands directly in conv2's padded flat layout
        # (bias folded into the matmul through the interior-mask row of p1).
        a1p = jnp.maximum(
            jnp.dot(w1_ref[...], p1_ref[...], preferred_element_type=f32), 0.0)

        # ---- conv2 + ReLU + MaxPool(2,2) (phases fused into one G matmul)
        b2 = conv_taps(w2_ref[...], a1p, Wp2, R2)
        t2 = jnp.dot(b2, g2_ref[...], preferred_element_type=f32)        # (C, 4*M2)
        a2 = jnp.maximum(pool4(t2, M2) + b2_ref[...], 0.0)               # (C, M2)

        # scatter pooled rows into conv3's zero-padded input scratch
        a2p_ref[...] = jnp.zeros((C, F3), f32)
        for n in range(N):
            for h in range(H2p):
                dst = n * Hp3 * Wp3 + (h + 2) * Wp3 + 2
                src = (n * H2p + h) * W2p
                a2p_ref[:, dst:dst + W2p] = a2[:, src:src + W2p]

        # ---- conv3 + ReLU
        b3 = conv_taps(w3_ref[...], a2p_ref[...], Wp3, R3)
        t3 = jnp.dot(b3, g3_ref[...], preferred_element_type=f32)        # (C, N*H3*W3)
        a3 = jnp.maximum(t3 + b3_ref[...], 0.0)

        a3p_ref[...] = jnp.zeros((C, F4), f32)
        for n in range(N):
            for h in range(H3):
                dst = n * Hp4 * Wp4 + (h + 2) * Wp4 + 2
                src = (n * H3 + h) * W3
                a3p_ref[:, dst:dst + W3] = a3[:, src:src + W3]

        # ---- conv4 + ReLU + MaxPool(2,2)
        b4 = conv_taps(w4_ref[...], a3p_ref[...], Wp4, R4)
        t4 = jnp.dot(b4, g4_ref[...], preferred_element_type=f32)        # (C, 4*M4)
        a4 = jnp.maximum(pool4(t4, M4) + b4_ref[...], 0.0)               # (C, N*S4)

        # ---- classifier: PyTorch (c, h, w) flatten order, then Linear
        for n in range(N):
            for c in range(C):
                fc_ref[n:n + 1, c * S4:(c + 1) * S4] = a4[c:c + 1, n * S4:(n + 1) * S4]
        out_ref[...] = (jnp.dot(fc_ref[...], wfc_ref[...],
                                preferred_element_type=f32)
                        + bfc_ref[...]).astype(out_ref.dtype)

    return kernel


def build_forward(geo, hidden):
    C = hidden
    N = geo['N']
    OUT = geo['out']
    _, _, _, F3 = geo['c3_pad']
    _, _, _, F4 = geo['c4_pad']
    H4p, W4p = geo['c4_pool']
    S4 = H4p * W4p

    kernel = _make_kernel(geo, C)
    vmem_spec = pl.BlockSpec(memory_space=pltpu.MemorySpace.VMEM)
    call = pl.pallas_call(
        kernel,
        out_shape=jax.ShapeDtypeStruct((N, OUT), jnp.float32),
        in_specs=[vmem_spec] * 13,
        out_specs=vmem_spec,
        scratch_shapes=[pltpu.VMEM((C, F3), jnp.float32),
                        pltpu.VMEM((C, F4), jnp.float32),
                        pltpu.VMEM((N, C * S4), jnp.float32)],
    )

    @jax.jit
    def forward(prep, x):
        p1 = _build_conv1_patches(x, geo)
        return call(p1, prep['w1aug'],
                    prep['w2s'], prep['b2'], prep['g2'],
                    prep['w3s'], prep['b3'], prep['g3'],
                    prep['w4s'], prep['b4'], prep['g4'],
                    prep['wfc_t'], prep['bfc'])

    return forward


# ------------------------- host-side prep (one time) ------------------------

def _onehot_cols(idx, rows):
    idx = jnp.asarray(idx, jnp.int32)
    return (jnp.arange(rows, dtype=jnp.int32)[:, None] == idx[None, :]
            ).astype(jnp.float32)                                        # (rows, len(idx))


def _g_conv(N, Hp, Wp, stride, Ho, Wo):
    idx = [n * Hp * Wp + (stride * ho) * Wp + (stride * wo)
           for n in range(N) for ho in range(Ho) for wo in range(Wo)]
    return _onehot_cols(idx, N * Hp * Wp)


def _g_conv_pool(N, Hp, Wp, stride, Hpo, Wpo):
    idx = []
    for dh in (0, 1):
        for dw in (0, 1):
            for n in range(N):
                for hp in range(Hpo):
                    for wp in range(Wpo):
                        ho, wo = 2 * hp + dh, 2 * wp + dw
                        idx.append(n * Hp * Wp + (stride * ho) * Wp + (stride * wo))
    return _onehot_cols(idx, N * Hp * Wp)


def prepare_params(params, geo):
    """One-time layout prep: tap-stacked conv weights, (C,1) biases, 0/1
    selection matrices (pool phases folded in for conv2/conv4), transposed FC."""
    N = geo['N']
    C = params['w2'].shape[0]
    Hp2, Wp2, _, _ = geo['c2_pad']
    Hp3, Wp3, _, _ = geo['c3_pad']
    Hp4, Wp4, _, _ = geo['c4_pad']
    H2p, W2p = geo['c2_pool']
    H3, W3 = geo['c3_out']
    H4p, W4p = geo['c4_pool']

    def stack_taps(w):      # (Cout, Cin, 3, 3) -> (9*Cout, Cin), rows (kh, kw, cout)
        return jnp.transpose(w, (2, 3, 0, 1)).reshape(9 * w.shape[0], w.shape[1])

    return {
        'w1aug': jnp.concatenate([params['w1'].reshape(C, -1),
                                  params['b1'].reshape(C, 1)], axis=1),
        'w2s': stack_taps(params['w2']), 'b2': params['b2'].reshape(C, 1),
        'g2': _g_conv_pool(N, Hp2, Wp2, 2, H2p, W2p),
        'w3s': stack_taps(params['w3']), 'b3': params['b3'].reshape(C, 1),
        'g3': _g_conv(N, Hp3, Wp3, 1, H3, W3),
        'w4s': stack_taps(params['w4']), 'b4': params['b4'].reshape(C, 1),
        'g4': _g_conv_pool(N, Hp4, Wp4, 1, H4p, W4p),
        'wfc_t': params['wfc'].T,
        'bfc': params['bfc'].reshape(1, -1),
    }


def _build_conv1_patches(x, geo):
    """im2col of the raw input for conv1 (k3, s2, p2).  Columns are laid out in
    conv2's zero-padded flat coordinate system; a trailing all-interior mask row
    lets conv1's bias be folded into the matmul (pad columns stay exactly 0)."""
    N, Cin, _H, _W = x.shape
    H1, W1 = geo['c1_out']
    Hp2, Wp2, R2, F2 = geo['c2_pad']
    xp = jnp.pad(x, ((0, 0), (0, 0), (2, 2), (2, 2)))
    rows = []
    for ci in range(Cin):
        for kh in range(3):
            for kw in range(3):
                rows.append(xp[:, ci,
                               kh:kh + 2 * (H1 - 1) + 1:2,
                               kw:kw + 2 * (W1 - 1) + 1:2])              # (N, H1, W1)
    p = jnp.stack(rows, axis=0)                                          # (Cin*9, N, H1, W1)
    p = jnp.concatenate([p, jnp.ones((1, N, H1, W1), x.dtype)], axis=0)  # + mask row
    p = jnp.pad(p, ((0, 0), (0, 0), (2, 2), (2, 2)))                     # -> (.., Hp2, Wp2)
    p = p.reshape(p.shape[0], N * Hp2 * Wp2)
    return jnp.pad(p, ((0, 0), (0, F2 - R2)))                            # (Cin*9+1, F2)


# ---------------------------- model definition -----------------------------

def init_params(key, input_shape, hidden_units, output_shape, fc_in):
    """Deterministic PyTorch-style uniform(-1/sqrt(fan_in), 1/sqrt(fan_in))."""
    def conv_init(k, cout, cin):
        k1, k2 = jax.random.split(k)
        bound = 1.0 / jnp.sqrt(cin * 9.0)
        w = jax.random.uniform(k1, (cout, cin, 3, 3), jnp.float32, -bound, bound)
        b = jax.random.uniform(k2, (cout,), jnp.float32, -bound, bound)
        return w, b

    keys = jax.random.split(key, 5)
    w1, b1 = conv_init(keys[0], hidden_units, input_shape)
    w2, b2 = conv_init(keys[1], hidden_units, hidden_units)
    w3, b3 = conv_init(keys[2], hidden_units, hidden_units)
    w4, b4 = conv_init(keys[3], hidden_units, hidden_units)
    kf1, kf2 = jax.random.split(keys[4])
    bound = 1.0 / jnp.sqrt(float(fc_in))
    wfc = jax.random.uniform(kf1, (output_shape, fc_in), jnp.float32, -bound, bound)
    bfc = jax.random.uniform(kf2, (output_shape,), jnp.float32, -bound, bound)
    return dict(w1=w1, b1=b1, w2=w2, b2=b2, w3=w3, b3=b3, w4=w4, b4=b4,
                wfc=wfc, bfc=bfc)


# --------------------------- pure-JAX reference -----------------------------

def _ref_forward(params, x):
    def conv(x, w, b, stride, pad):
        y = lax.conv_general_dilated(
            x, w, (stride, stride), ((pad, pad), (pad, pad)),
            dimension_numbers=('NCHW', 'OIHW', 'NCHW'))
        return y + b.reshape(1, -1, 1, 1)

    def pool(x):
        return lax.reduce_window(x, -jnp.inf, lax.max,
                                 (1, 1, 2, 2), (1, 1, 2, 2), 'VALID')

    h = jnp.maximum(conv(x, params['w1'], params['b1'], 2, 2), 0.0)
    h = jnp.maximum(conv(h, params['w2'], params['b2'], 2, 2), 0.0)
    h = pool(h)
    h = jnp.maximum(conv(h, params['w3'], params['b3'], 1, 2), 0.0)
    h = jnp.maximum(conv(h, params['w4'], params['b4'], 1, 2), 0.0)
    h = pool(h)
    flat = h.reshape(h.shape[0], -1)
    return flat @ params['wfc'].T + params['bfc']


if __name__ == "__main__":
    key = jax.random.PRNGKey(0)
    kx, kp = jax.random.split(key)

    # Small ORL-like config: grayscale 32x32, hidden_units=8, 10 classes.
    batch, input_shape, H, W = 2, 1, 32, 32
    hidden_units, output_shape = 8, 10

    geo = make_geometry(batch, H, W, output_shape)
    H4p, W4p = geo['c4_pool']                       # 32 ->17 ->10 ->5 ->7 ->9 ->4
    fc_in = hidden_units * H4p * W4p                # = 128

    x = jax.random.normal(kx, (batch, input_shape, H, W), jnp.float32)
    params = init_params(kp, input_shape, hidden_units, output_shape, fc_in)
    prep = prepare_params(params, geo)

    forward = build_forward(geo, hidden_units)
    y_pred = jax.block_until_ready(forward(prep, x))
    assert y_pred.shape == (batch, output_shape)

    y_ref = _ref_forward(params, x)
    assert jnp.allclose(y_pred, y_ref, atol=1e-3, rtol=1e-3), \
        float(jnp.max(jnp.abs(y_pred - y_ref)))

    print("KERNEL_OK")
</pallas_src>

<mosaic_0001>
module attributes {stable_mosaic.version = 11 : i64} {
  func.func @kernel(%arg0: memref<10x1024xf32, #tpu.memory_space<vmem>>, %arg1: memref<8x10xf32, #tpu.memory_space<vmem>>, %arg2: memref<72x8xf32, #tpu.memory_space<vmem>>, %arg3: memref<8x1xf32, #tpu.memory_space<vmem>>, %arg4: memref<882x200xf32, #tpu.memory_space<vmem>>, %arg5: memref<72x8xf32, #tpu.memory_space<vmem>>, %arg6: memref<8x1xf32, #tpu.memory_space<vmem>>, %arg7: memref<162x98xf32, #tpu.memory_space<vmem>>, %arg8: memref<72x8xf32, #tpu.memory_space<vmem>>, %arg9: memref<8x1xf32, #tpu.memory_space<vmem>>, %arg10: memref<242x128xf32, #tpu.memory_space<vmem>>, %arg11: memref<128x10xf32, #tpu.memory_space<vmem>>, %arg12: memref<1x10xf32, #tpu.memory_space<vmem>>, %arg13: memref<2x10xf32, #tpu.memory_space<vmem>>, %arg14: memref<8x256xf32, #tpu.memory_space<vmem>>, %arg15: memref<8x384xf32, #tpu.memory_space<vmem>>, %arg16: memref<2x128xf32, #tpu.memory_space<vmem>>) attributes {dimension_semantics = [], scalar_prefetch = 0 : i64, scratch_operands = 3 : i64, tpu.core_type = #tpu.core_type<tc>} {
    %c0 = arith.constant 0 : index
    %c0_0 = arith.constant 0 : index
    %0 = vector.load %arg1[%c0, %c0_0] : memref<8x10xf32, #tpu.memory_space<vmem>>, vector<8x10xf32>
    %c0_1 = arith.constant 0 : index
    %c0_2 = arith.constant 0 : index
    %1 = vector.load %arg0[%c0_1, %c0_2] : memref<10x1024xf32, #tpu.memory_space<vmem>>, vector<10x1024xf32>
    %cst = arith.constant dense<0.000000e+00> : vector<8x1024xf32>
    %2 = tpu.matmul %0, %1, %cst {dimension_numbers = #tpu.dot_dimension_numbers<[1], [0], [0], [1], [0, 0, 1, 1], [], []>} : vector<8x10xf32>, vector<10x1024xf32>, vector<8x1024xf32> -> vector<8x1024xf32>
    %cst_3 = arith.constant 0.000000e+00 : f32
    %3 = vector.broadcast %cst_3 : f32 to vector<8x1024xf32>
    %4 = arith.maximumf %2, %3 : vector<8x1024xf32>
    %c0_4 = arith.constant 0 : index
    %c0_5 = arith.constant 0 : index
    %5 = vector.load %arg2[%c0_4, %c0_5] : memref<72x8xf32, #tpu.memory_space<vmem>>, vector<72x8xf32>
    %cst_6 = arith.constant dense<0.000000e+00> : vector<72x1024xf32>
    %6 = tpu.matmul %5, %4, %cst_6 {dimension_numbers = #tpu.dot_dimension_numbers<[1], [0], [0], [1], [0, 0, 1, 1], [], []>} : vector<72x8xf32>, vector<8x1024xf32>, vector<72x1024xf32> -> vector<72x1024xf32>
    %7 = vector.extract_strided_slice %6 {offsets = [0, 0], sizes = [8, 882], strides = [1, 1]} : vector<72x1024xf32> to vector<8x882xf32>
    %8 = vector.extract_strided_slice %6 {offsets = [8, 1], sizes = [8, 882], strides = [1, 1]} : vector<72x1024xf32> to vector<8x882xf32>
    %9 = arith.addf %7, %8 : vector<8x882xf32>
    %10 = vector.extract_strided_slice %6 {offsets = [16, 2], sizes = [8, 882], strides = [1, 1]} : vector<72x1024xf32> to vector<8x882xf32>
    %11 = arith.addf %9, %10 : vector<8x882xf32>
    %12 = vector.extract_strided_slice %6 {offsets = [24, 21], sizes = [8, 882], strides = [1, 1]} : vector<72x1024xf32> to vector<8x882xf32>
    %13 = arith.addf %11, %12 : vector<8x882xf32>
    %14 = vector.extract_strided_slice %6 {offsets = [32, 22], sizes = [8, 882], strides = [1, 1]} : vector<72x1024xf32> to vector<8x882xf32>
    %15 = arith.addf %13, %14 : vector<8x882xf32>
    %16 = vector.extract_strided_slice %6 {offsets = [40, 23], sizes = [8, 882], strides = [1, 1]} : vector<72x1024xf32> to vector<8x882xf32>
    %17 = arith.addf %15, %16 : vector<8x882xf32>
    %18 = vector.extract_strided_slice %6 {offsets = [48, 42], sizes = [8, 882], strides = [1, 1]} : vector<72x1024xf32> to vector<8x882xf32>
    %19 = arith.addf %17, %18 : vector<8x882xf32>
    %20 = vector.extract_strided_slice %6 {offsets = [56, 43], sizes = [8, 882], strides = [1, 1]} : vector<72x1024xf32> to vector<8x882xf32>
    %21 = arith.addf %19, %20 : vector<8x882xf32>
    %22 = vector.extract_strided_slice %6 {offsets = [64, 44], sizes = [8, 882], strides = [1, 1]} : vector<72x1024xf32> to vector<8x882xf32>
    %23 = arith.addf %21, %22 : vector<8x882xf32>
    %c0_7 = arith.constant 0 : index
    %c0_8 = arith.constant 0 : index
    %24 = vector.load %arg4[%c0_7, %c0_8] : memref<882x200xf32, #tpu.memory_space<vmem>>, vector<882x200xf32>
    %cst_9 = arith.constant dense<0.000000e+00> : vector<8x200xf32>
    %25 = tpu.matmul %23, %24, %cst_9 {dimension_numbers = #tpu.dot_dimension_numbers<[1], [0], [0], [1], [0, 0, 1, 1], [], []>} : vector<8x882xf32>, vector<882x200xf32>, vector<8x200xf32> -> vector<8x200xf32>
    %26 = vector.extract_strided_slice %25 {offsets = [0, 0], sizes = [8, 50], strides = [1, 1]} : vector<8x200xf32> to vector<8x50xf32>
    %27 = vector.extract_strided_slice %25 {offsets = [0, 50], sizes = [8, 50], strides = [1, 1]} : vector<8x200xf32> to vector<8x50xf32>
    %28 = arith.maximumf %26, %27 : vector<8x50xf32>
    %29 = vector.extract_strided_slice %25 {offsets = [0, 100], sizes = [8, 50], strides = [1, 1]} : vector<8x200xf32> to vector<8x50xf32>
    %30 = vector.extract_strided_slice %25 {offsets = [0, 150], sizes = [8, 50], strides = [1, 1]} : vector<8x200xf32> to vector<8x50xf32>
    %31 = arith.maximumf %29, %30 : vector<8x50xf32>
    %32 = arith.maximumf %28, %31 : vector<8x50xf32>
    %c0_10 = arith.constant 0 : index
    %c0_11 = arith.constant 0 : index
    %33 = vector.load %arg3[%c0_10, %c0_11] : memref<8x1xf32, #tpu.memory_space<vmem>>, vector<8x1xf32>
    %34 = vector.broadcast %33 : vector<8x1xf32> to vector<8x50xf32>
    %35 = arith.addf %32, %34 : vector<8x50xf32>
    %cst_12 = arith.constant 0.000000e+00 : f32
    %36 = vector.broadcast %cst_12 : f32 to vector<8x50xf32>
    %37 = arith.maximumf %35, %36 : vector<8x50xf32>
    %cst_13 = arith.constant 0.000000e+00 : f32
    %38 = vector.broadcast %cst_13 : f32 to vector<8x256xf32>
    %c0_14 = arith.constant 0 : index
    %c0_15 = arith.constant 0 : index
    %39 = vector.load %arg14[%c0_14, %c0_15] : memref<8x256xf32, #tpu.memory_space<vmem>>, vector<8x256xf32>
    tpu.vector_store %arg14[%c0_14, %c0_15], %38 {strides = array<i32>} : memref<8x256xf32, #tpu.memory_space<vmem>>, vector<8x256xf32>,
    %40 = vector.extract_strided_slice %37 {offsets = [0, 0], sizes = [8, 5], strides = [1, 1]} : vector<8x50xf32> to vector<8x5xf32>
    %c0_16 = arith.constant 0 : index
    %c20 = arith.constant 20 : index
    %41 = vector.load %arg14[%c0_16, %c20] : memref<8x256xf32, #tpu.memory_space<vmem>>, vector<8x5xf32>
    tpu.vector_store %arg14[%c0_16, %c20], %40 {strides = array<i32>} : memref<8x256xf32, #tpu.memory_space<vmem>>, vector<8x5xf32>,
    %42 = vector.extract_strided_slice %37 {offsets = [0, 5], sizes = [8, 5], strides = [1, 1]} : vector<8x50xf32> to vector<8x5xf32>
    %c0_17 = arith.constant 0 : index
    %c29 = arith.constant 29 : index
    %43 = vector.load %arg14[%c0_17, %c29] : memref<8x256xf32, #tpu.memory_space<vmem>>, vector<8x5xf32>
    tpu.vector_store %arg14[%c0_17, %c29], %42 {strides = array<i32>} : memref<8x256xf32, #tpu.memory_space<vmem>>, vector<8x5xf32>,
    %44 = vector.extract_strided_slice %37 {offsets = [0, 10], sizes = [8, 5], strides = [1, 1]} : vector<8x50xf32> to vector<8x5xf32>
    %c0_18 = arith.constant 0 : index
    %c38 = arith.constant 38 : index
    %45 = vector.load %arg14[%c0_18, %c38] : memref<8x256xf32, #tpu.memory_space<vmem>>, vector<8x5xf32>
    tpu.vector_store %arg14[%c0_18, %c38], %44 {strides = array<i32>} : memref<8x256xf32, #tpu.memory_space<vmem>>, vector<8x5xf32>,
    %46 = vector.extract_strided_slice %37 {offsets = [0, 15], sizes = [8, 5], strides = [1, 1]} : vector<8x50xf32> to vector<8x5xf32>
    %c0_19 = arith.constant 0 : index
    %c47 = arith.constant 47 : index
    %47 = vector.load %arg14[%c0_19, %c47] : memref<8x256xf32, #tpu.memory_space<vmem>>, vector<8x5xf32>
    tpu.vector_store %arg14[%c0_19, %c47], %46 {strides = array<i32>} : memref<8x256xf32, #tpu.memory_space<vmem>>, vector<8x5xf32>,
    %48 = vector.extract_strided_slice %37 {offsets = [0, 20], sizes = [8, 5], strides = [1, 1]} : vector<8x50xf32> to vector<8x5xf32>
    %c0_20 = arith.constant 0 : index
    %c56 = arith.constant 56 : index
    %49 = vector.load %arg14[%c0_20, %c56] : memref<8x256xf32, #tpu.memory_space<vmem>>, vector<8x5xf32>
    tpu.vector_store %arg14[%c0_20, %c56], %48 {strides = array<i32>} : memref<8x256xf32, #tpu.memory_space<vmem>>, vector<8x5xf32>,
    %50 = vector.extract_strided_slice %37 {offsets = [0, 25], sizes = [8, 5], strides = [1, 1]} : vector<8x50xf32> to vector<8x5xf32>
    %c0_21 = arith.constant 0 : index
    %c101 = arith.constant 101 : index
    %51 = vector.load %arg14[%c0_21, %c101] : memref<8x256xf32, #tpu.memory_space<vmem>>, vector<8x5xf32>
    tpu.vector_store %arg14[%c0_21, %c101], %50 {strides = array<i32>} : memref<8x256xf32, #tpu.memory_space<vmem>>, vector<8x5xf32>,
    %52 = vector.extract_strided_slice %37 {offsets = [0, 30], sizes = [8, 5], strides = [1, 1]} : vector<8x50xf32> to vector<8x5xf32>
    %c0_22 = arith.constant 0 : index
    %c110 = arith.constant 110 : index
    %53 = vector.load %arg14[%c0_22, %c110] : memref<8x256xf32, #tpu.memory_space<vmem>>, vector<8x5xf32>
    tpu.vector_store %arg14[%c0_22, %c110], %52 {strides = array<i32>} : memref<8x256xf32, #tpu.memory_space<vmem>>, vector<8x5xf32>,
    %54 = vector.extract_strided_slice %37 {offsets = [0, 35], sizes = [8, 5], strides = [1, 1]} : vector<8x50xf32> to vector<8x5xf32>
    %c0_23 = arith.constant 0 : index
    %c119 = arith.constant 119 : index
    %55 = vector.load %arg14[%c0_23, %c119] : memref<8x256xf32, #tpu.memory_space<vmem>>, vector<8x5xf32>
    tpu.vector_store %arg14[%c0_23, %c119], %54 {strides = array<i32>} : memref<8x256xf32, #tpu.memory_space<vmem>>, vector<8x5xf32>,
    %56 = vector.extract_strided_slice %37 {offsets = [0, 40], sizes = [8, 5], strides = [1, 1]} : vector<8x50xf32> to vector<8x5xf32>
    %c0_24 = arith.constant 0 : index
    %c128 = arith.constant 128 : index
    %57 = vector.load %arg14[%c0_24, %c128] : memref<8x256xf32, #tpu.memory_space<vmem>>, vector<8x5xf32>
    tpu.vector_store %arg14[%c0_24, %c128], %56 {strides = array<i32>} : memref<8x256xf32, #tpu.memory_space<vmem>>, vector<8x5xf32>,
    %58 = vector.extract_strided_slice %37 {offsets = [0, 45], sizes = [8, 5], strides = [1, 1]} : vector<8x50xf32> to vector<8x5xf32>
    %c0_25 = arith.constant 0 : index
    %c137 = arith.constant 137 : index
    %59 = vector.load %arg14[%c0_25, %c137] : memref<8x256xf32, #tpu.memory_space<vmem>>, vector<8x5xf32>
    tpu.vector_store %arg14[%c0_25, %c137], %58 {strides = array<i32>} : memref<8x256xf32, #tpu.memory_space<vmem>>, vector<8x5xf32>,
    %c0_26 = arith.constant 0 : index
    %c0_27 = arith.constant 0 : index
    %60 = vector.load %arg5[%c0_26, %c0_27] : memref<72x8xf32, #tpu.memory_space<vmem>>, vector<72x8xf32>
    %c0_28 = arith.constant 0 : index
    %c0_29 = arith.constant 0 : index
    %61 = vector.load %arg14[%c0_28, %c0_29] : memref<8x256xf32, #tpu.memory_space<vmem>>, vector<8x256xf32>
    %cst_30 = arith.constant dense<0.000000e+00> : vector<72x256xf32>
    %62 = tpu.matmul %60, %61, %cst_30 {dimension_numbers = #tpu.dot_dimension_numbers<[1], [0], [0], [1], [0, 0, 1, 1], [], []>} : vector<72x8xf32>, vector<8x256xf32>, vector<72x256xf32> -> vector<72x256xf32>
    %63 = vector.extract_strided_slice %62 {offsets = [0, 0], sizes = [8, 162], strides = [1, 1]} : vector<72x256xf32> to vector<8x162xf32>
    %64 = vector.extract_strided_slice %62 {offsets = [8, 1], sizes = [8, 162], strides = [1, 1]} : vector<72x256xf32> to vector<8x162xf32>
    %65 = arith.addf %63, %64 : vector<8x162xf32>
    %66 = vector.extract_strided_slice %62 {offsets = [16, 2], sizes = [8, 162], strides = [1, 1]} : vector<72x256xf32> to vector<8x162xf32>
    %67 = arith.addf %65, %66 : vector<8x162xf32>
    %68 = vector.extract_strided_slice %62 {offsets = [24, 9], sizes = [8, 162], strides = [1, 1]} : vector<72x256xf32> to vector<8x162xf32>
    %69 = arith.addf %67, %68 : vector<8x162xf32>
    %70 = vector.extract_strided_slice %62 {offsets = [32, 10], sizes = [8, 162], strides = [1, 1]} : vector<72x256xf32> to vector<8x162xf32>
    %71 = arith.addf %69, %70 : vector<8x162xf32>
    %72 = vector.extract_strided_slice %62 {offsets = [40, 11], sizes = [8, 162], strides = [1, 1]} : vector<72x256xf32> to vector<8x162xf32>
    %73 = arith.addf %71, %72 : vector<8x162xf32>
    %74 = vector.extract_strided_slice %62 {offsets = [48, 18], sizes = [8, 162], strides = [1, 1]} : vector<72x256xf32> to vector<8x162xf32>
    %75 = arith.addf %73, %74 : vector<8x162xf32>
    %76 = vector.extract_strided_slice %62 {offsets = [56, 19], sizes = [8, 162], strides = [1, 1]} : vector<72x256xf32> to vector<8x162xf32>
    %77 = arith.addf %75, %76 : vector<8x162xf32>
    %78 = vector.extract_strided_slice %62 {offsets = [64, 20], sizes = [8, 162], strides = [1, 1]} : vector<72x256xf32> to vector<8x162xf32>
    %79 = arith.addf %77, %78 : vector<8x162xf32>
    %c0_31 = arith.constant 0 : index
    %c0_32 = arith.constant 0 : index
    %80 = vector.load %arg7[%c0_31, %c0_32] : memref<162x98xf32, #tpu.memory_space<vmem>>, vector<162x98xf32>
    %cst_33 = arith.constant dense<0.000000e+00> : vector<8x98xf32>
    %81 = tpu.matmul %79, %80, %cst_33 {dimension_numbers = #tpu.dot_dimension_numbers<[1], [0], [0], [1], [0, 0, 1, 1], [], []>} : vector<8x162xf32>, vector<162x98xf32>, vector<8x98xf32> -> vector<8x98xf32>
    %c0_34 = arith.constant 0 : index
    %c0_35 = arith.constant 0 : index
    %82 = vector.load %arg6[%c0_34, %c0_35] : memref<8x1xf32, #tpu.memory_space<vmem>>, vector<8x1xf32>
    %83 = vector.broadcast %82 : vector<8x1xf32> to vector<8x98xf32>
    %84 = arith.addf %81, %83 : vector<8x98xf32>
    %cst_36 = arith.constant 0.000000e+00 : f32
    %85 = vector.broadcast %cst_36 : f32 to vector<8x98xf32>
    %86 = arith.maximumf %84, %85 : vector<8x98xf32>
    %cst_37 = arith.constant 0.000000e+00 : f32
    %87 = vector.broadcast %cst_37 : f32 to vector<8x384xf32>
    %c0_38 = arith.constant 0 : index
    %c0_39 = arith.constant 0 : index
    %88 = vector.load %arg15[%c0_38, %c0_39] : memref<8x384xf32, #tpu.memory_space<vmem>>, vector<8x384xf32>
    tpu.vector_store %arg15[%c0_38, %c0_39], %87 {strides = array<i32>} : memref<8x384xf32, #tpu.memory_space<vmem>>, vector<8x384xf32>,
    %89 = vector.extract_strided_slice %86 {offsets = [0, 0], sizes = [8, 7], strides = [1, 1]} : vector<8x98xf32> to vector<8x7xf32>
    %c0_40 = arith.constant 0 : index
    %c24 = arith.constant 24 : index
    %90 = vector.load %arg15[%c0_40, %c24] : memref<8x384xf32, #tpu.memory_space<vmem>>, vector<8x7xf32>
    tpu.vector_store %arg15[%c0_40, %c24], %89 {strides = array<i32>} : memref<8x384xf32, #tpu.memory_space<vmem>>, vector<8x7xf32>,
    %91 = vector.extract_strided_slice %86 {offsets = [0, 7], sizes = [8, 7], strides = [1, 1]} : vector<8x98xf32> to vector<8x7xf32>
    %c0_41 = arith.constant 0 : index
    %c35 = arith.constant 35 : index
    %92 = vector.load %arg15[%c0_41, %c35] : memref<8x384xf32, #tpu.memory_space<vmem>>, vector<8x7xf32>
    tpu.vector_store %arg15[%c0_41, %c35], %91 {strides = array<i32>} : memref<8x384xf32, #tpu.memory_space<vmem>>, vector<8x7xf32>,
    %93 = vector.extract_strided_slice %86 {offsets = [0, 14], sizes = [8, 7], strides = [1, 1]} : vector<8x98xf32> to vector<8x7xf32>
    %c0_42 = arith.constant 0 : index
    %c46 = arith.constant 46 : index
    %94 = vector.load %arg15[%c0_42, %c46] : memref<8x384xf32, #tpu.memory_space<vmem>>, vector<8x7xf32>
    tpu.vector_store %arg15[%c0_42, %c46], %93 {strides = array<i32>} : memref<8x384xf32, #tpu.memory_space<vmem>>, vector<8x7xf32>,
    %95 = vector.extract_strided_slice %86 {offsets = [0, 21], sizes = [8, 7], strides = [1, 1]} : vector<8x98xf32> to vector<8x7xf32>
    %c0_43 = arith.constant 0 : index
    %c57 = arith.constant 57 : index
    %96 = vector.load %arg15[%c0_43, %c57] : memref<8x384xf32, #tpu.memory_space<vmem>>, vector<8x7xf32>
    tpu.vector_store %arg15[%c0_43, %c57], %95 {strides = array<i32>} : memref<8x384xf32, #tpu.memory_space<vmem>>, vector<8x7xf32>,
    %97 = vector.extract_strided_slice %86 {offsets = [0, 28], sizes = [8, 7], strides = [1, 1]} : vector<8x98xf32> to vector<8x7xf32>
    %c0_44 = arith.constant 0 : index
    %c68 = arith.constant 68 : index
    %98 = vector.load %arg15[%c0_44, %c68] : memref<8x384xf32, #tpu.memory_space<vmem>>, vector<8x7xf32>
    tpu.vector_store %arg15[%c0_44, %c68], %97 {strides = array<i32>} : memref<8x384xf32, #tpu.memory_space<vmem>>, vector<8x7xf32>,
    %99 = vector.extract_strided_slice %86 {offsets = [0, 35], sizes = [8, 7], strides = [1, 1]} : vector<8x98xf32> to vector<8x7xf32>
    %c0_45 = arith.constant 0 : index
    %c79 = arith.constant 79 : index
    %100 = vector.load %arg15[%c0_45, %c79] : memref<8x384xf32, #tpu.memory_space<vmem>>, vector<8x7xf32>
    tpu.vector_store %arg15[%c0_45, %c79], %99 {strides = array<i32>} : memref<8x384xf32, #tpu.memory_space<vmem>>, vector<8x7xf32>,
    %101 = vector.extract_strided_slice %86 {offsets = [0, 42], sizes = [8, 7], strides = [1, 1]} : vector<8x98xf32> to vector<8x7xf32>
    %c0_46 = arith.constant 0 : index
    %c90 = arith.constant 90 : index
    %102 = vector.load %arg15[%c0_46, %c90] : memref<8x384xf32, #tpu.memory_space<vmem>>, vector<8x7xf32>
    tpu.vector_store %arg15[%c0_46, %c90], %101 {strides = array<i32>} : memref<8x384xf32, #tpu.memory_space<vmem>>, vector<8x7xf32>,
    %103 = vector.extract_strided_slice %86 {offsets = [0, 49], sizes = [8, 7], strides = [1, 1]} : vector<8x98xf32> to vector<8x7xf32>
    %c0_47 = arith.constant 0 : index
    %c145 = arith.constant 145 : index
    %104 = vector.load %arg15[%c0_47, %c145] : memref<8x384xf32, #tpu.memory_space<vmem>>, vector<8x7xf32>
    tpu.vector_store %arg15[%c0_47, %c145], %103 {strides = array<i32>} : memref<8x384xf32, #tpu.memory_space<vmem>>, vector<8x7xf32>,
    %105 = vector.extract_strided_slice %86 {offsets = [0, 56], sizes = [8, 7], strides = [1, 1]} : vector<8x98xf32> to vector<8x7xf32>
    %c0_48 = arith.constant 0 : index
    %c156 = arith.constant 156 : index
    %106 = vector.load %arg15[%c0_48, %c156] : memref<8x384xf32, #tpu.memory_space<vmem>>, vector<8x7xf32>
    tpu.vector_store %arg15[%c0_48, %c156], %105 {strides = array<i32>} : memref<8x384xf32, #tpu.memory_space<vmem>>, vector<8x7xf32>,
    %107 = vector.extract_strided_slice %86 {offsets = [0, 63], sizes = [8, 7], strides = [1, 1]} : vector<8x98xf32> to vector<8x7xf32>
    %c0_49 = arith.constant 0 : index
    %c167 = arith.constant 167 : index
    %108 = vector.load %arg15[%c0_49, %c167] : memref<8x384xf32, #tpu.memory_space<vmem>>, vector<8x7xf32>
    tpu.vector_store %arg15[%c0_49, %c167], %107 {strides = array<i32>} : memref<8x384xf32, #tpu.memory_space<vmem>>, vector<8x7xf32>,
    %109 = vector.extract_strided_slice %86 {offsets = [0, 70], sizes = [8, 7], strides = [1, 1]} : vector<8x98xf32> to vector<8x7xf32>
    %c0_50 = arith.constant 0 : index
    %c178 = arith.constant 178 : index
    %110 = vector.load %arg15[%c0_50, %c178] : memref<8x384xf32, #tpu.memory_space<vmem>>, vector<8x7xf32>
    tpu.vector_store %arg15[%c0_50, %c178], %109 {strides = array<i32>} : memref<8x384xf32, #tpu.memory_space<vmem>>, vector<8x7xf32>,
    %111 = vector.extract_strided_slice %86 {offsets = [0, 77], sizes = [8, 7], strides = [1, 1]} : vector<8x98xf32> to vector<8x7xf32>
    %c0_51 = arith.constant 0 : index
    %c189 = arith.constant 189 : index
    %112 = vector.load %arg15[%c0_51, %c189] : memref<8x384xf32, #tpu.memory_space<vmem>>, vector<8x7xf32>
    tpu.vector_store %arg15[%c0_51, %c189], %111 {strides = array<i32>} : memref<8x384xf32, #tpu.memory_space<vmem>>, vector<8x7xf32>,
    %113 = vector.extract_strided_slice %86 {offsets = [0, 84], sizes = [8, 7], strides = [1, 1]} : vector<8x98xf32> to vector<8x7xf32>
    %c0_52 = arith.constant 0 : index
    %c200 = arith.constant 200 : index
    %114 = vector.load %arg15[%c0_52, %c200] : memref<8x384xf32, #tpu.memory_space<vmem>>, vector<8x7xf32>
    tpu.vector_store %arg15[%c0_52, %c200], %113 {strides = array<i32>} : memref<8x384xf32, #tpu.memory_space<vmem>>, vector<8x7xf32>,
    %115 = vector.extract_strided_slice %86 {offsets = [0, 91], sizes = [8, 7], strides = [1, 1]} : vector<8x98xf32> to vector<8x7xf32>
    %c0_53 = arith.constant 0 : index
    %c211 = arith.constant 211 : index
    %116 = vector.load %arg15[%c0_53, %c211] : memref<8x384xf32, #tpu.memory_space<vmem>>, vector<8x7xf32>
    tpu.vector_store %arg15[%c0_53, %c211], %115 {strides = array<i32>} : memref<8x384xf32, #tpu.memory_space<vmem>>, vector<8x7xf32>,
    %c0_54 = arith.constant 0 : index
    %c0_55 = arith.constant 0 : index
    %117 = vector.load %arg8[%c0_54, %c0_55] : memref<72x8xf32, #tpu.memory_space<vmem>>, vector<72x8xf32>
    %c0_56 = arith.constant 0 : index
    %c0_57 = arith.constant 0 : index
    %118 = vector.load %arg15[%c0_56, %c0_57] : memref<8x384xf32, #tpu.memory_space<vmem>>, vector<8x384xf32>
    %cst_58 = arith.constant dense<0.000000e+00> : vector<72x384xf32>
    %119 = tpu.matmul %117, %118, %cst_58 {dimension_numbers = #tpu.dot_dimension_numbers<[1], [0], [0], [1], [0, 0, 1, 1], [], []>} : vector<72x8xf32>, vector<8x384xf32>, vector<72x384xf32> -> vector<72x384xf32>
    %120 = vector.extract_strided_slice %119 {offsets = [0, 0], sizes = [8, 242], strides = [1, 1]} : vector<72x384xf32> to vector<8x242xf32>
    %121 = vector.extract_strided_slice %119 {offsets = [8, 1], sizes = [8, 242], strides = [1, 1]} : vector<72x384xf32> to vector<8x242xf32>
    %122 = arith.addf %120, %121 : vector<8x242xf32>
    %123 = vector.extract_strided_slice %119 {offsets = [16, 2], sizes = [8, 242], strides = [1, 1]} : vector<72x384xf32> to vector<8x242xf32>
    %124 = arith.addf %122, %123 : vector<8x242xf32>
    %125 = vector.extract_strided_slice %119 {offsets = [24, 11], sizes = [8, 242], strides = [1, 1]} : vector<72x384xf32> to vector<8x242xf32>
    %126 = arith.addf %124, %125 : vector<8x242xf32>
    %127 = vector.extract_strided_slice %119 {offsets = [32, 12], sizes = [8, 242], strides = [1, 1]} : vector<72x384xf32> to vector<8x242xf32>
    %128 = arith.addf %126, %127 : vector<8x242xf32>
    %129 = vector.extract_strided_slice %119 {offsets = [40, 13], sizes = [8, 242], strides = [1, 1]} : vector<72x384xf32> to vector<8x242xf32>
    %130 = arith.addf %128, %129 : vector<8x242xf32>
    %131 = vector.extract_strided_slice %119 {offsets = [48, 22], sizes = [8, 242], strides = [1, 1]} : vector<72x384xf32> to vector<8x242xf32>
    %132 = arith.addf %130, %131 : vector<8x242xf32>
    %133 = vector.extract_strided_slice %119 {offsets = [56, 23], sizes = [8, 242], strides = [1, 1]} : vector<72x384xf32> to vector<8x242xf32>
    %134 = arith.addf %132, %133 : vector<8x242xf32>
    %135 = vector.extract_strided_slice %119 {offsets = [64, 24], sizes = [8, 242], strides = [1, 1]} : vector<72x384xf32> to vector<8x242xf32>
    %136 = arith.addf %134, %135 : vector<8x242xf32>
    %c0_59 = arith.constant 0 : index
    %c0_60 = arith.constant 0 : index
    %137 = vector.load %arg10[%c0_59, %c0_60] : memref<242x128xf32, #tpu.memory_space<vmem>>, vector<242x128xf32>
    %cst_61 = arith.constant dense<0.000000e+00> : vector<8x128xf32>
    %138 = tpu.matmul %136, %137, %cst_61 {dimension_numbers = #tpu.dot_dimension_numbers<[1], [0], [0], [1], [0, 0, 1, 1], [], []>} : vector<8x242xf32>, vector<242x128xf32>, vector<8x128xf32> -> vector<8x128xf32>
    %139 = vector.extract_strided_slice %138 {offsets = [0, 0], sizes = [8, 32], strides = [1, 1]} : vector<8x128xf32> to vector<8x32xf32>
    %140 = vector.extract_strided_slice %138 {offsets = [0, 32], sizes = [8, 32], strides = [1, 1]} : vector<8x128xf32> to vector<8x32xf32>
    %141 = arith.maximumf %139, %140 : vector<8x32xf32>
    %142 = vector.extract_strided_slice %138 {offsets = [0, 64], sizes = [8, 32], strides = [1, 1]} : vector<8x128xf32> to vector<8x32xf32>
    %143 = vector.extract_strided_slice %138 {offsets = [0, 96], sizes = [8, 32], strides = [1, 1]} : vector<8x128xf32> to vector<8x32xf32>
    %144 = arith.maximumf %142, %143 : vector<8x32xf32>
    %145 = arith.maximumf %141, %144 : vector<8x32xf32>
    %c0_62 = arith.constant 0 : index
    %c0_63 = arith.constant 0 : index
    %146 = vector.load %arg9[%c0_62, %c0_63] : memref<8x1xf32, #tpu.memory_space<vmem>>, vector<8x1xf32>
    %147 = vector.broadcast %146 : vector<8x1xf32> to vector<8x32xf32>
    %148 = arith.addf %145, %147 : vector<8x32xf32>
    %cst_64 = arith.constant 0.000000e+00 : f32
    %149 = vector.broadcast %cst_64 : f32 to vector<8x32xf32>
    %150 = arith.maximumf %148, %149 : vector<8x32xf32>
    %151 = vector.extract_strided_slice %150 {offsets = [0, 0], sizes = [1, 16], strides = [1, 1]} : vector<8x32xf32> to vector<1x16xf32>
    %c0_65 = arith.constant 0 : index
    %c0_66 = arith.constant 0 : index
    %152 = vector.load %arg16[%c0_65, %c0_66] : memref<2x128xf32, #tpu.memory_space<vmem>>, vector<1x16xf32>
    tpu.vector_store %arg16[%c0_65, %c0_66], %151 {strides = array<i32>} : memref<2x128xf32, #tpu.memory_space<vmem>>, vector<1x16xf32>,
    %153 = vector.extract_strided_slice %150 {offsets = [1, 0], sizes = [1, 16], strides = [1, 1]} : vector<8x32xf32> to vector<1x16xf32>
    %c0_67 = arith.constant 0 : index
    %c16 = arith.constant 16 : index
    %154 = vector.load %arg16[%c0_67, %c16] : memref<2x128xf32, #tpu.memory_space<vmem>>, vector<1x16xf32>
    tpu.vector_store %arg16[%c0_67, %c16], %153 {strides = array<i32>} : memref<2x128xf32, #tpu.memory_space<vmem>>, vector<1x16xf32>,
    %155 = vector.extract_strided_slice %150 {offsets = [2, 0], sizes = [1, 16], strides = [1, 1]} : vector<8x32xf32> to vector<1x16xf32>
    %c0_68 = arith.constant 0 : index
    %c32 = arith.constant 32 : index
    %156 = vector.load %arg16[%c0_68, %c32] : memref<2x128xf32, #tpu.memory_space<vmem>>, vector<1x16xf32>
    tpu.vector_store %arg16[%c0_68, %c32], %155 {strides = array<i32>} : memref<2x128xf32, #tpu.memory_space<vmem>>, vector<1x16xf32>,
    %157 = vector.extract_strided_slice %150 {offsets = [3, 0], sizes = [1, 16], strides = [1, 1]} : vector<8x32xf32> to vector<1x16xf32>
    %c0_69 = arith.constant 0 : index
    %c48 = arith.constant 48 : index
    %158 = vector.load %arg16[%c0_69, %c48] : memref<2x128xf32, #tpu.memory_space<vmem>>, vector<1x16xf32>
    tpu.vector_store %arg16[%c0_69, %c48], %157 {strides = array<i32>} : memref<2x128xf32, #tpu.memory_space<vmem>>, vector<1x16xf32>,
    %159 = vector.extract_strided_slice %150 {offsets = [4, 0], sizes = [1, 16], strides = [1, 1]} : vector<8x32xf32> to vector<1x16xf32>
    %c0_70 = arith.constant 0 : index
    %c64 = arith.constant 64 : index
    %160 = vector.load %arg16[%c0_70, %c64] : memref<2x128xf32, #tpu.memory_space<vmem>>, vector<1x16xf32>
    tpu.vector_store %arg16[%c0_70, %c64], %159 {strides = array<i32>} : memref<2x128xf32, #tpu.memory_space<vmem>>, vector<1x16xf32>,
    %161 = vector.extract_strided_slice %150 {offsets = [5, 0], sizes = [1, 16], strides = [1, 1]} : vector<8x32xf32> to vector<1x16xf32>
    %c0_71 = arith.constant 0 : index
    %c80 = arith.constant 80 : index
    %162 = vector.load %arg16[%c0_71, %c80] : memref<2x128xf32, #tpu.memory_space<vmem>>, vector<1x16xf32>
    tpu.vector_store %arg16[%c0_71, %c80], %161 {strides = array<i32>} : memref<2x128xf32, #tpu.memory_space<vmem>>, vector<1x16xf32>,
    %163 = vector.extract_strided_slice %150 {offsets = [6, 0], sizes = [1, 16], strides = [1, 1]} : vector<8x32xf32> to vector<1x16xf32>
    %c0_72 = arith.constant 0 : index
    %c96 = arith.constant 96 : index
    %164 = vector.load %arg16[%c0_72, %c96] : memref<2x128xf32, #tpu.memory_space<vmem>>, vector<1x16xf32>
    tpu.vector_store %arg16[%c0_72, %c96], %163 {strides = array<i32>} : memref<2x128xf32, #tpu.memory_space<vmem>>, vector<1x16xf32>,
    %165 = vector.extract_strided_slice %150 {offsets = [7, 0], sizes = [1, 16], strides = [1, 1]} : vector<8x32xf32> to vector<1x16xf32>
    %c0_73 = arith.constant 0 : index
    %c112 = arith.constant 112 : index
    %166 = vector.load %arg16[%c0_73, %c112] : memref<2x128xf32, #tpu.memory_space<vmem>>, vector<1x16xf32>
    tpu.vector_store %arg16[%c0_73, %c112], %165 {strides = array<i32>} : memref<2x128xf32, #tpu.memory_space<vmem>>, vector<1x16xf32>,
    %167 = vector.extract_strided_slice %150 {offsets = [0, 16], sizes = [1, 16], strides = [1, 1]} : vector<8x32xf32> to vector<1x16xf32>
    %c1 = arith.constant 1 : index
    %c0_74 = arith.constant 0 : index
    %168 = vector.load %arg16[%c1, %c0_74] : memref<2x128xf32, #tpu.memory_space<vmem>>, vector<1x16xf32>
    tpu.vector_store %arg16[%c1, %c0_74], %167 {strides = array<i32>} : memref<2x128xf32, #tpu.memory_space<vmem>>, vector<1x16xf32>,
    %169 = vector.extract_strided_slice %150 {offsets = [1, 16], sizes = [1, 16], strides = [1, 1]} : vector<8x32xf32> to vector<1x16xf32>
    %c1_75 = arith.constant 1 : index
    %c16_76 = arith.constant 16 : index
    %170 = vector.load %arg16[%c1_75, %c16_76] : memref<2x128xf32, #tpu.memory_space<vmem>>, vector<1x16xf32>
    tpu.vector_store %arg16[%c1_75, %c16_76], %169 {strides = array<i32>} : memref<2x128xf32, #tpu.memory_space<vmem>>, vector<1x16xf32>,
    %171 = vector.extract_strided_slice %150 {offsets = [2, 16], sizes = [1, 16], strides = [1, 1]} : vector<8x32xf32> to vector<1x16xf32>
    %c1_77 = arith.constant 1 : index
    %c32_78 = arith.constant 32 : index
    %172 = vector.load %arg16[%c1_77, %c32_78] : memref<2x128xf32, #tpu.memory_space<vmem>>, vector<1x16xf32>
    tpu.vector_store %arg16[%c1_77, %c32_78], %171 {strides = array<i32>} : memref<2x128xf32, #tpu.memory_space<vmem>>, vector<1x16xf32>,
    %173 = vector.extract_strided_slice %150 {offsets = [3, 16], sizes = [1, 16], strides = [1, 1]} : vector<8x32xf32> to vector<1x16xf32>
    %c1_79 = arith.constant 1 : index
    %c48_80 = arith.constant 48 : index
    %174 = vector.load %arg16[%c1_79, %c48_80] : memref<2x128xf32, #tpu.memory_space<vmem>>, vector<1x16xf32>
    tpu.vector_store %arg16[%c1_79, %c48_80], %173 {strides = array<i32>} : memref<2x128xf32, #tpu.memory_space<vmem>>, vector<1x16xf32>,
    %175 = vector.extract_strided_slice %150 {offsets = [4, 16], sizes = [1, 16], strides = [1, 1]} : vector<8x32xf32> to vector<1x16xf32>
    %c1_81 = arith.constant 1 : index
    %c64_82 = arith.constant 64 : index
    %176 = vector.load %arg16[%c1_81, %c64_82] : memref<2x128xf32, #tpu.memory_space<vmem>>, vector<1x16xf32>
    tpu.vector_store %arg16[%c1_81, %c64_82], %175 {strides = array<i32>} : memref<2x128xf32, #tpu.memory_space<vmem>>, vector<1x16xf32>,
    %177 = vector.extract_strided_slice %150 {offsets = [5, 16], sizes = [1, 16], strides = [1, 1]} : vector<8x32xf32> to vector<1x16xf32>
    %c1_83 = arith.constant 1 : index
    %c80_84 = arith.constant 80 : index
    %178 = vector.load %arg16[%c1_83, %c80_84] : memref<2x128xf32, #tpu.memory_space<vmem>>, vector<1x16xf32>
    tpu.vector_store %arg16[%c1_83, %c80_84], %177 {strides = array<i32>} : memref<2x128xf32, #tpu.memory_space<vmem>>, vector<1x16xf32>,
    %179 = vector.extract_strided_slice %150 {offsets = [6, 16], sizes = [1, 16], strides = [1, 1]} : vector<8x32xf32> to vector<1x16xf32>
    %c1_85 = arith.constant 1 : index
    %c96_86 = arith.constant 96 : index
    %180 = vector.load %arg16[%c1_85, %c96_86] : memref<2x128xf32, #tpu.memory_space<vmem>>, vector<1x16xf32>
    tpu.vector_store %arg16[%c1_85, %c96_86], %179 {strides = array<i32>} : memref<2x128xf32, #tpu.memory_space<vmem>>, vector<1x16xf32>,
    %181 = vector.extract_strided_slice %150 {offsets = [7, 16], sizes = [1, 16], strides = [1, 1]} : vector<8x32xf32> to vector<1x16xf32>
    %c1_87 = arith.constant 1 : index
    %c112_88 = arith.constant 112 : index
    %182 = vector.load %arg16[%c1_87, %c112_88] : memref<2x128xf32, #tpu.memory_space<vmem>>, vector<1x16xf32>
    tpu.vector_store %arg16[%c1_87, %c112_88], %181 {strides = array<i32>} : memref<2x128xf32, #tpu.memory_space<vmem>>, vector<1x16xf32>,
    %c0_89 = arith.constant 0 : index
    %c0_90 = arith.constant 0 : index
    %183 = vector.load %arg16[%c0_89, %c0_90] : memref<2x128xf32, #tpu.memory_space<vmem>>, vector<2x128xf32>
    %c0_91 = arith.constant 0 : index
    %c0_92 = arith.constant 0 : index
    %184 = vector.load %arg11[%c0_91, %c0_92] : memref<128x10xf32, #tpu.memory_space<vmem>>, vector<128x10xf32>
    %cst_93 = arith.constant dense<0.000000e+00> : vector<2x10xf32>
    %185 = tpu.matmul %183, %184, %cst_93 {dimension_numbers = #tpu.dot_dimension_numbers<[1], [0], [0], [1], [0, 0, 1, 1], [], []>} : vector<2x128xf32>, vector<128x10xf32>, vector<2x10xf32> -> vector<2x10xf32>
    %c0_94 = arith.constant 0 : index
    %c0_95 = arith.constant 0 : index
    %186 = vector.load %arg12[%c0_94, %c0_95] : memref<1x10xf32, #tpu.memory_space<vmem>>, vector<1x10xf32>
    %187 = vector.broadcast %186 : vector<1x10xf32> to vector<2x10xf32>
    %188 = arith.addf %185, %187 : vector<2x10xf32>
    %c0_96 = arith.constant 0 : index
    %c0_97 = arith.constant 0 : index
    %189 = vector.load %arg13[%c0_96, %c0_97] : memref<2x10xf32, #tpu.memory_space<vmem>>, vector<2x10xf32>
    tpu.vector_store %arg13[%c0_96, %c0_97], %188 {strides = array<i32>} : memref<2x10xf32, #tpu.memory_space<vmem>>, vector<2x10xf32>,
    return
  }
}

</mosaic_0001>

<llo_original>
// kernel: forward.1
$region0: #{forward.1}
  #allocation0 [shape = 'u32[]', space=smem, size = 0x4, offset = 0x4, fixed_abs, tag = 'smem constant byte address 0x4 - core index']
  #allocation1 [shape = 'u32[144,128]{1,0:T(1,128)}', space=vmem, size = 0x12000, scoped, tag = 'internal scratch']
  #allocation2 [shape = 'f32[8,256]{1,0:T(8,128)}', space=vmem, size = 0x2000, scoped, tag = 'scratch operand']
  #allocation3 [shape = 'f32[8,384]{1,0:T(8,128)}', space=vmem, size = 0x3000, scoped, tag = 'scratch operand']
  #allocation4 [shape = 'f32[2,128]{1,0:T(2,128)}', space=vmem, size = 0x400, scoped, tag = 'scratch operand']
  %s0 = inlined_call_operand.vmem [shape: f32[10,1024], index: 0, kind: input, shape index: {}]
  %s1 = inlined_call_operand.vmem [shape: f32[8,10], index: 1, kind: input, shape index: {}]
  %s2 = inlined_call_operand.vmem [shape: f32[72,8], index: 2, kind: input, shape index: {}]
  %s3 = inlined_call_operand.vmem [shape: f32[8,1], index: 3, kind: input, shape index: {}]
  %s4 = inlined_call_operand.vmem [shape: f32[882,200], index: 4, kind: input, shape index: {}]
  %s5 = inlined_call_operand.vmem [shape: f32[72,8], index: 5, kind: input, shape index: {}]
  %s6 = inlined_call_operand.vmem [shape: f32[8,1], index: 6, kind: input, shape index: {}]
  %s7 = inlined_call_operand.vmem [shape: f32[162,98], index: 7, kind: input, shape index: {}]
  %s8 = inlined_call_operand.vmem [shape: f32[72,8], index: 8, kind: input, shape index: {}]
  %s9 = inlined_call_operand.vmem [shape: f32[8,1], index: 9, kind: input, shape index: {}]
  %s10 = inlined_call_operand.vmem [shape: f32[242,128], index: 10, kind: input, shape index: {}]
  %s11 = inlined_call_operand.vmem [shape: f32[128,10], index: 11, kind: input, shape index: {}]
  %s12 = inlined_call_operand.vmem [shape: f32[1,10], index: 12, kind: input, shape index: {}]
  %s13 = inlined_call_operand.hbm [shape: f32[2,10], index: 13, kind: output, shape index: {}]
  %s14 = sld [smem:[#allocation0]]
  $region62: #{forward.1} parent=0
    _
  %s16 = ssub.s32 1, %s14
  %s17 = scalar_select 0, %s16, %s14
  $region1: #{forward.1} parent=0
    #allocation5 [shape = 'u8[1024]{0}', space=vmem, size = 0x400, scoped, tag = 'output window, operand 0, single buffered']
    #allocation6 [shape = 's32[1]{0}', space=sflag, size = 0x4, scoped, tag = 'scoped memory for forward.1']
    %18 = vsyncpa [#allocation6], 0
    // Predicated region
    $region2: #{forward.1} parent=1 // pred_check
      _
    $region3: #{forward.1} parent=1 // pred_check_branch
      %20 = sbr.rel (0) target = $region5
    $region4: #{forward.1} parent=1 // pred_region
      _
    $region5: #{forward.1} parent=1 // pred_fallthru
      _
    // Predicated region
    $region6: #{forward.1} parent=1 // pred_check
      _
    $region7: #{forward.1} parent=1 // pred_check_branch
      %22 = sbr.rel (0) target = $region9
    $region8: #{forward.1} parent=1 // pred_region
      _
    $region9: #{forward.1} parent=1 // pred_fallthru
      _
    // Predicated region
    $region10: #{forward.1} parent=1 // pred_check
      _
    $region11: #{forward.1} parent=1 // pred_check_branch
      %24 = sbr.rel (0) target = $region13
    $region12: #{forward.1} parent=1 // pred_region
      _
    $region13: #{forward.1} parent=1 // pred_fallthru
      _
    // Predicated region
    $region14: #{forward.1} parent=1 // pred_check
      _
    $region15: #{forward.1} parent=1 // pred_check_branch
      %26 = sbr.rel (0) target = $region17
    $region16: #{forward.1} parent=1 // pred_region
      _
    $region17: #{forward.1} parent=1 // pred_fallthru
      _
    // Predicated region
    $region18: #{forward.1} parent=1 // pred_check
      _
    $region19: #{forward.1} parent=1 // pred_check_branch
      %28 = sbr.rel (0) target = $region21
    $region20: #{forward.1} parent=1 // pred_region
      _
    $region21: #{forward.1} parent=1 // pred_fallthru
      _
    // Predicated region
    $region22: #{forward.1} parent=1 // pred_check
      _
    $region23: #{forward.1} parent=1 // pred_check_branch
      %30 = sbr.rel (0) target = $region25
    $region24: #{forward.1} parent=1 // pred_region
      _
    $region25: #{forward.1} parent=1 // pred_fallthru
      _
    // Predicated region
    $region26: #{forward.1} parent=1 // pred_check
      _
    $region27: #{forward.1} parent=1 // pred_check_branch
      %32 = sbr.rel (0) target = $region29
    $region28: #{forward.1} parent=1 // pred_region
      _
    $region29: #{forward.1} parent=1 // pred_fallthru
      _
    // Predicated region
    $region30: #{forward.1} parent=1 // pred_check
      _
    $region31: #{forward.1} parent=1 // pred_check_branch
      %34 = sbr.rel (0) target = $region33
    $region32: #{forward.1} parent=1 // pred_region
      _
    $region33: #{forward.1} parent=1 // pred_fallthru
      _
    // Predicated region
    $region34: #{forward.1} parent=1 // pred_check
      _
    $region35: #{forward.1} parent=1 // pred_check_branch
      %36 = sbr.rel (0) target = $region37
    $region36: #{forward.1} parent=1 // pred_region
      _
    $region37: #{forward.1} parent=1 // pred_fallthru
      _
    // Predicated region
    $region38: #{forward.1} parent=1 // pred_check
      _
    $region39: #{forward.1} parent=1 // pred_check_branch
      %38 = sbr.rel (0) target = $region41
    $region40: #{forward.1} parent=1 // pred_region
      _
    $region41: #{forward.1} parent=1 // pred_fallthru
      _
    // Predicated region
    $region42: #{forward.1} parent=1 // pred_check
      _
    $region43: #{forward.1} parent=1 // pred_check_branch
      %40 = sbr.rel (0) target = $region45
    $region44: #{forward.1} parent=1 // pred_region
      _
    $region45: #{forward.1} parent=1 // pred_fallthru
      _
    // Predicated region
    $region46: #{forward.1} parent=1 // pred_check
      _
    $region47: #{forward.1} parent=1 // pred_check_branch
      %42 = sbr.rel (0) target = $region49
    $region48: #{forward.1} parent=1 // pred_region
      _
    $region49: #{forward.1} parent=1 // pred_fallthru
      _
    // Predicated region
    $region50: #{forward.1} parent=1 // pred_check
      _
    $region51: #{forward.1} parent=1 // pred_check_branch
      %44 = sbr.rel (0) target = $region53
    $region52: #{forward.1} parent=1 // pred_region
      _
    $region53: #{forward.1} parent=1 // pred_fallthru
      _
    %v45 = vld [vmem:[%s1] sm:$0xff]
    %v46 = vld [vmem:[%s0] sm:$0xff]
    %v47 = vld [vmem:[%s0 + $0x8] sm:$0xff]
    %v48 = vld [vmem:[%s0 + $0x10] sm:$0xff]
    %v49 = vld [vmem:[%s0 + $0x18] sm:$0xff]
    %v50 = vld [vmem:[%s0 + $0x20] sm:$0xff]
    %v51 = vld [vmem:[%s0 + $0x28] sm:$0xff]
    %v52 = vld [vmem:[%s0 + $0x30] sm:$0xff]
    %v53 = vld [vmem:[%s0 + $0x38] sm:$0xff]
    %v54 = vld [vmem:[%s0 + $0x40] sm:$0x3]
    %v55 = vld [vmem:[%s0 + $0x48] sm:$0x3]
    %v56 = vld [vmem:[%s0 + $0x50] sm:$0x3]
    %v57 = vld [vmem:[%s0 + $0x58] sm:$0x3]
    %v58 = vld [vmem:[%s0 + $0x60] sm:$0x3]
    %v59 = vld [vmem:[%s0 + $0x68] sm:$0x3]
    %v60 = vld [vmem:[%s0 + $0x70] sm:$0x3]
    %v61 = vld [vmem:[%s0 + $0x78] sm:$0x3]
    %vm62 = vcmask 80896
    %v64 = vsel %vm62, %v45, 0
    %vm66 = vcmask 1041408
    %v68 = vsel %vm66, %v54, 0
    %v71 = vsel %vm66, %v55, 0
    %v74 = vsel %vm66, %v56, 0
    %v77 = vsel %vm66, %v57, 0
    %v80 = vsel %vm66, %v58, 0
    %v83 = vsel %vm66, %v59, 0
    %v86 = vsel %vm66, %v60, 0
    %v89 = vsel %vm66, %v61, 0
    %91 = vmatprep.subr.mxu0 0.0
    %92 = vmatpush1.msra.mxu0 0.0
    %93 = vmatprep.subr.mxu0 0.0
    %94 = vmatpush1.msra.mxu0 0.0
    %95 = vmatprep.subr.mxu0 0.0
    %96 = vmatpush1.msra.mxu0 0.0
    %97 = vmatprep.subr.mxu0 0.0
    %98 = vmatpush1.msra.mxu0 0.0
    %99 = vmatprep.subr.mxu0 0.0
    %100 = vmatpush1.msra.mxu0 0.0
    %101 = vmatprep.subr.mxu0 0.0
    %102 = vmatpush1.msra.mxu0 0.0
    %103 = vmatprep.subr.mxu0 0.0
    %104 = vmatpush1.msra.mxu0 0.0
    %105 = vmatprep.subr.mxu0 0.0
    %106 = vmatpush1.msra.mxu0 0.0
    %107 = vmatprep.subr.mxu0 0.0
    %108 = vmatpush1.msra.mxu0 0.0
    %109 = vmatprep.subr.mxu0 0.0
    %110 = vmatpush1.msra.mxu0 0.0
    %111 = vmatprep.subr.mxu0 0.0
    %112 = vmatpush1.msra.mxu0 0.0
    %113 = vmatprep.subr.mxu0 0.0
    %114 = vmatpush1.msra.mxu0 0.0
    %115 = vmatprep.subr.mxu0 0.0
    %116 = vmatpush1.msra.mxu0 0.0
    %117 = vmatprep.subr.mxu0 0.0
    %118 = vmatpush1.msra.mxu0 0.0
    %119 = vmatprep.subr.mxu0 %v71
    %120 = vmatpush1.msra.mxu0 %v68
    %121 = vmatprep.subr.mxu0 %v47
    %122 = vmatpush1.msra.mxu0 %v46
    %123 = vmatprep.subr.mxu0 0.0
    %124 = vmatpush2.msra.mxu0 0.0
    %125 = vmatprep.subr.mxu0 0.0
    %126 = vmatpush2.msra.mxu0 0.0
    %127 = vmatprep.subr.mxu0 0.0
    %128 = vmatpush2.msra.mxu0 0.0
    %129 = vmatprep.subr.mxu0 0.0
    %130 = vmatpush2.msra.mxu0 0.0
    %131 = vmatprep.subr.mxu0 0.0
    %132 = vmatpush2.msra.mxu0 0.0
    %133 = vmatprep.subr.mxu0 0.0
    %134 = vmatpush2.msra.mxu0 0.0
    %135 = vmatprep.subr.mxu0 0.0
    %136 = vmatpush2.msra.mxu0 0.0
    %137 = vmatprep.subr.mxu0 0.0
    %138 = vmatpush2.msra.mxu0 0.0
    %139 = vmatprep.subr.mxu0 0.0
    %140 = vmatpush2.msra.mxu0 0.0
    %141 = vmatprep.subr.mxu0 0.0
    %142 = vmatpush2.msra.mxu0 0.0
    %143 = vmatprep.subr.mxu0 0.0
    %144 = vmatpush2.msra.mxu0 0.0
    %145 = vmatprep.subr.mxu0 0.0
    %146 = vmatpush2.msra.mxu0 0.0
    %147 = vmatprep.subr.mxu0 0.0
    %148 = vmatpush2.msra.mxu0 0.0
    %149 = vmatprep.subr.mxu0 0.0
    %150 = vmatpush2.msra.mxu0 0.0
    %151 = vmatprep.subr.mxu0 0.0
    %152 = vmatpush2.msra.mxu0 0.0
    %153 = vmatprep.subr.mxu0 0.0
    %154 = vmatpush2.msra.mxu0 0.0
    %155 = vmatprep.mubr.f32.mxu0 0.0
    %156 = vmatmul.mubr.f32.gmra.mxu0 %v64
    %v157 = vpop.f32.mrf.mxu0
    %v158 = vadd.f32 0.0, %v157
    %v159 = vpop.f32.mrf.mxu0
    %v160 = vadd.f32 0.0, %v159
    %161 = vdwg.mxu0
    %162 = vmatprep.subr.mxu0 0.0
    %163 = vmatpush1.msra.mxu0 0.0
    %164 = vmatprep.subr.mxu0 0.0
    %165 = vmatpush1.msra.mxu0 0.0
    %166 = vmatprep.subr.mxu0 0.0
    %167 = vmatpush1.msra.mxu0 0.0
    %168 = vmatprep.subr.mxu0 0.0
    %169 = vmatpush1.msra.mxu0 0.0
    %170 = vmatprep.subr.mxu0 0.0
    %171 = vmatpush1.msra.mxu0 0.0
    %172 = vmatprep.subr.mxu0 0.0
    %173 = vmatpush1.msra.mxu0 0.0
    %174 = vmatprep.subr.mxu0 0.0
    %175 = vmatpush1.msra.mxu0 0.0
    %176 = vmatprep.subr.mxu0 0.0
    %177 = vmatpush1.msra.mxu0 0.0
    %178 = vmatprep.subr.mxu0 0.0
    %179 = vmatpush1.msra.mxu0 0.0
    %180 = vmatprep.subr.mxu0 0.0
    %181 = vmatpush1.msra.mxu0 0.0
    %182 = vmatprep.subr.mxu0 0.0
    %183 = vmatpush1.msra.mxu0 0.0
    %184 = vmatprep.subr.mxu0 0.0
    %185 = vmatpush1.msra.mxu0 0.0
    %186 = vmatprep.subr.mxu0 0.0
    %187 = vmatpush1.msra.mxu0 0.0
    %188 = vmatprep.subr.mxu0 0.0
    %189 = vmatpush1.msra.mxu0 0.0
    %190 = vmatprep.subr.mxu0 %v77
    %191 = vmatpush1.msra.mxu0 %v74
    %192 = vmatprep.subr.mxu0 %v49
    %193 = vmatpush1.msra.mxu0 %v48
    %194 = vmatprep.subr.mxu0 0.0
    %195 = vmatpush2.msra.mxu0 0.0
    %196 = vmatprep.subr.mxu0 0.0
    %197 = vmatpush2.msra.mxu0 0.0
    %198 = vmatprep.subr.mxu0 0.0
    %199 = vmatpush2.msra.mxu0 0.0
    %200 = vmatprep.subr.mxu0 0.0
    %201 = vmatpush2.msra.mxu0 0.0
    %202 = vmatprep.subr.mxu0 0.0
    %203 = vmatpush2.msra.mxu0 0.0
    %204 = vmatprep.subr.mxu0 0.0
    %205 = vmatpush2.msra.mxu0 0.0
    %206 = vmatprep.subr.mxu0 0.0
    %207 = vmatpush2.msra.mxu0 0.0
    %208 = vmatprep.subr.mxu0 0.0
    %209 = vmatpush2.msra.mxu0 0.0
    %210 = vmatprep.subr.mxu0 0.0
    %211 = vmatpush2.msra.mxu0 0.0
    %212 = vmatprep.subr.mxu0 0.0
    %213 = vmatpush2.msra.mxu0 0.0
    %214 = vmatprep.subr.mxu0 0.0
    %215 = vmatpush2.msra.mxu0 0.0
    %216 = vmatprep.subr.mxu0 0.0
    %217 = vmatpush2.msra.mxu0 0.0
    %218 = vmatprep.subr.mxu0 0.0
    %219 = vmatpush2.msra.mxu0 0.0
    %220 = vmatprep.subr.mxu0 0.0
    %221 = vmatpush2.msra.mxu0 0.0
    %222 = vmatprep.subr.mxu0 0.0
    %223 = vmatpush2.msra.mxu0 0.0
    %224 = vmatprep.subr.mxu0 0.0
    %225 = vmatpush2.msra.mxu0 0.0
    %226 = vmatprep.mubr.f32.mxu0 0.0
    %227 = vmatmul.mubr.f32.gmra.mxu0 %v64
    %v228 = vpop.f32.mrf.mxu0
    %v229 = vadd.f32 0.0, %v228
    %v230 = vpop.f32.mrf.mxu0
    %v231 = vadd.f32 0.0, %v230
    %232 = vdwg.mxu0
    %233 = vmatprep.subr.mxu0 0.0
    %234 = vmatpush1.msra.mxu0 0.0
    %235 = vmatprep.subr.mxu0 0.0
    %236 = vmatpush1.msra.mxu0 0.0
    %237 = vmatprep.subr.mxu0 0.0
    %238 = vmatpush1.msra.mxu0 0.0
    %239 = vmatprep.subr.mxu0 0.0
    %240 = vmatpush1.msra.mxu0 0.0
    %241 = vmatprep.subr.mxu0 0.0
    %242 = vmatpush1.msra.mxu0 0.0
    %243 = vmatprep.subr.mxu0 0.0
    %244 = vmatpush1.msra.mxu0 0.0
    %245 = vmatprep.subr.mxu0 0.0
    %246 = vmatpush1.msra.mxu0 0.0
    %247 = vmatprep.subr.mxu0 0.0
    %248 = vmatpush1.msra.mxu0 0.0
    %249 = vmatprep.subr.mxu0 0.0
    %250 = vmatpush1.msra.mxu0 0.0
    %251 = vmatprep.subr.mxu0 0.0
    %252 = vmatpush1.msra.mxu0 0.0
    %253 = vmatprep.subr.mxu0 0.0
    %254 = vmatpush1.msra.mxu0 0.0
    %255 = vmatprep.subr.mxu0 0.0
    %256 = vmatpush1.msra.mxu0 0.0
    %257 = vmatprep.subr.mxu0 0.0
    %258 = vmatpush1.msra.mxu0 0.0
    %259 = vmatprep.subr.mxu0 0.0
    %260 = vmatpush1.msra.mxu0 0.0
    %261 = vmatprep.subr.mxu0 %v83
    %262 = vmatpush1.msra.mxu0 %v80
    %263 = vmatprep.subr.mxu0 %v51
    %264 = vmatpush1.msra.mxu0 %v50
    %265 = vmatprep.subr.mxu0 0.0
    %266 = vmatpush2.msra.mxu0 0.0
    %267 = vmatprep.subr.mxu0 0.0
    %268 = vmatpush2.msra.mxu0 0.0
    %269 = vmatprep.subr.mxu0 0.0
    %270 = vmatpush2.msra.mxu0 0.0
    %271 = vmatprep.subr.mxu0 0.0
    %272 = vmatpush2.msra.mxu0 0.0
    %273 = vmatprep.subr.mxu0 0.0
    %274 = vmatpush2.msra.mxu0 0.0
    %275 = vmatprep.subr.mxu0 0.0
    %276 = vmatpush2.msra.mxu0 0.0
    %277 = vmatprep.subr.mxu0 0.0
    %278 = vmatpush2.msra.mxu0 0.0
    %279 = vmatprep.subr.mxu0 0.0
    %280 = vmatpush2.msra.mxu0 0.0
    %281 = vmatprep.subr.mxu0 0.0
    %282 = vmatpush2.msra.mxu0 0.0
    %283 = vmatprep.subr.mxu0 0.0
    %284 = vmatpush2.msra.mxu0 0.0
    %285 = vmatprep.subr.mxu0 0.0
    %286 = vmatpush2.msra.mxu0 0.0
    %287 = vmatprep.subr.mxu0 0.0
    %288 = vmatpush2.msra.mxu0 0.0
    %289 = vmatprep.subr.mxu0 0.0
    %290 = vmatpush2.msra.mxu0 0.0
    %291 = vmatprep.subr.mxu0 0.0
    %292 = vmatpush2.msra.mxu0 0.0
    %293 = vmatprep.subr.mxu0 0.0
    %294 = vmatpush2.msra.mxu0 0.0
    %295 = vmatprep.subr.mxu0 0.0
    %296 = vmatpush2.msra.mxu0 0.0
    %297 = vmatprep.mubr.f32.mxu0 0.0
    %298 = vmatmul.mubr.f32.gmra.mxu0 %v64
    %v299 = vpop.f32.mrf.mxu0
    %v300 = vadd.f32 0.0, %v299
    %v301 = vpop.f32.mrf.mxu0
    %v302 = vadd.f32 0.0, %v301
    %303 = vdwg.mxu0
    %304 = vmatprep.subr.mxu0 0.0
    %305 = vmatpush1.msra.mxu0 0.0
    %306 = vmatprep.subr.mxu0 0.0
    %307 = vmatpush1.msra.mxu0 0.0
    %308 = vmatprep.subr.mxu0 0.0
    %309 = vmatpush1.msra.mxu0 0.0
    %310 = vmatprep.subr.mxu0 0.0
    %311 = vmatpush1.msra.mxu0 0.0
    %312 = vmatprep.subr.mxu0 0.0
    %313 = vmatpush1.msra.mxu0 0.0
    %314 = vmatprep.subr.mxu0 0.0
    %315 = vmatpush1.msra.mxu0 0.0
    %316 = vmatprep.subr.mxu0 0.0
    %317 = vmatpush1.msra.mxu0 0.0
    %318 = vmatprep.subr.mxu0 0.0
    %319 = vmatpush1.msra.mxu0 0.0
    %320 = vmatprep.subr.mxu0 0.0
    %321 = vmatpush1.msra.mxu0 0.0
    %322 = vmatprep.subr.mxu0 0.0
    %323 = vmatpush1.msra.mxu0 0.0
    %324 = vmatprep.subr.mxu0 0.0
    %325 = vmatpush1.msra.mxu0 0.0
    %326 = vmatprep.subr.mxu0 0.0
    %327 = vmatpush1.msra.mxu0 0.0
    %328 = vmatprep.subr.mxu0 0.0
    %329 = vmatpush1.msra.mxu0 0.0
    %330 = vmatprep.subr.mxu0 0.0
    %331 = vmatpush1.msra.mxu0 0.0
    %332 = vmatprep.subr.mxu0 %v89
    %333 = vmatpush1.msra.mxu0 %v86
    %334 = vmatprep.subr.mxu0 %v53
    %335 = vmatpush1.msra.mxu0 %v52
    %336 = vmatprep.subr.mxu0 0.0
    %337 = vmatpush2.msra.mxu0 0.0
    %338 = vmatprep.subr.mxu0 0.0
    %339 = vmatpush2.msra.mxu0 0.0
    %340 = vmatprep.subr.mxu0 0.0
    %341 = vmatpush2.msra.mxu0 0.0
    %342 = vmatprep.subr.mxu0 0.0
    %343 = vmatpush2.msra.mxu0 0.0
    %344 = vmatprep.subr.mxu0 0.0
    %345 = vmatpush2.msra.mxu0 0.0
    %346 = vmatprep.subr.mxu0 0.0
    %347 = vmatpush2.msra.mxu0 0.0
    %348 = vmatprep.subr.mxu0 0.0
    %349 = vmatpush2.msra.mxu0 0.0
    %350 = vmatprep.subr.mxu0 0.0
    %351 = vmatpush2.msra.mxu0 0.0
    %352 = vmatprep.subr.mxu0 0.0
    %353 = vmatpush2.msra.mxu0 0.0
    %354 = vmatprep.subr.mxu0 0.0
    %355 = vmatpush2.msra.mxu0 0.0
    %356 = vmatprep.subr.mxu0 0.0
    %357 = vmatpush2.msra.mxu0 0.0
    %358 = vmatprep.subr.mxu0 0.0
    %359 = vmatpush2.msra.mxu0 0.0
    %360 = vmatprep.subr.mxu0 0.0
    %361 = vmatpush2.msra.mxu0 0.0
    %362 = vmatprep.subr.mxu0 0.0
    %363 = vmatpush2.msra.mxu0 0.0
    %364 = vmatprep.subr.mxu0 0.0
    %365 = vmatpush2.msra.mxu0 0.0
    %366 = vmatprep.subr.mxu0 0.0
    %367 = vmatpush2.msra.mxu0 0.0
    %368 = vmatprep.mubr.f32.mxu0 0.0
    %369 = vmatmul.mubr.f32.gmra.mxu0 %v64
    %v370 = vpop.f32.mrf.mxu0
    %v371 = vadd.f32 0.0, %v370
    %v372 = vpop.f32.mrf.mxu0
    %v373 = vadd.f32 0.0, %v372
    %374 = vdwg.mxu0
    %v375 = vmax.f32 %v158, 0.0
    %v376 = vmax.f32 %v160, 0.0
    %v377 = vmax.f32 %v229, 0.0
    %v378 = vmax.f32 %v231, 0.0
    %v379 = vmax.f32 %v300, 0.0
    %v380 = vmax.f32 %v302, 0.0
    %v381 = vmax.f32 %v371, 0.0
    %v382 = vmax.f32 %v373, 0.0
    %v383 = vld [vmem:[%s2] sm:$0xff]
    %v384 = vld [vmem:[%s2 + $0x8] sm:$0xff]
    %v385 = vld [vmem:[%s2 + $0x10] sm:$0xff]
    %v386 = vld [vmem:[%s2 + $0x18] sm:$0xff]
    %v387 = vld [vmem:[%s2 + $0x20] sm:$0xff]
    %v388 = vld [vmem:[%s2 + $0x28] sm:$0xff]
    %v389 = vld [vmem:[%s2 + $0x30] sm:$0xff]
    %v390 = vld [vmem:[%s2 + $0x38] sm:$0xff]
    %v391 = vld [vmem:[%s2 + $0x40] sm:$0xff]
    %vm392 = vcmask 64512
    %v394 = vsel %vm392, %v383, 0
    %v397 = vsel %vm392, %v384, 0
    %v400 = vsel %vm392, %v385, 0
    %v403 = vsel %vm392, %v386, 0
    %v406 = vsel %vm392, %v387, 0
    %v409 = vsel %vm392, %v388, 0
    %v412 = vsel %vm392, %v389, 0
    %v415 = vsel %vm392, %v390, 0
    %v418 = vsel %vm392, %v391, 0
    %420 = vmatprep.subr.mxu0 0.0
    %421 = vmatpush1.msra.mxu0 0.0
    %422 = vmatprep.subr.mxu0 0.0
    %423 = vmatpush1.msra.mxu0 0.0
    %424 = vmatprep.subr.mxu0 0.0
    %425 = vmatpush1.msra.mxu0 0.0
    %426 = vmatprep.subr.mxu0 0.0
    %427 = vmatpush1.msra.mxu0 0.0
    %428 = vmatprep.subr.mxu0 0.0
    %429 = vmatpush1.msra.mxu0 0.0
    %430 = vmatprep.subr.mxu0 0.0
    %431 = vmatpush1.msra.mxu0 0.0
    %432 = vmatprep.subr.mxu0 0.0
    %433 = vmatpush1.msra.mxu0 0.0
    %434 = vmatprep.subr.mxu0 0.0
    %435 = vmatpush1.msra.mxu0 0.0
    %436 = vmatprep.subr.mxu0 0.0
    %437 = vmatpush1.msra.mxu0 0.0
    %438 = vmatprep.subr.mxu0 0.0
    %439 = vmatpush1.msra.mxu0 0.0
    %440 = vmatprep.subr.mxu0 0.0
    %441 = vmatpush1.msra.mxu0 0.0
    %442 = vmatprep.subr.mxu0 0.0
    %443 = vmatpush1.msra.mxu0 0.0
    %444 = vmatprep.subr.mxu0 0.0
    %445 = vmatpush1.msra.mxu0 0.0
    %446 = vmatprep.subr.mxu0 0.0
    %447 = vmatpush1.msra.mxu0 0.0
    %448 = vmatprep.subr.mxu0 0.0
    %449 = vmatpush1.msra.mxu0 0.0
    %450 = vmatprep.subr.mxu0 %v376
    %451 = vmatpush1.msra.mxu0 %v375
    %452 = vmatprep.subr.mxu0 0.0
    %453 = vmatpush2.msra.mxu0 0.0
    %454 = vmatprep.subr.mxu0 0.0
    %455 = vmatpush2.msra.mxu0 0.0
    %456 = vmatprep.subr.mxu0 0.0
    %457 = vmatpush2.msra.mxu0 0.0
    %458 = vmatprep.subr.mxu0 0.0
    %459 = vmatpush2.msra.mxu0 0.0
    %460 = vmatprep.subr.mxu0 0.0
    %461 = vmatpush2.msra.mxu0 0.0
    %462 = vmatprep.subr.mxu0 0.0
    %463 = vmatpush2.msra.mxu0 0.0
    %464 = vmatprep.subr.mxu0 0.0
    %465 = vmatpush2.msra.mxu0 0.0
    %466 = vmatprep.subr.mxu0 0.0
    %467 = vmatpush2.msra.mxu0 0.0
    %468 = vmatprep.subr.mxu0 0.0
    %469 = vmatpush2.msra.mxu0 0.0
    %470 = vmatprep.subr.mxu0 0.0
    %471 = vmatpush2.msra.mxu0 0.0
    %472 = vmatprep.subr.mxu0 0.0
    %473 = vmatpush2.msra.mxu0 0.0
    %474 = vmatprep.subr.mxu0 0.0
    %475 = vmatpush2.msra.mxu0 0.0
    %476 = vmatprep.subr.mxu0 0.0
    %477 = vmatpush2.msra.mxu0 0.0
    %478 = vmatprep.subr.mxu0 0.0
    %479 = vmatpush2.msra.mxu0 0.0
    %480 = vmatprep.subr.mxu0 0.0
    %481 = vmatpush2.msra.mxu0 0.0
    %482 = vmatprep.subr.mxu0 0.0
    %483 = vmatpush2.msra.mxu0 0.0
    %484 = vmatprep.mubr.f32.mxu0 0.0
    %485 = vmatmul.mubr.f32.gmra.mxu0 %v394
    %v486 = vpop.f32.mrf.mxu0
    %v487 = vadd.f32 0.0, %v486
    %v488 = vpop.f32.mrf.mxu0
    %v489 = vadd.f32 0.0, %v488
    %490 = vmatprep.mubr.f32.mxu0 0.0
    %491 = vmatmul.mubr.f32.gmra.mxu0 %v397
    %v492 = vpop.f32.mrf.mxu0
    %v493 = vadd.f32 0.0, %v492
    %v494 = vpop.f32.mrf.mxu0
    %v495 = vadd.f32 0.0, %v494
    %496 = vmatprep.mubr.f32.mxu0 0.0
    %497 = vmatmul.mubr.f32.gmra.mxu0 %v400
    %v498 = vpop.f32.mrf.mxu0
    %v499 = vadd.f32 0.0, %v498
    %v500 = vpop.f32.mrf.mxu0
    %v501 = vadd.f32 0.0, %v500
    %502 = vmatprep.mubr.f32.mxu0 0.0
    %503 = vmatmul.mubr.f32.gmra.mxu0 %v403
    %v504 = vpop.f32.mrf.mxu0
    %v505 = vadd.f32 0.0, %v504
    %v506 = vpop.f32.mrf.mxu0
    %v507 = vadd.f32 0.0, %v506
    %508 = vmatprep.mubr.f32.mxu0 0.0
    %509 = vmatmul.mubr.f32.gmra.mxu0 %v406
    %v510 = vpop.f32.mrf.mxu0
    %v511 = vadd.f32 0.0, %v510
    %v512 = vpop.f32.mrf.mxu0
    %v513 = vadd.f32 0.0, %v512
    %514 = vmatprep.mubr.f32.mxu0 0.0
    %515 = vmatmul.mubr.f32.gmra.mxu0 %v409
    %v516 = vpop.f32.mrf.mxu0
    %v517 = vadd.f32 0.0, %v516
    %v518 = vpop.f32.mrf.mxu0
    %v519 = vadd.f32 0.0, %v518
    %520 = vmatprep.mubr.f32.mxu0 0.0
    %521 = vmatmul.mubr.f32.gmra.mxu0 %v412
    %v522 = vpop.f32.mrf.mxu0
    %v523 = vadd.f32 0.0, %v522
    %v524 = vpop.f32.mrf.mxu0
    %v525 = vadd.f32 0.0, %v524
    %526 = vmatprep.mubr.f32.mxu0 0.0
    %527 = vmatmul.mubr.f32.gmra.mxu0 %v415
    %v528 = vpop.f32.mrf.mxu0
    %v529 = vadd.f32 0.0, %v528
    %v530 = vpop.f32.mrf.mxu0
    %v531 = vadd.f32 0.0, %v530
    %532 = vmatprep.mubr.f32.mxu0 0.0
    %533 = vmatmul.mubr.f32.gmra.mxu0 %v418
    %v534 = vpop.f32.mrf.mxu0
    %v535 = vadd.f32 0.0, %v534
    %v536 = vpop.f32.mrf.mxu0
    %v537 = vadd.f32 0.0, %v536
    %538 = vdwg.mxu0
    %539 = vmatprep.subr.mxu0 0.0
    %540 = vmatpush1.msra.mxu0 0.0
    %541 = vmatprep.subr.mxu0 0.0
    %542 = vmatpush1.msra.mxu0 0.0
    %543 = vmatprep.subr.mxu0 0.0
    %544 = vmatpush1.msra.mxu0 0.0
    %545 = vmatprep.subr.mxu0 0.0
    %546 = vmatpush1.msra.mxu0 0.0
    %547 = vmatprep.subr.mxu0 0.0
    %548 = vmatpush1.msra.mxu0 0.0
    %549 = vmatprep.subr.mxu0 0.0
    %550 = vmatpush1.msra.mxu0 0.0
    %551 = vmatprep.subr.mxu0 0.0
    %552 = vmatpush1.msra.mxu0 0.0
    %553 = vmatprep.subr.mxu0 0.0
    %554 = vmatpush1.msra.mxu0 0.0
    %555 = vmatprep.subr.mxu0 0.0
    %556 = vmatpush1.msra.mxu0 0.0
    %557 = vmatprep.subr.mxu0 0.0
    %558 = vmatpush1.msra.mxu0 0.0
    %559 = vmatprep.subr.mxu0 0.0
    %560 = vmatpush1.msra.mxu0 0.0
    %561 = vmatprep.subr.mxu0 0.0
    %562 = vmatpush1.msra.mxu0 0.0
    %563 = vmatprep.subr.mxu0 0.0
    %564 = vmatpush1.msra.mxu0 0.0
    %565 = vmatprep.subr.mxu0 0.0
    %566 = vmatpush1.msra.mxu0 0.0
    %567 = vmatprep.subr.mxu0 0.0
    %568 = vmatpush1.msra.mxu0 0.0
    %569 = vmatprep.subr.mxu0 %v378
    %570 = vmatpush1.msra.mxu0 %v377
    %571 = vmatprep.subr.mxu0 0.0
    %572 = vmatpush2.msra.mxu0 0.0
    %573 = vmatprep.subr.mxu0 0.0
    %574 = vmatpush2.msra.mxu0 0.0
    %575 = vmatprep.subr.mxu0 0.0
    %576 = vmatpush2.msra.mxu0 0.0
    %577 = vmatprep.subr.mxu0 0.0
    %578 = vmatpush2.msra.mxu0 0.0
    %579 = vmatprep.subr.mxu0 0.0
    %580 = vmatpush2.msra.mxu0 0.0
    %581 = vmatprep.subr.mxu0 0.0
    %582 = vmatpush2.msra.mxu0 0.0
    %583 = vmatprep.subr.mxu0 0.0
    %584 = vmatpush2.msra.mxu0 0.0
    %585 = vmatprep.subr.mxu0 0.0
    %586 = vmatpush2.msra.mxu0 0.0
    %587 = vmatprep.subr.mxu0 0.0
    %588 = vmatpush2.msra.mxu0 0.0
    %589 = vmatprep.subr.mxu0 0.0
    %590 = vmatpush2.msra.mxu0 0.0
    %591 = vmatprep.subr.mxu0 0.0
    %592 = vmatpush2.msra.mxu0 0.0
    %593 = vmatprep.subr.mxu0 0.0
    %594 = vmatpush2.msra.mxu0 0.0
    %595 = vmatprep.subr.mxu0 0.0
    %596 = vmatpush2.msra.mxu0 0.0
    %597 = vmatprep.subr.mxu0 0.0
    %598 = vmatpush2.msra.mxu0 0.0
    %599 = vmatprep.subr.mxu0 0.0
    %600 = vmatpush2.msra.mxu0 0.0
    %601 = vmatprep.subr.mxu0 0.0
    %602 = vmatpush2.msra.mxu0 0.0
    %603 = vmatprep.mubr.f32.mxu0 0.0
    %604 = vmatmul.mubr.f32.gmra.mxu0 %v394
    %v605 = vpop.f32.mrf.mxu0
    %v606 = vadd.f32 0.0, %v605
    %v607 = vpop.f32.mrf.mxu0
    %v608 = vadd.f32 0.0, %v607
    %609 = vmatprep.mubr.f32.mxu0 0.0
    %610 = vmatmul.mubr.f32.gmra.mxu0 %v397
    %v611 = vpop.f32.mrf.mxu0
    %v612 = vadd.f32 0.0, %v611
    %v613 = vpop.f32.mrf.mxu0
    %v614 = vadd.f32 0.0, %v613
    %615 = vmatprep.mubr.f32.mxu0 0.0
    %616 = vmatmul.mubr.f32.gmra.mxu0 %v400
    %v617 = vpop.f32.mrf.mxu0
    %v618 = vadd.f32 0.0, %v617
    %v619 = vpop.f32.mrf.mxu0
    %v620 = vadd.f32 0.0, %v619
    %621 = vmatprep.mubr.f32.mxu0 0.0
    %622 = vmatmul.mubr.f32.gmra.mxu0 %v403
    %v623 = vpop.f32.mrf.mxu0
    %v624 = vadd.f32 0.0, %v623
    %v625 = vpop.f32.mrf.mxu0
    %v626 = vadd.f32 0.0, %v625
    %627 = vmatprep.mubr.f32.mxu0 0.0
    %628 = vmatmul.mubr.f32.gmra.mxu0 %v406
    %v629 = vpop.f32.mrf.mxu0
    %v630 = vadd.f32 0.0, %v629
    %v631 = vpop.f32.mrf.mxu0
    %v632 = vadd.f32 0.0, %v631
    %633 = vmatprep.mubr.f32.mxu0 0.0
    %634 = vmatmul.mubr.f32.gmra.mxu0 %v409
    %v635 = vpop.f32.mrf.mxu0
    %v636 = vadd.f32 0.0, %v635
    %v637 = vpop.f32.mrf.mxu0
    %v638 = vadd.f32 0.0, %v637
    %639 = vmatprep.mubr.f32.mxu0 0.0
    %640 = vmatmul.mubr.f32.gmra.mxu0 %v412
    %v641 = vpop.f32.mrf.mxu0
    %v642 = vadd.f32 0.0, %v641
    %v643 = vpop.f32.mrf.mxu0
    %v644 = vadd.f32 0.0, %v643
    %645 = vmatprep.mubr.f32.mxu0 0.0
    %646 = vmatmul.mubr.f32.gmra.mxu0 %v415
    %v647 = vpop.f32.mrf.mxu0
    %v648 = vadd.f32 0.0, %v647
    %v649 = vpop.f32.mrf.mxu0
    %v650 = vadd.f32 0.0, %v649
    %651 = vmatprep.mubr.f32.mxu0 0.0
    %652 = vmatmul.mubr.f32.gmra.mxu0 %v418
    %v653 = vpop.f32.mrf.mxu0
    %v654 = vadd.f32 0.0, %v653
    %v655 = vpop.f32.mrf.mxu0
    %v656 = vadd.f32 0.0, %v655
    %657 = vdwg.mxu0
    %658 = vmatprep.subr.mxu0 0.0
    %659 = vmatpush1.msra.mxu0 0.0
    %660 = vmatprep.subr.mxu0 0.0
    %661 = vmatpush1.msra.mxu0 0.0
    %662 = vmatprep.subr.mxu0 0.0
    %663 = vmatpush1.msra.mxu0 0.0
    %664 = vmatprep.subr.mxu0 0.0
    %665 = vmatpush1.msra.mxu0 0.0
    %666 = vmatprep.subr.mxu0 0.0
    %667 = vmatpush1.msra.mxu0 0.0
    %668 = vmatprep.subr.mxu0 0.0
    %669 = vmatpush1.msra.mxu0 0.0
    %670 = vmatprep.subr.mxu0 0.0
    %671 = vmatpush1.msra.mxu0 0.0
    %672 = vmatprep.subr.mxu0 0.0
    %673 = vmatpush1.msra.mxu0 0.0
    %674 = vmatprep.subr.mxu0 0.0
    %675 = vmatpush1.msra.mxu0 0.0
    %676 = vmatprep.subr.mxu0 0.0
    %677 = vmatpush1.msra.mxu0 0.0
    %678 = vmatprep.subr.mxu0 0.0
    %679 = vmatpush1.msra.mxu0 0.0
    %680 = vmatprep.subr.mxu0 0.0
    %681 = vmatpush1.msra.mxu0 0.0
    %682 = vmatprep.subr.mxu0 0.0
    %683 = vmatpush1.msra.mxu0 0.0
    %684 = vmatprep.subr.mxu0 0.0
    %685 = vmatpush1.msra.mxu0 0.0
    %686 = vmatprep.subr.mxu0 0.0
    %687 = vmatpush1.msra.mxu0 0.0
    %688 = vmatprep.subr.mxu0 %v380
    %689 = vmatpush1.msra.mxu0 %v379
    %690 = vmatprep.subr.mxu0 0.0
    %691 = vmatpush2.msra.mxu0 0.0
    %692 = vmatprep.subr.mxu0 0.0
    %693 = vmatpush2.msra.mxu0 0.0
    %694 = vmatprep.subr.mxu0 0.0
    %695 = vmatpush2.msra.mxu0 0.0
    %696 = vmatprep.subr.mxu0 0.0
    %697 = vmatpush2.msra.mxu0 0.0
    %698 = vmatprep.subr.mxu0 0.0
    %699 = vmatpush2.msra.mxu0 0.0
    %700 = vmatprep.subr.mxu0 0.0
    %701 = vmatpush2.msra.mxu0 0.0
    %702 = vmatprep.subr.mxu0 0.0
    %703 = vmatpush2.msra.mxu0 0.0
    %704 = vmatprep.subr.mxu0 0.0
    %705 = vmatpush2.msra.mxu0 0.0
    %706 = vmatprep.subr.mxu0 0.0
    %707 = vmatpush2.msra.mxu0 0.0
    %708 = vmatprep.subr.mxu0 0.0
    %709 = vmatpush2.msra.mxu0 0.0
    %710 = vmatprep.subr.mxu0 0.0
    %711 = vmatpush2.msra.mxu0 0.0
    %712 = vmatprep.subr.mxu0 0.0
    %713 = vmatpush2.msra.mxu0 0.0
    %714 = vmatprep.subr.mxu0 0.0
    %715 = vmatpush2.msra.mxu0 0.0
    %716 = vmatprep.subr.mxu0 0.0
    %717 = vmatpush2.msra.mxu0 0.0
    %718 = vmatprep.subr.mxu0 0.0
    %719 = vmatpush2.msra.mxu0 0.0
    %720 = vmatprep.subr.mxu0 0.0
    %721 = vmatpush2.msra.mxu0 0.0
    %722 = vmatprep.mubr.f32.mxu0 0.0
    %723 = vmatmul.mubr.f32.gmra.mxu0 %v394
    %v724 = vpop.f32.mrf.mxu0
    %v725 = vadd.f32 0.0, %v724
    %v726 = vpop.f32.mrf.mxu0
    %v727 = vadd.f32 0.0, %v726
    %728 = vmatprep.mubr.f32.mxu0 0.0
    %729 = vmatmul.mubr.f32.gmra.mxu0 %v397
    %v730 = vpop.f32.mrf.mxu0
    %v731 = vadd.f32 0.0, %v730
    %v732 = vpop.f32.mrf.mxu0
    %v733 = vadd.f32 0.0, %v732
    %734 = vmatprep.mubr.f32.mxu0 0.0
    %735 = vmatmul.mubr.f32.gmra.mxu0 %v400
    %v736 = vpop.f32.mrf.mxu0
    %v737 = vadd.f32 0.0, %v736
    %v738 = vpop.f32.mrf.mxu0
    %v739 = vadd.f32 0.0, %v738
    %740 = vmatprep.mubr.f32.mxu0 0.0
    %741 = vmatmul.mubr.f32.gmra.mxu0 %v403
    %v742 = vpop.f32.mrf.mxu0
    %v743 = vadd.f32 0.0, %v742
    %v744 = vpop.f32.mrf.mxu0
    %v745 = vadd.f32 0.0, %v744
    %746 = vmatprep.mubr.f32.mxu0 0.0
    %747 = vmatmul.mubr.f32.gmra.mxu0 %v406
    %v748 = vpop.f32.mrf.mxu0
    %v749 = vadd.f32 0.0, %v748
    %v750 = vpop.f32.mrf.mxu0
    %v751 = vadd.f32 0.0, %v750
    %752 = vmatprep.mubr.f32.mxu0 0.0
    %753 = vmatmul.mubr.f32.gmra.mxu0 %v409
    %v754 = vpop.f32.mrf.mxu0
    %v755 = vadd.f32 0.0, %v754
    %v756 = vpop.f32.mrf.mxu0
    %v757 = vadd.f32 0.0, %v756
    %758 = vmatprep.mubr.f32.mxu0 0.0
    %759 = vmatmul.mubr.f32.gmra.mxu0 %v412
    %v760 = vpop.f32.mrf.mxu0
    %v761 = vadd.f32 0.0, %v760
    %v762 = vpop.f32.mrf.mxu0
    %v763 = vadd.f32 0.0, %v762
    %764 = vmatprep.mubr.f32.mxu0 0.0
    %765 = vmatmul.mubr.f32.gmra.mxu0 %v415
    %v766 = vpop.f32.mrf.mxu0
    %v767 = vadd.f32 0.0, %v766
    %v768 = vpop.f32.mrf.mxu0
    %v769 = vadd.f32 0.0, %v768
    %770 = vmatprep.mubr.f32.mxu0 0.0
    %771 = vmatmul.mubr.f32.gmra.mxu0 %v418
    %v772 = vpop.f32.mrf.mxu0
    %v773 = vadd.f32 0.0, %v772
    %v774 = vpop.f32.mrf.mxu0
    %v775 = vadd.f32 0.0, %v774
    %776 = vdwg.mxu0
    %777 = vmatprep.subr.mxu0 0.0
    %778 = vmatpush1.msra.mxu0 0.0
    %779 = vmatprep.subr.mxu0 0.0
    %780 = vmatpush1.msra.mxu0 0.0
    %781 = vmatprep.subr.mxu0 0.0
    %782 = vmatpush1.msra.mxu0 0.0
    %783 = vmatprep.subr.mxu0 0.0
    %784 = vmatpush1.msra.mxu0 0.0
    %785 = vmatprep.subr.mxu0 0.0
    %786 = vmatpush1.msra.mxu0 0.0
    %787 = vmatprep.subr.mxu0 0.0
    %788 = vmatpush1.msra.mxu0 0.0
    %789 = vmatprep.subr.mxu0 0.0
    %790 = vmatpush1.msra.mxu0 0.0
    %791 = vmatprep.subr.mxu0 0.0
    %792 = vmatpush1.msra.mxu0 0.0
    %793 = vmatprep.subr.mxu0 0.0
    %794 = vmatpush1.msra.mxu0 0.0
    %795 = vmatprep.subr.mxu0 0.0
    %796 = vmatpush1.msra.mxu0 0.0
    %797 = vmatprep.subr.mxu0 0.0
    %798 = vmatpush1.msra.mxu0 0.0
    %799 = vmatprep.subr.mxu0 0.0
    %800 = vmatpush1.msra.mxu0 0.0
    %801 = vmatprep.subr.mxu0 0.0
    %802 = vmatpush1.msra.mxu0 0.0
    %803 = vmatprep.subr.mxu0 0.0
    %804 = vmatpush1.msra.mxu0 0.0
    %805 = vmatprep.subr.mxu0 0.0
    %806 = vmatpush1.msra.mxu0 0.0
    %807 = vmatprep.subr.mxu0 %v382
    %808 = vmatpush1.msra.mxu0 %v381
    %809 = vmatprep.subr.mxu0 0.0
    %810 = vmatpush2.msra.mxu0 0.0
    %811 = vmatprep.subr.mxu0 0.0
    %812 = vmatpush2.msra.mxu0 0.0
    %813 = vmatprep.subr.mxu0 0.0
    %814 = vmatpush2.msra.mxu0 0.0
    %815 = vmatprep.subr.mxu0 0.0
    %816 = vmatpush2.msra.mxu0 0.0
    %817 = vmatprep.subr.mxu0 0.0
    %818 = vmatpush2.msra.mxu0 0.0
    %819 = vmatprep.subr.mxu0 0.0
    %820 = vmatpush2.msra.mxu0 0.0
    %821 = vmatprep.subr.mxu0 0.0
    %822 = vmatpush2.msra.mxu0 0.0
    %823 = vmatprep.subr.mxu0 0.0
    %824 = vmatpush2.msra.mxu0 0.0
    %825 = vmatprep.subr.mxu0 0.0
    %826 = vmatpush2.msra.mxu0 0.0
    %827 = vmatprep.subr.mxu0 0.0
    %828 = vmatpush2.msra.mxu0 0.0
    %829 = vmatprep.subr.mxu0 0.0
    %830 = vmatpush2.msra.mxu0 0.0
    %831 = vmatprep.subr.mxu0 0.0
    %832 = vmatpush2.msra.mxu0 0.0
    %833 = vmatprep.subr.mxu0 0.0
    %834 = vmatpush2.msra.mxu0 0.0
    %835 = vmatprep.subr.mxu0 0.0
    %836 = vmatpush2.msra.mxu0 0.0
    %837 = vmatprep.subr.mxu0 0.0
    %838 = vmatpush2.msra.mxu0 0.0
    %839 = vmatprep.subr.mxu0 0.0
    %840 = vmatpush2.msra.mxu0 0.0
    %841 = vmatprep.mubr.f32.mxu0 0.0
    %842 = vmatmul.mubr.f32.gmra.mxu0 %v394
    %v843 = vpop.f32.mrf.mxu0
    %v844 = vadd.f32 0.0, %v843
    %v845 = vpop.f32.mrf.mxu0
    %846 = vmatprep.mubr.f32.mxu0 0.0
    %847 = vmatmul.mubr.f32.gmra.mxu0 %v397
    %v848 = vpop.f32.mrf.mxu0
    %v849 = vadd.f32 0.0, %v848
    %v850 = vpop.f32.mrf.mxu0
    %851 = vmatprep.mubr.f32.mxu0 0.0
    %852 = vmatmul.mubr.f32.gmra.mxu0 %v400
    %v853 = vpop.f32.mrf.mxu0
    %v854 = vadd.f32 0.0, %v853
    %v855 = vpop.f32.mrf.mxu0
    %856 = vmatprep.mubr.f32.mxu0 0.0
    %857 = vmatmul.mubr.f32.gmra.mxu0 %v403
    %v858 = vpop.f32.mrf.mxu0
    %v859 = vadd.f32 0.0, %v858
    %v860 = vpop.f32.mrf.mxu0
    %v861 = vadd.f32 0.0, %v860
    %862 = vmatprep.mubr.f32.mxu0 0.0
    %863 = vmatmul.mubr.f32.gmra.mxu0 %v406
    %v864 = vpop.f32.mrf.mxu0
    %v865 = vadd.f32 0.0, %v864
    %v866 = vpop.f32.mrf.mxu0
    %v867 = vadd.f32 0.0, %v866
    %868 = vmatprep.mubr.f32.mxu0 0.0
    %869 = vmatmul.mubr.f32.gmra.mxu0 %v409
    %v870 = vpop.f32.mrf.mxu0
    %v871 = vadd.f32 0.0, %v870
    %v872 = vpop.f32.mrf.mxu0
    %v873 = vadd.f32 0.0, %v872
    %874 = vmatprep.mubr.f32.mxu0 0.0
    %875 = vmatmul.mubr.f32.gmra.mxu0 %v412
    %v876 = vpop.f32.mrf.mxu0
    %v877 = vadd.f32 0.0, %v876
    %v878 = vpop.f32.mrf.mxu0
    %v879 = vadd.f32 0.0, %v878
    %880 = vmatprep.mubr.f32.mxu0 0.0
    %881 = vmatmul.mubr.f32.gmra.mxu0 %v415
    %v882 = vpop.f32.mrf.mxu0
    %v883 = vadd.f32 0.0, %v882
    %v884 = vpop.f32.mrf.mxu0
    %v885 = vadd.f32 0.0, %v884
    %886 = vmatprep.mubr.f32.mxu0 0.0
    %887 = vmatmul.mubr.f32.gmra.mxu0 %v418
    %v888 = vpop.f32.mrf.mxu0
    %v889 = vadd.f32 0.0, %v888
    %v890 = vpop.f32.mrf.mxu0
    %v891 = vadd.f32 0.0, %v890
    %892 = vdwg.mxu0
    %900 = vrot.lane.b32.xlu0 %v493, 127
    %v901 = vpop.permute.xlu0 %900
    %902 = vrot.lane.b32.xlu0 %v495, 127
    %v903 = vpop.permute.xlu0 %902
    %904 = vrot.lane.b32.xlu0 %v612, 127
    %v905 = vpop.permute.xlu0 %904
    %906 = vrot.lane.b32.xlu0 %v614, 127
    %v907 = vpop.permute.xlu0 %906
    %908 = vrot.lane.b32.xlu0 %v731, 127
    %v909 = vpop.permute.xlu0 %908
    %910 = vrot.lane.b32.xlu0 %v733, 127
    %v911 = vpop.permute.xlu0 %910
    %912 = vrot.lane.b32.xlu0 %v849, 127
    %v913 = vpop.permute.xlu0 %912
    %vm914 = vcmask 1039360
    %v915 = vsel %vm914, %v901, %v903
    %v916 = vsel %vm914, %v903, %v905
    %v917 = vsel %vm914, %v905, %v907
    %v918 = vsel %vm914, %v907, %v909
    %v919 = vsel %vm914, %v909, %v911
    %v920 = vsel %vm914, %v911, %v913
    %v928 = vadd.f32 %v487, %v915
    %v929 = vadd.f32 %v489, %v916
    %v930 = vadd.f32 %v606, %v917
    %v931 = vadd.f32 %v608, %v918
    %v932 = vadd.f32 %v725, %v919
    %v933 = vadd.f32 %v727, %v920
    %v934 = vadd.f32 %v844, %v913
    %942 = vrot.lane.b32.xlu0 %v499, 126
    %v943 = vpop.permute.xlu0 %942
    %944 = vrot.lane.b32.xlu0 %v501, 126
    %v945 = vpop.permute.xlu0 %944
    %946 = vrot.lane.b32.xlu0 %v618, 126
    %v947 = vpop.permute.xlu0 %946
    %948 = vrot.lane.b32.xlu0 %v620, 126
    %v949 = vpop.permute.xlu0 %948
    %950 = vrot.lane.b32.xlu0 %v737, 126
    %v951 = vpop.permute.xlu0 %950
    %952 = vrot.lane.b32.xlu0 %v739, 126
    %v953 = vpop.permute.xlu0 %952
    %954 = vrot.lane.b32.xlu0 %v854, 126
    %v955 = vpop.permute.xlu0 %954
    %vm956 = vcmask 1031168
    %v957 = vsel %vm956, %v943, %v945
    %v958 = vsel %vm956, %v945, %v947
    %v959 = vsel %vm956, %v947, %v949
    %v960 = vsel %vm956, %v949, %v951
    %v961 = vsel %vm956, %v951, %v953
    %v962 = vsel %vm956, %v953, %v955
    %v970 = vadd.f32 %v928, %v957
    %v971 = vadd.f32 %v929, %v958
    %v972 = vadd.f32 %v930, %v959
    %v973 = vadd.f32 %v931, %v960
    %v974 = vadd.f32 %v932, %v961
    %v975 = vadd.f32 %v933, %v962
    %v976 = vadd.f32 %v934, %v955
    %985 = vrot.lane.b32.xlu0 %v505, 107
    %v986 = vpop.permute.xlu0 %985
    %987 = vrot.lane.b32.xlu0 %v507, 107
    %v988 = vpop.permute.xlu0 %987
    %989 = vrot.lane.b32.xlu0 %v624, 107
    %v990 = vpop.permute.xlu0 %989
    %991 = vrot.lane.b32.xlu0 %v626, 107
    %v992 = vpop.permute.xlu0 %991
    %993 = vrot.lane.b32.xlu0 %v743, 107
    %v994 = vpop.permute.xlu0 %993
    %995 = vrot.lane.b32.xlu0 %v745, 107
    %v996 = vpop.permute.xlu0 %995
    %997 = vrot.lane.b32.xlu0 %v859, 107
    %v998 = vpop.permute.xlu0 %997
    %999 = vrot.lane.b32.xlu0 %v861, 107
    %v1000 = vpop.permute.xlu0 %999
    %vm1001 = vcmask 875520
    %v1002 = vsel %vm1001, %v986, %v988
    %v1003 = vsel %vm1001, %v988, %v990
    %v1004 = vsel %vm1001, %v990, %v992
    %v1005 = vsel %vm1001, %v992, %v994
    %v1006 = vsel %vm1001, %v994, %v996
    %v1007 = vsel %vm1001, %v996, %v998
    %v1008 = vsel %vm1001, %v998, %v1000
    %v1016 = vadd.f32 %v970, %v1002
    %v1017 = vadd.f32 %v971, %v1003
    %v1018 = vadd.f32 %v972, %v1004
    %v1019 = vadd.f32 %v973, %v1005
    %v1020 = vadd.f32 %v974, %v1006
    %v1021 = vadd.f32 %v975, %v1007
    %v1022 = vadd.f32 %v976, %v1008
    %1031 = vrot.lane.b32.xlu0 %v511, 106
    %v1032 = vpop.permute.xlu0 %1031
    %1033 = vrot.lane.b32.xlu0 %v513, 106
    %v1034 = vpop.permute.xlu0 %1033
    %1035 = vrot.lane.b32.xlu0 %v630, 106
    %v1036 = vpop.permute.xlu0 %1035
    %1037 = vrot.lane.b32.xlu0 %v632, 106
    %v1038 = vpop.permute.xlu0 %1037
    %1039 = vrot.lane.b32.xlu0 %v749, 106
    %v1040 = vpop.permute.xlu0 %1039
    %1041 = vrot.lane.b32.xlu0 %v751, 106
    %v1042 = vpop.permute.xlu0 %1041
    %1043 = vrot.lane.b32.xlu0 %v865, 106
    %v1044 = vpop.permute.xlu0 %1043
    %1045 = vrot.lane.b32.xlu0 %v867, 106
    %v1046 = vpop.permute.xlu0 %1045
    %vm1047 = vcmask 867328
    %v1048 = vsel %vm1047, %v1032, %v1034
    %v1049 = vsel %vm1047, %v1034, %v1036
    %v1050 = vsel %vm1047, %v1036, %v1038
    %v1051 = vsel %vm1047, %v1038, %v1040
    %v1052 = vsel %vm1047, %v1040, %v1042
    %v1053 = vsel %vm1047, %v1042, %v1044
    %v1054 = vsel %vm1047, %v1044, %v1046
    %v1062 = vadd.f32 %v1016, %v1048
    %v1063 = vadd.f32 %v1017, %v1049
    %v1064 = vadd.f32 %v1018, %v1050
    %v1065 = vadd.f32 %v1019, %v1051
    %v1066 = vadd.f32 %v1020, %v1052
    %v1067 = vadd.f32 %v1021, %v1053
    %v1068 = vadd.f32 %v1022, %v1054
    %1077 = vrot.lane.b32.xlu0 %v517, 105
    %v1078 = vpop.permute.xlu0 %1077
    %1079 = vrot.lane.b32.xlu0 %v519, 105
    %v1080 = vpop.permute.xlu0 %1079
    %1081 = vrot.lane.b32.xlu0 %v636, 105
    %v1082 = vpop.permute.xlu0 %1081
    %1083 = vrot.lane.b32.xlu0 %v638, 105
    %v1084 = vpop.permute.xlu0 %1083
    %1085 = vrot.lane.b32.xlu0 %v755, 105
    %v1086 = vpop.permute.xlu0 %1085
    %1087 = vrot.lane.b32.xlu0 %v757, 105
    %v1088 = vpop.permute.xlu0 %1087
    %1089 = vrot.lane.b32.xlu0 %v871, 105
    %v1090 = vpop.permute.xlu0 %1089
    %1091 = vrot.lane.b32.xlu0 %v873, 105
    %v1092 = vpop.permute.xlu0 %1091
    %vm1093 = vcmask 859136
    %v1094 = vsel %vm1093, %v1078, %v1080
    %v1095 = vsel %vm1093, %v1080, %v1082
    %v1096 = vsel %vm1093, %v1082, %v1084
    %v1097 = vsel %vm1093, %v1084, %v1086
    %v1098 = vsel %vm1093, %v1086, %v1088
    %v1099 = vsel %vm1093, %v1088, %v1090
    %v1100 = vsel %vm1093, %v1090, %v1092
    %v1108 = vadd.f32 %v1062, %v1094
    %v1109 = vadd.f32 %v1063, %v1095
    %v1110 = vadd.f32 %v1064, %v1096
    %v1111 = vadd.f32 %v1065, %v1097
    %v1112 = vadd.f32 %v1066, %v1098
    %v1113 = vadd.f32 %v1067, %v1099
    %v1114 = vadd.f32 %v1068, %v1100
    %1123 = vrot.lane.b32.xlu0 %v523, 86
    %v1124 = vpop.permute.xlu0 %1123
    %1125 = vrot.lane.b32.xlu0 %v525, 86
    %v1126 = vpop.permute.xlu0 %1125
    %1127 = vrot.lane.b32.xlu0 %v642, 86
    %v1128 = vpop.permute.xlu0 %1127
    %1129 = vrot.lane.b32.xlu0 %v644, 86
    %v1130 = vpop.permute.xlu0 %1129
    %1131 = vrot.lane.b32.xlu0 %v761, 86
    %v1132 = vpop.permute.xlu0 %1131
    %1133 = vrot.lane.b32.xlu0 %v763, 86
    %v1134 = vpop.permute.xlu0 %1133
    %1135 = vrot.lane.b32.xlu0 %v877, 86
    %v1136 = vpop.permute.xlu0 %1135
    %1137 = vrot.lane.b32.xlu0 %v879, 86
    %v1138 = vpop.permute.xlu0 %1137
    %vm1139 = vcmask 703488
    %v1140 = vsel %vm1139, %v1124, %v1126
    %v1141 = vsel %vm1139, %v1126, %v1128
    %v1142 = vsel %vm1139, %v1128, %v1130
    %v1143 = vsel %vm1139, %v1130, %v1132
    %v1144 = vsel %vm1139, %v1132, %v1134
    %v1145 = vsel %vm1139, %v1134, %v1136
    %v1146 = vsel %vm1139, %v1136, %v1138
    %v1154 = vadd.f32 %v1108, %v1140
    %v1155 = vadd.f32 %v1109, %v1141
    %v1156 = vadd.f32 %v1110, %v1142
    %v1157 = vadd.f32 %v1111, %v1143
    %v1158 = vadd.f32 %v1112, %v1144
    %v1159 = vadd.f32 %v1113, %v1145
    %v1160 = vadd.f32 %v1114, %v1146
    %1169 = vrot.lane.b32.xlu0 %v529, 85
    %v1170 = vpop.permute.xlu0 %1169
    %1171 = vrot.lane.b32.xlu0 %v531, 85
    %v1172 = vpop.permute.xlu0 %1171
    %1173 = vrot.lane.b32.xlu0 %v648, 85
    %v1174 = vpop.permute.xlu0 %1173
    %1175 = vrot.lane.b32.xlu0 %v650, 85
    %v1176 = vpop.permute.xlu0 %1175
    %1177 = vrot.lane.b32.xlu0 %v767, 85
    %v1178 = vpop.permute.xlu0 %1177
    %1179 = vrot.lane.b32.xlu0 %v769, 85
    %v1180 = vpop.permute.xlu0 %1179
    %1181 = vrot.lane.b32.xlu0 %v883, 85
    %v1182 = vpop.permute.xlu0 %1181
    %1183 = vrot.lane.b32.xlu0 %v885, 85
    %v1184 = vpop.permute.xlu0 %1183
    %vm1185 = vcmask 695296
    %v1186 = vsel %vm1185, %v1170, %v1172
    %v1187 = vsel %vm1185, %v1172, %v1174
    %v1188 = vsel %vm1185, %v1174, %v1176
    %v1189 = vsel %vm1185, %v1176, %v1178
    %v1190 = vsel %vm1185, %v1178, %v1180
    %v1191 = vsel %vm1185, %v1180, %v1182
    %v1192 = vsel %vm1185, %v1182, %v1184
    %v1200 = vadd.f32 %v1154, %v1186
    %v1201 = vadd.f32 %v1155, %v1187
    %v1202 = vadd.f32 %v1156, %v1188
    %v1203 = vadd.f32 %v1157, %v1189
    %v1204 = vadd.f32 %v1158, %v1190
    %v1205 = vadd.f32 %v1159, %v1191
    %v1206 = vadd.f32 %v1160, %v1192
    %1215 = vrot.lane.b32.xlu0 %v535, 84
    %v1216 = vpop.permute.xlu0 %1215
    %1217 = vrot.lane.b32.xlu0 %v537, 84
    %v1218 = vpop.permute.xlu0 %1217
    %1219 = vrot.lane.b32.xlu0 %v654, 84
    %v1220 = vpop.permute.xlu0 %1219
    %1221 = vrot.lane.b32.xlu0 %v656, 84
    %v1222 = vpop.permute.xlu0 %1221
    %1223 = vrot.lane.b32.xlu0 %v773, 84
    %v1224 = vpop.permute.xlu0 %1223
    %1225 = vrot.lane.b32.xlu0 %v775, 84
    %v1226 = vpop.permute.xlu0 %1225
    %1227 = vrot.lane.b32.xlu0 %v889, 84
    %v1228 = vpop.permute.xlu0 %1227
    %1229 = vrot.lane.b32.xlu0 %v891, 84
    %v1230 = vpop.permute.xlu0 %1229
    %vm1231 = vcmask 687104
    %v1232 = vsel %vm1231, %v1216, %v1218
    %v1233 = vsel %vm1231, %v1218, %v1220
    %v1234 = vsel %vm1231, %v1220, %v1222
    %v1235 = vsel %vm1231, %v1222, %v1224
    %v1236 = vsel %vm1231, %v1224, %v1226
    %v1237 = vsel %vm1231, %v1226, %v1228
    %v1238 = vsel %vm1231, %v1228, %v1230
    %v1246 = vadd.f32 %v1200, %v1232
    %v1247 = vadd.f32 %v1201, %v1233
    %v1248 = vadd.f32 %v1202, %v1234
    %v1249 = vadd.f32 %v1203, %v1235
    %v1250 = vadd.f32 %v1204, %v1236
    %v1251 = vadd.f32 %v1205, %v1237
    %v1252 = vadd.f32 %v1206, %v1238
    %v1253 = vld [vmem:[%s4] sm:$0xff]
    %v1254 = vld [vmem:[%s4 + $0x8] sm:$0xff]
    %v1255 = vld [vmem:[%s4 + $0x10] sm:$0xff]
    %v1256 = vld [vmem:[%s4 + $0x18] sm:$0xff]
    %v1257 = vld [vmem:[%s4 + $0x20] sm:$0xff]
    %v1258 = vld [vmem:[%s4 + $0x28] sm:$0xff]
    %v1259 = vld [vmem:[%s4 + $0x30] sm:$0xff]
    %v1260 = vld [vmem:[%s4 + $0x38] sm:$0xff]
    %v1261 = vld [vmem:[%s4 + $0x40] sm:$0xff]
    %v1262 = vld [vmem:[%s4 + $0x48] sm:$0xff]
    %v1263 = vld [vmem:[%s4 + $0x50] sm:$0xff]
    %v1264 = vld [vmem:[%s4 + $0x58] sm:$0xff]
    %v1265 = vld [vmem:[%s4 + $0x60] sm:$0xff]
    %v1266 = vld [vmem:[%s4 + $0x68] sm:$0xff]
    %v1267 = vld [vmem:[%s4 + $0x70] sm:$0xff]
    %v1268 = vld [vmem:[%s4 + $0x78] sm:$0xff]
    %v1269 = vld [vmem:[%s4 + $0x80] sm:$0xff]
    %v1270 = vld [vmem:[%s4 + $0x88] sm:$0xff]
    %v1271 = vld [vmem:[%s4 + $0x90] sm:$0xff]
    %v1272 = vld [vmem:[%s4 + $0x98] sm:$0xff]
    %v1273 = vld [vmem:[%s4 + $0xa0] sm:$0xff]
    %v1274 = vld [vmem:[%s4 + $0xa8] sm:$0xff]
    %v1275 = vld [vmem:[%s4 + $0xb0] sm:$0xff]
    %v1276 = vld [vmem:[%s4 + $0xb8] sm:$0xff]
    %v1277 = vld [vmem:[%s4 + $0xc0] sm:$0xff]
    %v1278 = vld [vmem:[%s4 + $0xc8] sm:$0xff]
    %v1279 = vld [vmem:[%s4 + $0xd0] sm:$0xff]
    %v1280 = vld [vmem:[%s4 + $0xd8] sm:$0xff]
    %v1281 = vld [vmem:[%s4 + $0xe0] sm:$0xff]
    %v1282 = vld [vmem:[%s4 + $0xe8] sm:$0xff]
    %v1283 = vld [vmem:[%s4 + $0xf0] sm:$0xff]
    %v1284 = vld [vmem:[%s4 + $0xf8] sm:$0xff]
    %v1285 = vld [vmem:[%s4 + $0x100] sm:$0xff]
    %v1286 = vld [vmem:[%s4 + $0x108] sm:$0xff]
    %v1287 = vld [vmem:[%s4 + $0x110] sm:$0xff]
    %v1288 = vld [vmem:[%s4 + $0x118] sm:$0xff]
    %v1289 = vld [vmem:[%s4 + $0x120] sm:$0xff]
    %v1290 = vld [vmem:[%s4 + $0x128] sm:$0xff]
    %v1291 = vld [vmem:[%s4 + $0x130] sm:$0xff]
    %v1292 = vld [vmem:[%s4 + $0x138] sm:$0xff]
    %v1293 = vld [vmem:[%s4 + $0x140] sm:$0xff]
    %v1294 = vld [vmem:[%s4 + $0x148] sm:$0xff]
    %v1295 = vld [vmem:[%s4 + $0x150] sm:$0xff]
    %v1296 = vld [vmem:[%s4 + $0x158] sm:$0xff]
    %v1297 = vld [vmem:[%s4 + $0x160] sm:$0xff]
    %v1298 = vld [vmem:[%s4 + $0x168] sm:$0xff]
    %v1299 = vld [vmem:[%s4 + $0x170] sm:$0xff]
    %v1300 = vld [vmem:[%s4 + $0x178] sm:$0xff]
    %v1301 = vld [vmem:[%s4 + $0x180] sm:$0xff]
    %v1302 = vld [vmem:[%s4 + $0x188] sm:$0xff]
    %v1303 = vld [vmem:[%s4 + $0x190] sm:$0xff]
    %v1304 = vld [vmem:[%s4 + $0x198] sm:$0xff]
    %v1305 = vld [vmem:[%s4 + $0x1a0] sm:$0xff]
    %v1306 = vld [vmem:[%s4 + $0x1a8] sm:$0xff]
    %v1307 = vld [vmem:[%s4 + $0x1b0] sm:$0xff]
    %v1308 = vld [vmem:[%s4 + $0x1b8] sm:$0xff]
    %v1309 = vld [vmem:[%s4 + $0x1c0] sm:$0xff]
    %v1310 = vld [vmem:[%s4 + $0x1c8] sm:$0xff]
    %v1311 = vld [vmem:[%s4 + $0x1d0] sm:$0xff]
    %v1312 = vld [vmem:[%s4 + $0x1d8] sm:$0xff]
    %v1313 = vld [vmem:[%s4 + $0x1e0] sm:$0xff]
    %v1314 = vld [vmem:[%s4 + $0x1e8] sm:$0xff]
    %v1315 = vld [vmem:[%s4 + $0x1f0] sm:$0xff]
    %v1316 = vld [vmem:[%s4 + $0x1f8] sm:$0xff]
    %v1317 = vld [vmem:[%s4 + $0x200] sm:$0xff]
    %v1318 = vld [vmem:[%s4 + $0x208] sm:$0xff]
    %v1319 = vld [vmem:[%s4 + $0x210] sm:$0xff]
    %v1320 = vld [vmem:[%s4 + $0x218] sm:$0xff]
    %v1321 = vld [vmem:[%s4 + $0x220] sm:$0xff]
    %v1322 = vld [vmem:[%s4 + $0x228] sm:$0xff]
    %v1323 = vld [vmem:[%s4 + $0x230] sm:$0xff]
    %v1324 = vld [vmem:[%s4 + $0x238] sm:$0xff]
    %v1325 = vld [vmem:[%s4 + $0x240] sm:$0xff]
    %v1326 = vld [vmem:[%s4 + $0x248] sm:$0xff]
    %v1327 = vld [vmem:[%s4 + $0x250] sm:$0xff]
    %v1328 = vld [vmem:[%s4 + $0x258] sm:$0xff]
    %v1329 = vld [vmem:[%s4 + $0x260] sm:$0xff]
    %v1330 = vld [vmem:[%s4 + $0x268] sm:$0xff]
    %v1331 = vld [vmem:[%s4 + $0x270] sm:$0xff]
    %v1332 = vld [vmem:[%s4 + $0x278] sm:$0xff]
    %v1333 = vld [vmem:[%s4 + $0x280] sm:$0xff]
    %v1334 = vld [vmem:[%s4 + $0x288] sm:$0xff]
    %v1335 = vld [vmem:[%s4 + $0x290] sm:$0xff]
    %v1336 = vld [vmem:[%s4 + $0x298] sm:$0xff]
    %v1337 = vld [vmem:[%s4 + $0x2a0] sm:$0xff]
    %v1338 = vld [vmem:[%s4 + $0x2a8] sm:$0xff]
    %v1339 = vld [vmem:[%s4 + $0x2b0] sm:$0xff]
    %v1340 = vld [vmem:[%s4 + $0x2b8] sm:$0xff]
    %v1341 = vld [vmem:[%s4 + $0x2c0] sm:$0xff]
    %v1342 = vld [vmem:[%s4 + $0x2c8] sm:$0xff]
    %v1343 = vld [vmem:[%s4 + $0x2d0] sm:$0xff]
    %v1344 = vld [vmem:[%s4 + $0x2d8] sm:$0xff]
    %v1345 = vld [vmem:[%s4 + $0x2e0] sm:$0xff]
    %v1346 = vld [vmem:[%s4 + $0x2e8] sm:$0xff]
    %v1347 = vld [vmem:[%s4 + $0x2f0] sm:$0xff]
    %v1348 = vld [vmem:[%s4 + $0x2f8] sm:$0xff]
    %v1349 = vld [vmem:[%s4 + $0x300] sm:$0xff]
    %v1350 = vld [vmem:[%s4 + $0x308] sm:$0xff]
    %v1351 = vld [vmem:[%s4 + $0x310] sm:$0xff]
    %v1352 = vld [vmem:[%s4 + $0x318] sm:$0xff]
    %v1353 = vld [vmem:[%s4 + $0x320] sm:$0xff]
    %v1354 = vld [vmem:[%s4 + $0x328] sm:$0xff]
    %v1355 = vld [vmem:[%s4 + $0x330] sm:$0xff]
    %v1356 = vld [vmem:[%s4 + $0x338] sm:$0xff]
    %v1357 = vld [vmem:[%s4 + $0x340] sm:$0xff]
    %v1358 = vld [vmem:[%s4 + $0x348] sm:$0xff]
    %v1359 = vld [vmem:[%s4 + $0x350] sm:$0xff]
    %v1360 = vld [vmem:[%s4 + $0x358] sm:$0xff]
    %v1361 = vld [vmem:[%s4 + $0x360] sm:$0xff]
    %v1362 = vld [vmem:[%s4 + $0x368] sm:$0xff]
    %v1363 = vld [vmem:[%s4 + $0x370] sm:$0xff]
    %v1364 = vld [vmem:[%s4 + $0x378] sm:$0xff]
    %v1365 = vld [vmem:[%s4 + $0x380] sm:$0xff]
    %v1366 = vld [vmem:[%s4 + $0x388] sm:$0xff]
    %v1367 = vld [vmem:[%s4 + $0x390] sm:$0xff]
    %v1368 = vld [vmem:[%s4 + $0x398] sm:$0xff]
    %v1369 = vld [vmem:[%s4 + $0x3a0] sm:$0xff]
    %v1370 = vld [vmem:[%s4 + $0x3a8] sm:$0xff]
    %v1371 = vld [vmem:[%s4 + $0x3b0] sm:$0xff]
    %v1372 = vld [vmem:[%s4 + $0x3b8] sm:$0xff]
    %v1373 = vld [vmem:[%s4 + $0x3c0] sm:$0xff]
    %v1374 = vld [vmem:[%s4 + $0x3c8] sm:$0xff]
    %v1375 = vld [vmem:[%s4 + $0x3d0] sm:$0xff]
    %v1376 = vld [vmem:[%s4 + $0x3d8] sm:$0xff]
    %v1377 = vld [vmem:[%s4 + $0x3e0] sm:$0xff]
    %v1378 = vld [vmem:[%s4 + $0x3e8] sm:$0xff]
    %v1379 = vld [vmem:[%s4 + $0x3f0] sm:$0xff]
    %v1380 = vld [vmem:[%s4 + $0x3f8] sm:$0xff]
    %v1381 = vld [vmem:[%s4 + $0x400] sm:$0xff]
    %v1382 = vld [vmem:[%s4 + $0x408] sm:$0xff]
    %v1383 = vld [vmem:[%s4 + $0x410] sm:$0xff]
    %v1384 = vld [vmem:[%s4 + $0x418] sm:$0xff]
    %v1385 = vld [vmem:[%s4 + $0x420] sm:$0xff]
    %v1386 = vld [vmem:[%s4 + $0x428] sm:$0xff]
    %v1387 = vld [vmem:[%s4 + $0x430] sm:$0xff]
    %v1388 = vld [vmem:[%s4 + $0x438] sm:$0xff]
    %v1389 = vld [vmem:[%s4 + $0x440] sm:$0xff]
    %v1390 = vld [vmem:[%s4 + $0x448] sm:$0xff]
    %v1391 = vld [vmem:[%s4 + $0x450] sm:$0xff]
    %v1392 = vld [vmem:[%s4 + $0x458] sm:$0xff]
    %v1393 = vld [vmem:[%s4 + $0x460] sm:$0xff]
    %v1394 = vld [vmem:[%s4 + $0x468] sm:$0xff]
    %v1395 = vld [vmem:[%s4 + $0x470] sm:$0xff]
    %v1396 = vld [vmem:[%s4 + $0x478] sm:$0xff]
    %v1397 = vld [vmem:[%s4 + $0x480] sm:$0xff]
    %v1398 = vld [vmem:[%s4 + $0x488] sm:$0xff]
    %v1399 = vld [vmem:[%s4 + $0x490] sm:$0xff]
    %v1400 = vld [vmem:[%s4 + $0x498] sm:$0xff]
    %v1401 = vld [vmem:[%s4 + $0x4a0] sm:$0xff]
    %v1402 = vld [vmem:[%s4 + $0x4a8] sm:$0xff]
    %v1403 = vld [vmem:[%s4 + $0x4b0] sm:$0xff]
    %v1404 = vld [vmem:[%s4 + $0x4b8] sm:$0xff]
    %v1405 = vld [vmem:[%s4 + $0x4c0] sm:$0xff]
    %v1406 = vld [vmem:[%s4 + $0x4c8] sm:$0xff]
    %v1407 = vld [vmem:[%s4 + $0x4d0] sm:$0xff]
    %v1408 = vld [vmem:[%s4 + $0x4d8] sm:$0xff]
    %v1409 = vld [vmem:[%s4 + $0x4e0] sm:$0xff]
    %v1410 = vld [vmem:[%s4 + $0x4e8] sm:$0xff]
    %v1411 = vld [vmem:[%s4 + $0x4f0] sm:$0xff]
    %v1412 = vld [vmem:[%s4 + $0x4f8] sm:$0xff]
    %v1413 = vld [vmem:[%s4 + $0x500] sm:$0xff]
    %v1414 = vld [vmem:[%s4 + $0x508] sm:$0xff]
    %v1415 = vld [vmem:[%s4 + $0x510] sm:$0xff]
    %v1416 = vld [vmem:[%s4 + $0x518] sm:$0xff]
    %v1417 = vld [vmem:[%s4 + $0x520] sm:$0xff]
    %v1418 = vld [vmem:[%s4 + $0x528] sm:$0xff]
    %v1419 = vld [vmem:[%s4 + $0x530] sm:$0xff]
    %v1420 = vld [vmem:[%s4 + $0x538] sm:$0xff]
    %v1421 = vld [vmem:[%s4 + $0x540] sm:$0xff]
    %v1422 = vld [vmem:[%s4 + $0x548] sm:$0xff]
    %v1423 = vld [vmem:[%s4 + $0x550] sm:$0xff]
    %v1424 = vld [vmem:[%s4 + $0x558] sm:$0xff]
    %v1425 = vld [vmem:[%s4 + $0x560] sm:$0xff]
    %v1426 = vld [vmem:[%s4 + $0x568] sm:$0xff]
    %v1427 = vld [vmem:[%s4 + $0x570] sm:$0xff]
    %v1428 = vld [vmem:[%s4 + $0x578] sm:$0xff]
    %v1429 = vld [vmem:[%s4 + $0x580] sm:$0xff]
    %v1430 = vld [vmem:[%s4 + $0x588] sm:$0xff]
    %v1431 = vld [vmem:[%s4 + $0x590] sm:$0xff]
    %v1432 = vld [vmem:[%s4 + $0x598] sm:$0xff]
    %v1433 = vld [vmem:[%s4 + $0x5a0] sm:$0xff]
    %v1434 = vld [vmem:[%s4 + $0x5a8] sm:$0xff]
    %v1435 = vld [vmem:[%s4 + $0x5b0] sm:$0xff]
    %v1436 = vld [vmem:[%s4 + $0x5b8] sm:$0xff]
    %v1437 = vld [vmem:[%s4 + $0x5c0] sm:$0xff]
    %v1438 = vld [vmem:[%s4 + $0x5c8] sm:$0xff]
    %v1439 = vld [vmem:[%s4 + $0x5d0] sm:$0xff]
    %v1440 = vld [vmem:[%s4 + $0x5d8] sm:$0xff]
    %v1441 = vld [vmem:[%s4 + $0x5e0] sm:$0xff]
    %v1442 = vld [vmem:[%s4 + $0x5e8] sm:$0xff]
    %v1443 = vld [vmem:[%s4 + $0x5f0] sm:$0xff]
    %v1444 = vld [vmem:[%s4 + $0x5f8] sm:$0xff]
    %v1445 = vld [vmem:[%s4 + $0x600] sm:$0xff]
    %v1446 = vld [vmem:[%s4 + $0x608] sm:$0xff]
    %v1447 = vld [vmem:[%s4 + $0x610] sm:$0xff]
    %v1448 = vld [vmem:[%s4 + $0x618] sm:$0xff]
    %v1449 = vld [vmem:[%s4 + $0x620] sm:$0xff]
    %v1450 = vld [vmem:[%s4 + $0x628] sm:$0xff]
    %v1451 = vld [vmem:[%s4 + $0x630] sm:$0xff]
    %v1452 = vld [vmem:[%s4 + $0x638] sm:$0xff]
    %v1453 = vld [vmem:[%s4 + $0x640] sm:$0xff]
    %v1454 = vld [vmem:[%s4 + $0x648] sm:$0xff]
    %v1455 = vld [vmem:[%s4 + $0x650] sm:$0xff]
    %v1456 = vld [vmem:[%s4 + $0x658] sm:$0xff]
    %v1457 = vld [vmem:[%s4 + $0x660] sm:$0xff]
    %v1458 = vld [vmem:[%s4 + $0x668] sm:$0xff]
    %v1459 = vld [vmem:[%s4 + $0x670] sm:$0xff]
    %v1460 = vld [vmem:[%s4 + $0x678] sm:$0xff]
    %v1461 = vld [vmem:[%s4 + $0x680] sm:$0xff]
    %v1462 = vld [vmem:[%s4 + $0x688] sm:$0xff]
    %v1463 = vld [vmem:[%s4 + $0x690] sm:$0xff]
    %v1464 = vld [vmem:[%s4 + $0x698] sm:$0xff]
    %v1465 = vld [vmem:[%s4 + $0x6a0] sm:$0xff]
    %v1466 = vld [vmem:[%s4 + $0x6a8] sm:$0xff]
    %v1467 = vld [vmem:[%s4 + $0x6b0] sm:$0xff]
    %v1468 = vld [vmem:[%s4 + $0x6b8] sm:$0xff]
    %v1469 = vld [vmem:[%s4 + $0x6c0] sm:$0xff]
    %v1470 = vld [vmem:[%s4 + $0x6c8] sm:$0xff]
    %v1471 = vld [vmem:[%s4 + $0x6d0] sm:$0xff]
    %v1472 = vld [vmem:[%s4 + $0x6d8] sm:$0xff]
    %v1473 = vld [vmem:[%s4 + $0x6e0] sm:$0x3]
    %v1474 = vld [vmem:[%s4 + $0x6e8] sm:$0x3]
    %vm1475 = vcmask 932864
    %v1477 = vsel %vm1475, %v1252, 0
    %v1480 = vsel %vm66, %v1473, 0
    %v1483 = vsel %vm66, %v1474, 0
    %1485 = vmatprep.subr.mxu0 %v1284
    %1486 = vmatpush1.msra.mxu0 %v1283
    %1487 = vmatprep.subr.mxu0 %v1282
    %1488 = vmatpush1.msra.mxu0 %v1281
    %1489 = vmatprep.subr.mxu0 %v1280
    %1490 = vmatpush1.msra.mxu0 %v1279
    %1491 = vmatprep.subr.mxu0 %v1278
    %1492 = vmatpush1.msra.mxu0 %v1277
    %1493 = vmatprep.subr.mxu0 %v1276
    %1494 = vmatpush1.msra.mxu0 %v1275
    %1495 = vmatprep.subr.mxu0 %v1274
    %1496 = vmatpush1.msra.mxu0 %v1273
    %1497 = vmatprep.subr.mxu0 %v1272
    %1498 = vmatpush1.msra.mxu0 %v1271
    %1499 = vmatprep.subr.mxu0 %v1270
    %1500 = vmatpush1.msra.mxu0 %v1269
    %1501 = vmatprep.subr.mxu0 %v1268
    %1502 = vmatpush1.msra.mxu0 %v1267
    %1503 = vmatprep.subr.mxu0 %v1266
    %1504 = vmatpush1.msra.mxu0 %v1265
    %1505 = vmatprep.subr.mxu0 %v1264
    %1506 = vmatpush1.msra.mxu0 %v1263
    %1507 = vmatprep.subr.mxu0 %v1262
    %1508 = vmatpush1.msra.mxu0 %v1261
    %1509 = vmatprep.subr.mxu0 %v1260
    %1510 = vmatpush1.msra.mxu0 %v1259
    %1511 = vmatprep.subr.mxu0 %v1258
    %1512 = vmatpush1.msra.mxu0 %v1257
    %1513 = vmatprep.subr.mxu0 %v1256
    %1514 = vmatpush1.msra.mxu0 %v1255
    %1515 = vmatprep.subr.mxu0 %v1254
    %1516 = vmatpush1.msra.mxu0 %v1253
    %1517 = vmatprep.subr.mxu0 %v1316
    %1518 = vmatpush2.msra.mxu0 %v1315
    %1519 = vmatprep.subr.mxu0 %v1314
    %1520 = vmatpush2.msra.mxu0 %v1313
    %1521 = vmatprep.subr.mxu0 %v1312
    %1522 = vmatpush2.msra.mxu0 %v1311
    %1523 = vmatprep.subr.mxu0 %v1310
    %1524 = vmatpush2.msra.mxu0 %v1309
    %1525 = vmatprep.subr.mxu0 %v1308
    %1526 = vmatpush2.msra.mxu0 %v1307
    %1527 = vmatprep.subr.mxu0 %v1306
    %1528 = vmatpush2.msra.mxu0 %v1305
    %1529 = vmatprep.subr.mxu0 %v1304
    %1530 = vmatpush2.msra.mxu0 %v1303
    %1531 = vmatprep.subr.mxu0 %v1302
    %1532 = vmatpush2.msra.mxu0 %v1301
    %1533 = vmatprep.subr.mxu0 %v1300
    %1534 = vmatpush2.msra.mxu0 %v1299
    %1535 = vmatprep.subr.mxu0 %v1298
    %1536 = vmatpush2.msra.mxu0 %v1297
    %1537 = vmatprep.subr.mxu0 %v1296
    %1538 = vmatpush2.msra.mxu0 %v1295
    %1539 = vmatprep.subr.mxu0 %v1294
    %1540 = vmatpush2.msra.mxu0 %v1293
    %1541 = vmatprep.subr.mxu0 %v1292
    %1542 = vmatpush2.msra.mxu0 %v1291
    %1543 = vmatprep.subr.mxu0 %v1290
    %1544 = vmatpush2.msra.mxu0 %v1289
    %1545 = vmatprep.subr.mxu0 %v1288
    %1546 = vmatpush2.msra.mxu0 %v1287
    %1547 = vmatprep.subr.mxu0 %v1286
    %1548 = vmatpush2.msra.mxu0 %v1285
    %1549 = vmatprep.mubr.f32.mxu0 %v1247
    %1550 = vmatmul.mubr.f32.gmra.mxu0 %v1246
    %v1551 = vpop.f32.mrf.mxu0
    %v1552 = vadd.f32 0.0, %v1551
    %v1553 = vpop.f32.mrf.mxu0
    %v1554 = vadd.f32 0.0, %v1553
    %1555 = vdwg.mxu0
    %1556 = vmatprep.subr.mxu0 %v1348
    %1557 = vmatpush1.msra.mxu0 %v1347
    %1558 = vmatprep.subr.mxu0 %v1346
    %1559 = vmatpush1.msra.mxu0 %v1345
    %1560 = vmatprep.subr.mxu0 %v1344
    %1561 = vmatpush1.msra.mxu0 %v1343
    %1562 = vmatprep.subr.mxu0 %v1342
    %1563 = vmatpush1.msra.mxu0 %v1341
    %1564 = vmatprep.subr.mxu0 %v1340
    %1565 = vmatpush1.msra.mxu0 %v1339
    %1566 = vmatprep.subr.mxu0 %v1338
    %1567 = vmatpush1.msra.mxu0 %v1337
    %1568 = vmatprep.subr.mxu0 %v1336
    %1569 = vmatpush1.msra.mxu0 %v1335
    %1570 = vmatprep.subr.mxu0 %v1334
    %1571 = vmatpush1.msra.mxu0 %v1333
    %1572 = vmatprep.subr.mxu0 %v1332
    %1573 = vmatpush1.msra.mxu0 %v1331
    %1574 = vmatprep.subr.mxu0 %v1330
    %1575 = vmatpush1.msra.mxu0 %v1329
    %1576 = vmatprep.subr.mxu0 %v1328
    %1577 = vmatpush1.msra.mxu0 %v1327
    %1578 = vmatprep.subr.mxu0 %v1326
    %1579 = vmatpush1.msra.mxu0 %v1325
    %1580 = vmatprep.subr.mxu0 %v1324
    %1581 = vmatpush1.msra.mxu0 %v1323
    %1582 = vmatprep.subr.mxu0 %v1322
    %1583 = vmatpush1.msra.mxu0 %v1321
    %1584 = vmatprep.subr.mxu0 %v1320
    %1585 = vmatpush1.msra.mxu0 %v1319
    %1586 = vmatprep.subr.mxu0 %v1318
    %1587 = vmatpush1.msra.mxu0 %v1317
    %1588 = vmatprep.subr.mxu0 %v1380
    %1589 = vmatpush2.msra.mxu0 %v1379
    %1590 = vmatprep.subr.mxu0 %v1378
    %1591 = vmatpush2.msra.mxu0 %v1377
    %1592 = vmatprep.subr.mxu0 %v1376
    %1593 = vmatpush2.msra.mxu0 %v1375
    %1594 = vmatprep.subr.mxu0 %v1374
    %1595 = vmatpush2.msra.mxu0 %v1373
    %1596 = vmatprep.subr.mxu0 %v1372
    %1597 = vmatpush2.msra.mxu0 %v1371
    %1598 = vmatprep.subr.mxu0 %v1370
    %1599 = vmatpush2.msra.mxu0 %v1369
    %1600 = vmatprep.subr.mxu0 %v1368
    %1601 = vmatpush2.msra.mxu0 %v1367
    %1602 = vmatprep.subr.mxu0 %v1366
    %1603 = vmatpush2.msra.mxu0 %v1365
    %1604 = vmatprep.subr.mxu0 %v1364
    %1605 = vmatpush2.msra.mxu0 %v1363
    %1606 = vmatprep.subr.mxu0 %v1362
    %1607 = vmatpush2.msra.mxu0 %v1361
    %1608 = vmatprep.subr.mxu0 %v1360
    %1609 = vmatpush2.msra.mxu0 %v1359
    %1610 = vmatprep.subr.mxu0 %v1358
    %1611 = vmatpush2.msra.mxu0 %v1357
    %1612 = vmatprep.subr.mxu0 %v1356
    %1613 = vmatpush2.msra.mxu0 %v1355
    %1614 = vmatprep.subr.mxu0 %v1354
    %1615 = vmatpush2.msra.mxu0 %v1353
    %1616 = vmatprep.subr.mxu0 %v1352
    %1617 = vmatpush2.msra.mxu0 %v1351
    %1618 = vmatprep.subr.mxu0 %v1350
    %1619 = vmatpush2.msra.mxu0 %v1349
    %1620 = vmatprep.mubr.f32.mxu0 %v1249
    %1621 = vmatmul.mubr.f32.gmra.mxu0 %v1248
    %v1622 = vpop.f32.mrf.mxu0
    %v1623 = vadd.f32 %v1552, %v1622
    %v1624 = vpop.f32.mrf.mxu0
    %v1625 = vadd.f32 %v1554, %v1624
    %1626 = vdwg.mxu0
    %1627 = vmatprep.subr.mxu0 %v1412
    %1628 = vmatpush1.msra.mxu0 %v1411
    %1629 = vmatprep.subr.mxu0 %v1410
    %1630 = vmatpush1.msra.mxu0 %v1409
    %1631 = vmatprep.subr.mxu0 %v1408
    %1632 = vmatpush1.msra.mxu0 %v1407
    %1633 = vmatprep.subr.mxu0 %v1406
    %1634 = vmatpush1.msra.mxu0 %v1405
    %1635 = vmatprep.subr.mxu0 %v1404
    %1636 = vmatpush1.msra.mxu0 %v1403
    %1637 = vmatprep.subr.mxu0 %v1402
    %1638 = vmatpush1.msra.mxu0 %v1401
    %1639 = vmatprep.subr.mxu0 %v1400
    %1640 = vmatpush1.msra.mxu0 %v1399
    %1641 = vmatprep.subr.mxu0 %v1398
    %1642 = vmatpush1.msra.mxu0 %v1397
    %1643 = vmatprep.subr.mxu0 %v1396
    %1644 = vmatpush1.msra.mxu0 %v1395
    %1645 = vmatprep.subr.mxu0 %v1394
    %1646 = vmatpush1.msra.mxu0 %v1393
    %1647 = vmatprep.subr.mxu0 %v1392
    %1648 = vmatpush1.msra.mxu0 %v1391
    %1649 = vmatprep.subr.mxu0 %v1390
    %1650 = vmatpush1.msra.mxu0 %v1389
    %1651 = vmatprep.subr.mxu0 %v1388
    %1652 = vmatpush1.msra.mxu0 %v1387
    %1653 = vmatprep.subr.mxu0 %v1386
    %1654 = vmatpush1.msra.mxu0 %v1385
    %1655 = vmatprep.subr.mxu0 %v1384
    %1656 = vmatpush1.msra.mxu0 %v1383
    %1657 = vmatprep.subr.mxu0 %v1382
    %1658 = vmatpush1.msra.mxu0 %v1381
    %1659 = vmatprep.subr.mxu0 %v1444
    %1660 = vmatpush2.msra.mxu0 %v1443
    %1661 = vmatprep.subr.mxu0 %v1442
    %1662 = vmatpush2.msra.mxu0 %v1441
    %1663 = vmatprep.subr.mxu0 %v1440
    %1664 = vmatpush2.msra.mxu0 %v1439
    %1665 = vmatprep.subr.mxu0 %v1438
    %1666 = vmatpush2.msra.mxu0 %v1437
    %1667 = vmatprep.subr.mxu0 %v1436
    %1668 = vmatpush2.msra.mxu0 %v1435
    %1669 = vmatprep.subr.mxu0 %v1434
    %1670 = vmatpush2.msra.mxu0 %v1433
    %1671 = vmatprep.subr.mxu0 %v1432
    %1672 = vmatpush2.msra.mxu0 %v1431
    %1673 = vmatprep.subr.mxu0 %v1430
    %1674 = vmatpush2.msra.mxu0 %v1429
    %1675 = vmatprep.subr.mxu0 %v1428
    %1676 = vmatpush2.msra.mxu0 %v1427
    %1677 = vmatprep.subr.mxu0 %v1426
    %1678 = vmatpush2.msra.mxu0 %v1425
    %1679 = vmatprep.subr.mxu0 %v1424
    %1680 = vmatpush2.msra.mxu0 %v1423
    %1681 = vmatprep.subr.mxu0 %v1422
    %1682 = vmatpush2.msra.mxu0 %v1421
    %1683 = vmatprep.subr.mxu0 %v1420
    %1684 = vmatpush2.msra.mxu0 %v1419
    %1685 = vmatprep.subr.mxu0 %v1418
    %1686 = vmatpush2.msra.mxu0 %v1417
    %1687 = vmatprep.subr.mxu0 %v1416
    %1688 = vmatpush2.msra.mxu0 %v1415
    %1689 = vmatprep.subr.mxu0 %v1414
    %1690 = vmatpush2.msra.mxu0 %v1413
    %1691 = vmatprep.mubr.f32.mxu0 %v1251
    %1692 = vmatmul.mubr.f32.gmra.mxu0 %v1250
    %v1693 = vpop.f32.mrf.mxu0
    %v1694 = vadd.f32 %v1623, %v1693
    %v1695 = vpop.f32.mrf.mxu0
    %v1696 = vadd.f32 %v1625, %v1695
    %1697 = vdwg.mxu0
    %1698 = vmatprep.subr.mxu0 0.0
    %1699 = vmatpush1.msra.mxu0 0.0
    %1700 = vmatprep.subr.mxu0 %v1483
    %1701 = vmatpush1.msra.mxu0 %v1480
    %1702 = vmatprep.subr.mxu0 %v1472
    %1703 = vmatpush1.msra.mxu0 %v1471
    %1704 = vmatprep.subr.mxu0 %v1470
    %1705 = vmatpush1.msra.mxu0 %v1469
    %1706 = vmatprep.subr.mxu0 %v1468
    %1707 = vmatpush1.msra.mxu0 %v1467
    %1708 = vmatprep.subr.mxu0 %v1466
    %1709 = vmatpush1.msra.mxu0 %v1465
    %1710 = vmatprep.subr.mxu0 %v1464
    %1711 = vmatpush1.msra.mxu0 %v1463
    %1712 = vmatprep.subr.mxu0 %v1462
    %1713 = vmatpush1.msra.mxu0 %v1461
    %1714 = vmatprep.subr.mxu0 %v1460
    %1715 = vmatpush1.msra.mxu0 %v1459
    %1716 = vmatprep.subr.mxu0 %v1458
    %1717 = vmatpush1.msra.mxu0 %v1457
    %1718 = vmatprep.subr.mxu0 %v1456
    %1719 = vmatpush1.msra.mxu0 %v1455
    %1720 = vmatprep.subr.mxu0 %v1454
    %1721 = vmatpush1.msra.mxu0 %v1453
    %1722 = vmatprep.subr.mxu0 %v1452
    %1723 = vmatpush1.msra.mxu0 %v1451
    %1724 = vmatprep.subr.mxu0 %v1450
    %1725 = vmatpush1.msra.mxu0 %v1449
    %1726 = vmatprep.subr.mxu0 %v1448
    %1727 = vmatpush1.msra.mxu0 %v1447
    %1728 = vmatprep.subr.mxu0 %v1446
    %1729 = vmatpush1.msra.mxu0 %v1445
    %1730 = vmatprep.subr.mxu0 0.0
    %1731 = vmatpush2.msra.mxu0 0.0
    %1732 = vmatprep.subr.mxu0 0.0
    %1733 = vmatpush2.msra.mxu0 0.0
    %1734 = vmatprep.subr.mxu0 0.0
    %1735 = vmatpush2.msra.mxu0 0.0
    %1736 = vmatprep.subr.mxu0 0.0
    %1737 = vmatpush2.msra.mxu0 0.0
    %1738 = vmatprep.subr.mxu0 0.0
    %1739 = vmatpush2.msra.mxu0 0.0
    %1740 = vmatprep.subr.mxu0 0.0
    %1741 = vmatpush2.msra.mxu0 0.0
    %1742 = vmatprep.subr.mxu0 0.0
    %1743 = vmatpush2.msra.mxu0 0.0
    %1744 = vmatprep.subr.mxu0 0.0
    %1745 = vmatpush2.msra.mxu0 0.0
    %1746 = vmatprep.subr.mxu0 0.0
    %1747 = vmatpush2.msra.mxu0 0.0
    %1748 = vmatprep.subr.mxu0 0.0
    %1749 = vmatpush2.msra.mxu0 0.0
    %1750 = vmatprep.subr.mxu0 0.0
    %1751 = vmatpush2.msra.mxu0 0.0
    %1752 = vmatprep.subr.mxu0 0.0
    %1753 = vmatpush2.msra.mxu0 0.0
    %1754 = vmatprep.subr.mxu0 0.0
    %1755 = vmatpush2.msra.mxu0 0.0
    %1756 = vmatprep.subr.mxu0 0.0
    %1757 = vmatpush2.msra.mxu0 0.0
    %1758 = vmatprep.subr.mxu0 0.0
    %1759 = vmatpush2.msra.mxu0 0.0
    %1760 = vmatprep.subr.mxu0 0.0
    %1761 = vmatpush2.msra.mxu0 0.0
    %1762 = vmatprep.mubr.f32.mxu0 0.0
    %1763 = vmatmul.mubr.f32.gmra.mxu0 %v1477
    %v1764 = vpop.f32.mrf.mxu0
    %v1765 = vadd.f32 %v1694, %v1764
    %v1766 = vpop.f32.mrf.mxu0
    %v1767 = vadd.f32 %v1696, %v1766
    %1768 = vdwg.mxu0
    %1770 = vrot.lane.b32.xlu0 %v1765, 78
    %v1771 = vpop.permute.xlu0 %1770
    %v1773 = vmax.f32 %v1765, %v1771
    %1775 = vrot.lane.b32.xlu0 %v1767, 78
    %v1776 = vpop.permute.xlu0 %1775
    %v1778 = vmax.f32 %v1765, %v1776
    %v1779 = vmax.f32 %v1767, %v1776
    %1782 = vrot.lane.b32.xlu0 %v1778, 28
    %v1783 = vpop.permute.xlu0 %1782
    %1784 = vrot.lane.b32.xlu0 %v1779, 28
    %v1785 = vpop.permute.xlu0 %1784
    %vm1786 = vcmask 228352
    %v1787 = vsel %vm1786, %v1783, %v1785
    %v1789 = vmax.f32 %v1773, %v1787
    %v1790 = vld [vmem:[%s3] sm:$0xff]
    %1792 = vset.pattern.permute.xlu0 0
    %1793 = vperm.xlu0 %1792, %v1790
    %v1794 = vpop.permute.xlu0 %1793
    %v1796 = vadd.f32 %v1789, %v1794
    %v1797 = vmax.f32 %v1796, 0.0
    %1798 = vst [vmem:[#allocation2] sm:$0xff] 0.0
    %1799 = vst [vmem:[#allocation2 + $0x8] sm:$0xff] 0.0
    %1801 = vrot.lane.b32.xlu0 %v1797, 20
    %v1802 = vpop.permute.xlu0 %1801
    %vm1804 = vcmask 203936
    %1805 = vst.msk [vmem:[#allocation2] sm:$0xff] %vm1804, %v1802
    %1806 = vrot.lane.b32.xlu0 %v1797, 24
    %v1807 = vpop.permute.xlu0 %1806
    %vm1809 = vcmask 277736
    %1810 = vst.msk [vmem:[#allocation2] sm:$0xff] %vm1809, %v1807
    %1811 = vrot.lane.b32.xlu0 %v1797, 28
    %v1812 = vpop.permute.xlu0 %1811
    %vm1814 = vcmask 351536
    %1815 = vst.msk [vmem:[#allocation2] sm:$0xff] %vm1814, %v1812
    %1816 = vrot.lane.b32.xlu0 %v1797, 32
    %v1817 = vpop.permute.xlu0 %1816
    %vm1819 = vcmask 425336
    %1820 = vst.msk [vmem:[#allocation2] sm:$0xff] %vm1819, %v1817
    %1821 = vrot.lane.b32.xlu0 %v1797, 36
    %v1822 = vpop.permute.xlu0 %1821
    %vm1824 = vcmask 499136
    %1825 = vst.msk [vmem:[#allocation2] sm:$0xff] %vm1824, %v1822
    %1826 = vrot.lane.b32.xlu0 %v1797, 76
    %v1827 = vpop.permute.xlu0 %1826
    %vm1829 = vcmask 868136
    %1830 = vst.msk [vmem:[#allocation2] sm:$0xff] %vm1829, %v1827
    %1831 = vrot.lane.b32.xlu0 %v1797, 80
    %v1832 = vpop.permute.xlu0 %1831
    %vm1834 = vcmask 941936
    %1835 = vst.msk [vmem:[#allocation2] sm:$0xff] %vm1834, %v1832
    %1836 = vrot.lane.b32.xlu0 %v1797, 84
    %v1837 = vpop.permute.xlu0 %1836
    %vm1839 = vcmask 1015736
    %1840 = vst.msk [vmem:[#allocation2] sm:$0xff] %vm1839, %v1837
    %1841 = vrot.lane.b32.xlu0 %v1797, 88
    %v1842 = vpop.permute.xlu0 %1841
    %vm1844 = vcmask 39936
    %1845 = vst.msk [vmem:[#allocation2 + $0x8] sm:$0xff] %vm1844, %v1842
    %1846 = vrot.lane.b32.xlu0 %v1797, 92
    %v1847 = vpop.permute.xlu0 %1846
    %vm1849 = vcmask 113736
    %1850 = vst.msk [vmem:[#allocation2 + $0x8] sm:$0xff] %vm1849, %v1847
    %v1851 = vld [vmem:[%s5] sm:$0xff]
    %v1852 = vld [vmem:[%s5 + $0x8] sm:$0xff]
    %v1853 = vld [vmem:[%s5 + $0x10] sm:$0xff]
    %v1854 = vld [vmem:[%s5 + $0x18] sm:$0xff]
    %v1855 = vld [vmem:[%s5 + $0x20] sm:$0xff]
    %v1856 = vld [vmem:[%s5 + $0x28] sm:$0xff]
    %v1857 = vld [vmem:[%s5 + $0x30] sm:$0xff]
    %v1858 = vld [vmem:[%s5 + $0x38] sm:$0xff]
    %v1859 = vld [vmem:[%s5 + $0x40] sm:$0xff]
    %v1860 = vld [vmem:[#allocation2] sm:$0xff]
    %v1861 = vld [vmem:[#allocation2 + $0x8] sm:$0xff]
    %v1863 = vsel %vm392, %v1851, 0
    %v1866 = vsel %vm392, %v1852, 0
    %v1869 = vsel %vm392, %v1853, 0
    %v1872 = vsel %vm392, %v1854, 0
    %v1875 = vsel %vm392, %v1855, 0
    %v1878 = vsel %vm392, %v1856, 0
    %v1881 = vsel %vm392, %v1857, 0
    %v1884 = vsel %vm392, %v1858, 0
    %v1887 = vsel %vm392, %v1859, 0
    %1889 = vmatprep.subr.mxu0 0.0
    %1890 = vmatpush1.msra.mxu0 0.0
    %1891 = vmatprep.subr.mxu0 0.0
    %1892 = vmatpush1.msra.mxu0 0.0
    %1893 = vmatprep.subr.mxu0 0.0
    %1894 = vmatpush1.msra.mxu0 0.0
    %1895 = vmatprep.subr.mxu0 0.0
    %1896 = vmatpush1.msra.mxu0 0.0
    %1897 = vmatprep.subr.mxu0 0.0
    %1898 = vmatpush1.msra.mxu0 0.0
    %1899 = vmatprep.subr.mxu0 0.0
    %1900 = vmatpush1.msra.mxu0 0.0
    %1901 = vmatprep.subr.mxu0 0.0
    %1902 = vmatpush1.msra.mxu0 0.0
    %1903 = vmatprep.subr.mxu0 0.0
    %1904 = vmatpush1.msra.mxu0 0.0
    %1905 = vmatprep.subr.mxu0 0.0
    %1906 = vmatpush1.msra.mxu0 0.0
    %1907 = vmatprep.subr.mxu0 0.0
    %1908 = vmatpush1.msra.mxu0 0.0
    %1909 = vmatprep.subr.mxu0 0.0
    %1910 = vmatpush1.msra.mxu0 0.0
    %1911 = vmatprep.subr.mxu0 0.0
    %1912 = vmatpush1.msra.mxu0 0.0
    %1913 = vmatprep.subr.mxu0 0.0
    %1914 = vmatpush1.msra.mxu0 0.0
    %1915 = vmatprep.subr.mxu0 0.0
    %1916 = vmatpush1.msra.mxu0 0.0
    %1917 = vmatprep.subr.mxu0 0.0
    %1918 = vmatpush1.msra.mxu0 0.0
    %1919 = vmatprep.subr.mxu0 %v1861
    %1920 = vmatpush1.msra.mxu0 %v1860
    %1921 = vmatprep.subr.mxu0 0.0
    %1922 = vmatpush2.msra.mxu0 0.0
    %1923 = vmatprep.subr.mxu0 0.0
    %1924 = vmatpush2.msra.mxu0 0.0
    %1925 = vmatprep.subr.mxu0 0.0
    %1926 = vmatpush2.msra.mxu0 0.0
    %1927 = vmatprep.subr.mxu0 0.0
    %1928 = vmatpush2.msra.mxu0 0.0
    %1929 = vmatprep.subr.mxu0 0.0
    %1930 = vmatpush2.msra.mxu0 0.0
    %1931 = vmatprep.subr.mxu0 0.0
    %1932 = vmatpush2.msra.mxu0 0.0
    %1933 = vmatprep.subr.mxu0 0.0
    %1934 = vmatpush2.msra.mxu0 0.0
    %1935 = vmatprep.subr.mxu0 0.0
    %1936 = vmatpush2.msra.mxu0 0.0
    %1937 = vmatprep.subr.mxu0 0.0
    %1938 = vmatpush2.msra.mxu0 0.0
    %1939 = vmatprep.subr.mxu0 0.0
    %1940 = vmatpush2.msra.mxu0 0.0
    %1941 = vmatprep.subr.mxu0 0.0
    %1942 = vmatpush2.msra.mxu0 0.0
    %1943 = vmatprep.subr.mxu0 0.0
    %1944 = vmatpush2.msra.mxu0 0.0
    %1945 = vmatprep.subr.mxu0 0.0
    %1946 = vmatpush2.msra.mxu0 0.0
    %1947 = vmatprep.subr.mxu0 0.0
    %1948 = vmatpush2.msra.mxu0 0.0
    %1949 = vmatprep.subr.mxu0 0.0
    %1950 = vmatpush2.msra.mxu0 0.0
    %1951 = vmatprep.subr.mxu0 0.0
    %1952 = vmatpush2.msra.mxu0 0.0
    %1953 = vmatprep.mubr.f32.mxu0 0.0
    %1954 = vmatmul.mubr.f32.gmra.mxu0 %v1863
    %v1955 = vpop.f32.mrf.mxu0
    %v1956 = vadd.f32 0.0, %v1955
    %v1957 = vpop.f32.mrf.mxu0
    %v1958 = vadd.f32 0.0, %v1957
    %1959 = vmatprep.mubr.f32.mxu0 0.0
    %1960 = vmatmul.mubr.f32.gmra.mxu0 %v1866
    %v1961 = vpop.f32.mrf.mxu0
    %v1962 = vadd.f32 0.0, %v1961
    %v1963 = vpop.f32.mrf.mxu0
    %v1964 = vadd.f32 0.0, %v1963
    %1965 = vmatprep.mubr.f32.mxu0 0.0
    %1966 = vmatmul.mubr.f32.gmra.mxu0 %v1869
    %v1967 = vpop.f32.mrf.mxu0
    %v1968 = vadd.f32 0.0, %v1967
    %v1969 = vpop.f32.mrf.mxu0
    %v1970 = vadd.f32 0.0, %v1969
    %1971 = vmatprep.mubr.f32.mxu0 0.0
    %1972 = vmatmul.mubr.f32.gmra.mxu0 %v1872
    %v1973 = vpop.f32.mrf.mxu0
    %v1974 = vadd.f32 0.0, %v1973
    %v1975 = vpop.f32.mrf.mxu0
    %v1976 = vadd.f32 0.0, %v1975
    %1977 = vmatprep.mubr.f32.mxu0 0.0
    %1978 = vmatmul.mubr.f32.gmra.mxu0 %v1875
    %v1979 = vpop.f32.mrf.mxu0
    %v1980 = vadd.f32 0.0, %v1979
    %v1981 = vpop.f32.mrf.mxu0
    %v1982 = vadd.f32 0.0, %v1981
    %1983 = vmatprep.mubr.f32.mxu0 0.0
    %1984 = vmatmul.mubr.f32.gmra.mxu0 %v1878
    %v1985 = vpop.f32.mrf.mxu0
    %v1986 = vadd.f32 0.0, %v1985
    %v1987 = vpop.f32.mrf.mxu0
    %v1988 = vadd.f32 0.0, %v1987
    %1989 = vmatprep.mubr.f32.mxu0 0.0
    %1990 = vmatmul.mubr.f32.gmra.mxu0 %v1881
    %v1991 = vpop.f32.mrf.mxu0
    %v1992 = vadd.f32 0.0, %v1991
    %v1993 = vpop.f32.mrf.mxu0
    %v1994 = vadd.f32 0.0, %v1993
    %1995 = vmatprep.mubr.f32.mxu0 0.0
    %1996 = vmatmul.mubr.f32.gmra.mxu0 %v1884
    %v1997 = vpop.f32.mrf.mxu0
    %v1998 = vadd.f32 0.0, %v1997
    %v1999 = vpop.f32.mrf.mxu0
    %v2000 = vadd.f32 0.0, %v1999
    %2001 = vmatprep.mubr.f32.mxu0 0.0
    %2002 = vmatmul.mubr.f32.gmra.mxu0 %v1887
    %v2003 = vpop.f32.mrf.mxu0
    %v2004 = vadd.f32 0.0, %v2003
    %v2005 = vpop.f32.mrf.mxu0
    %v2006 = vadd.f32 0.0, %v2005
    %2007 = vdwg.mxu0
    %2010 = vrot.lane.b32.xlu0 %v1962, 127
    %v2011 = vpop.permute.xlu0 %2010
    %2012 = vrot.lane.b32.xlu0 %v1964, 127
    %v2013 = vpop.permute.xlu0 %2012
    %v2014 = vsel %vm914, %v2011, %v2013
    %v2017 = vadd.f32 %v1956, %v2014
    %v2018 = vadd.f32 %v1958, %v2013
    %2021 = vrot.lane.b32.xlu0 %v1968, 126
    %v2022 = vpop.permute.xlu0 %2021
    %2023 = vrot.lane.b32.xlu0 %v1970, 126
    %v2024 = vpop.permute.xlu0 %2023
    %v2025 = vsel %vm956, %v2022, %v2024
    %v2028 = vadd.f32 %v2017, %v2025
    %v2029 = vadd.f32 %v2018, %v2024
    %2032 = vrot.lane.b32.xlu0 %v1974, 119
    %v2033 = vpop.permute.xlu0 %2032
    %2034 = vrot.lane.b32.xlu0 %v1976, 119
    %v2035 = vpop.permute.xlu0 %2034
    %vm2036 = vcmask 973824
    %v2037 = vsel %vm2036, %v2033, %v2035
    %v2040 = vadd.f32 %v2028, %v2037
    %v2041 = vadd.f32 %v2029, %v2035
    %2044 = vrot.lane.b32.xlu0 %v1980, 118
    %v2045 = vpop.permute.xlu0 %2044
    %2046 = vrot.lane.b32.xlu0 %v1982, 118
    %v2047 = vpop.permute.xlu0 %2046
    %vm2048 = vcmask 965632
    %v2049 = vsel %vm2048, %v2045, %v2047
    %v2052 = vadd.f32 %v2040, %v2049
    %v2053 = vadd.f32 %v2041, %v2047
    %2056 = vrot.lane.b32.xlu0 %v1986, 117
    %v2057 = vpop.permute.xlu0 %2056
    %2058 = vrot.lane.b32.xlu0 %v1988, 117
    %v2059 = vpop.permute.xlu0 %2058
    %vm2060 = vcmask 957440
    %v2061 = vsel %vm2060, %v2057, %v2059
    %v2064 = vadd.f32 %v2052, %v2061
    %v2065 = vadd.f32 %v2053, %v2059
    %2068 = vrot.lane.b32.xlu0 %v1992, 110
    %v2069 = vpop.permute.xlu0 %2068
    %2070 = vrot.lane.b32.xlu0 %v1994, 110
    %v2071 = vpop.permute.xlu0 %2070
    %vm2072 = vcmask 900096
    %v2073 = vsel %vm2072, %v2069, %v2071
    %v2076 = vadd.f32 %v2064, %v2073
    %v2077 = vadd.f32 %v2065, %v2071
    %2080 = vrot.lane.b32.xlu0 %v1998, 109
    %v2081 = vpop.permute.xlu0 %2080
    %2082 = vrot.lane.b32.xlu0 %v2000, 109
    %v2083 = vpop.permute.xlu0 %2082
    %vm2084 = vcmask 891904
    %v2085 = vsel %vm2084, %v2081, %v2083
    %v2088 = vadd.f32 %v2076, %v2085
    %v2089 = vadd.f32 %v2077, %v2083
    %2092 = vrot.lane.b32.xlu0 %v2004, 108
    %v2093 = vpop.permute.xlu0 %2092
    %2094 = vrot.lane.b32.xlu0 %v2006, 108
    %v2095 = vpop.permute.xlu0 %2094
    %vm2096 = vcmask 883712
    %v2097 = vsel %vm2096, %v2093, %v2095
    %v2100 = vadd.f32 %v2088, %v2097
    %v2101 = vadd.f32 %v2089, %v2095
    %v2102 = vld [vmem:[%s7] sm:$0xff]
    %v2103 = vld [vmem:[%s7 + $0x8] sm:$0xff]
    %v2104 = vld [vmem:[%s7 + $0x10] sm:$0xff]
    %v2105 = vld [vmem:[%s7 + $0x18] sm:$0xff]
    %v2106 = vld [vmem:[%s7 + $0x20] sm:$0xff]
    %v2107 = vld [vmem:[%s7 + $0x28] sm:$0xff]
    %v2108 = vld [vmem:[%s7 + $0x30] sm:$0xff]
    %v2109 = vld [vmem:[%s7 + $0x38] sm:$0xff]
    %v2110 = vld [vmem:[%s7 + $0x40] sm:$0xff]
    %v2111 = vld [vmem:[%s7 + $0x48] sm:$0xff]
    %v2112 = vld [vmem:[%s7 + $0x50] sm:$0xff]
    %v2113 = vld [vmem:[%s7 + $0x58] sm:$0xff]
    %v2114 = vld [vmem:[%s7 + $0x60] sm:$0xff]
    %v2115 = vld [vmem:[%s7 + $0x68] sm:$0xff]
    %v2116 = vld [vmem:[%s7 + $0x70] sm:$0xff]
    %v2117 = vld [vmem:[%s7 + $0x78] sm:$0xff]
    %v2118 = vld [vmem:[%s7 + $0x80] sm:$0xff]
    %v2119 = vld [vmem:[%s7 + $0x88] sm:$0xff]
    %v2120 = vld [vmem:[%s7 + $0x90] sm:$0xff]
    %v2121 = vld [vmem:[%s7 + $0x98] sm:$0xff]
    %v2122 = vld [vmem:[%s7 + $0xa0] sm:$0x3]
    %v2123 = vld [vmem:[%s6] sm:$0xff]
    %2125 = vset.pattern.permute.xlu0 0
    %2126 = vperm.xlu0 %2125, %v2123
    %v2127 = vpop.permute.xlu0 %2126
    %vm2129 = vcmask 277504
    %v2131 = vsel %vm2129, %v2101, 0
    %v2134 = vsel %vm66, %v2122, 0
    %2136 = vmatprep.subr.mxu0 0.0
    %2137 = vmatpush1.msra.mxu0 %v2117
    %2138 = vmatprep.subr.mxu0 0.0
    %2139 = vmatpush1.msra.mxu0 %v2116
    %2140 = vmatprep.subr.mxu0 0.0
    %2141 = vmatpush1.msra.mxu0 %v2115
    %2142 = vmatprep.subr.mxu0 0.0
    %2143 = vmatpush1.msra.mxu0 %v2114
    %2144 = vmatprep.subr.mxu0 0.0
    %2145 = vmatpush1.msra.mxu0 %v2113
    %2146 = vmatprep.subr.mxu0 0.0
    %2147 = vmatpush1.msra.mxu0 %v2112
    %2148 = vmatprep.subr.mxu0 0.0
    %2149 = vmatpush1.msra.mxu0 %v2111
    %2150 = vmatprep.subr.mxu0 0.0
    %2151 = vmatpush1.msra.mxu0 %v2110
    %2152 = vmatprep.subr.mxu0 0.0
    %2153 = vmatpush1.msra.mxu0 %v2109
    %2154 = vmatprep.subr.mxu0 0.0
    %2155 = vmatpush1.msra.mxu0 %v2108
    %2156 = vmatprep.subr.mxu0 0.0
    %2157 = vmatpush1.msra.mxu0 %v2107
    %2158 = vmatprep.subr.mxu0 0.0
    %2159 = vmatpush1.msra.mxu0 %v2106
    %2160 = vmatprep.subr.mxu0 0.0
    %2161 = vmatpush1.msra.mxu0 %v2105
    %2162 = vmatprep.subr.mxu0 0.0
    %2163 = vmatpush1.msra.mxu0 %v2104
    %2164 = vmatprep.subr.mxu0 0.0
    %2165 = vmatpush1.msra.mxu0 %v2103
    %2166 = vmatprep.subr.mxu0 0.0
    %2167 = vmatpush1.msra.mxu0 %v2102
    %2168 = vmatprep.subr.mxu0 0.0
    %2169 = vmatpush2.msra.mxu0 0.0
    %2170 = vmatprep.subr.mxu0 0.0
    %2171 = vmatpush2.msra.mxu0 0.0
    %2172 = vmatprep.subr.mxu0 0.0
    %2173 = vmatpush2.msra.mxu0 0.0
    %2174 = vmatprep.subr.mxu0 0.0
    %2175 = vmatpush2.msra.mxu0 0.0
    %2176 = vmatprep.subr.mxu0 0.0
    %2177 = vmatpush2.msra.mxu0 0.0
    %2178 = vmatprep.subr.mxu0 0.0
    %2179 = vmatpush2.msra.mxu0 0.0
    %2180 = vmatprep.subr.mxu0 0.0
    %2181 = vmatpush2.msra.mxu0 0.0
    %2182 = vmatprep.subr.mxu0 0.0
    %2183 = vmatpush2.msra.mxu0 0.0
    %2184 = vmatprep.subr.mxu0 0.0
    %2185 = vmatpush2.msra.mxu0 0.0
    %2186 = vmatprep.subr.mxu0 0.0
    %2187 = vmatpush2.msra.mxu0 0.0
    %2188 = vmatprep.subr.mxu0 0.0
    %2189 = vmatpush2.msra.mxu0 0.0
    %2190 = vmatprep.subr.mxu0 0.0
    %2191 = vmatpush2.msra.mxu0 %v2134
    %2192 = vmatprep.subr.mxu0 0.0
    %2193 = vmatpush2.msra.mxu0 %v2121
    %2194 = vmatprep.subr.mxu0 0.0
    %2195 = vmatpush2.msra.mxu0 %v2120
    %2196 = vmatprep.subr.mxu0 0.0
    %2197 = vmatpush2.msra.mxu0 %v2119
    %2198 = vmatprep.subr.mxu0 0.0
    %2199 = vmatpush2.msra.mxu0 %v2118
    %2200 = vmatprep.mubr.f32.mxu0 %v2131
    %2201 = vmatmul.mubr.f32.gmra.mxu0 %v2100
    %v2202 = vpop.f32.mrf.mxu0
    %v2203 = vadd.f32 %v2127, %v2202
    %v2204 = vpop.f32.mrf.mxu0
    %2205 = vdwg.mxu0
    %v2206 = vmax.f32 %v2203, 0.0
    %2207 = vst [vmem:[#allocation3] sm:$0xff] 0.0
    %2208 = vst [vmem:[#allocation3 + $0x8] sm:$0xff] 0.0
    %2209 = vst [vmem:[#allocation3 + $0x10] sm:$0xff] 0.0
    %2211 = vrot.lane.b32.xlu0 %v2206, 24
    %v2212 = vpop.permute.xlu0 %2211
    %vm2214 = vcmask 253120
    %2215 = vst.msk [vmem:[#allocation3] sm:$0xff] %vm2214, %v2212
    %2216 = vrot.lane.b32.xlu0 %v2206, 28
    %v2217 = vpop.permute.xlu0 %2216
    %vm2219 = vcmask 343320
    %2220 = vst.msk [vmem:[#allocation3] sm:$0xff] %vm2219, %v2217
    %2221 = vrot.lane.b32.xlu0 %v2206, 32
    %v2222 = vpop.permute.xlu0 %2221
    %vm2224 = vcmask 433520
    %2225 = vst.msk [vmem:[#allocation3] sm:$0xff] %vm2224, %v2222
    %2226 = vrot.lane.b32.xlu0 %v2206, 36
    %v2227 = vpop.permute.xlu0 %2226
    %vm2229 = vcmask 523720
    %2230 = vst.msk [vmem:[#allocation3] sm:$0xff] %vm2229, %v2227
    %2231 = vrot.lane.b32.xlu0 %v2206, 40
    %v2232 = vpop.permute.xlu0 %2231
    %vm2234 = vcmask 613920
    %2235 = vst.msk [vmem:[#allocation3] sm:$0xff] %vm2234, %v2232
    %2236 = vrot.lane.b32.xlu0 %v2206, 44
    %v2237 = vpop.permute.xlu0 %2236
    %vm2239 = vcmask 704120
    %2240 = vst.msk [vmem:[#allocation3] sm:$0xff] %vm2239, %v2237
    %2241 = vrot.lane.b32.xlu0 %v2206, 48
    %v2242 = vpop.permute.xlu0 %2241
    %vm2244 = vcmask 794320
    %2245 = vst.msk [vmem:[#allocation3] sm:$0xff] %vm2244, %v2242
    %2246 = vrot.lane.b32.xlu0 %v2206, 96
    %v2247 = vpop.permute.xlu0 %2246
    %vm2249 = vcmask 195720
    %2250 = vst.msk [vmem:[#allocation3 + $0x8] sm:$0xff] %vm2249, %v2247
    %2251 = vrot.lane.b32.xlu0 %v2206, 100
    %v2252 = vpop.permute.xlu0 %2251
    %vm2254 = vcmask 285920
    %2255 = vst.msk [vmem:[#allocation3 + $0x8] sm:$0xff] %vm2254, %v2252
    %2256 = vrot.lane.b32.xlu0 %v2206, 104
    %v2257 = vpop.permute.xlu0 %2256
    %vm2259 = vcmask 376120
    %2260 = vst.msk [vmem:[#allocation3 + $0x8] sm:$0xff] %vm2259, %v2257
    %2261 = vrot.lane.b32.xlu0 %v2206, 108
    %v2262 = vpop.permute.xlu0 %2261
    %vm2264 = vcmask 466320
    %2265 = vst.msk [vmem:[#allocation3 + $0x8] sm:$0xff] %vm2264, %v2262
    %2266 = vrot.lane.b32.xlu0 %v2206, 112
    %v2267 = vpop.permute.xlu0 %2266
    %vm2269 = vcmask 556520
    %2270 = vst.msk [vmem:[#allocation3 + $0x8] sm:$0xff] %vm2269, %v2267
    %2271 = vrot.lane.b32.xlu0 %v2206, 116
    %v2272 = vpop.permute.xlu0 %2271
    %vm2274 = vcmask 646720
    %2275 = vst.msk [vmem:[#allocation3 + $0x8] sm:$0xff] %vm2274, %v2272
    %2276 = vrot.lane.b32.xlu0 %v2206, 120
    %v2277 = vpop.permute.xlu0 %2276
    %vm2279 = vcmask 736920
    %2280 = vst.msk [vmem:[#allocation3 + $0x8] sm:$0xff] %vm2279, %v2277
    %v2281 = vld [vmem:[%s8] sm:$0xff]
    %v2282 = vld [vmem:[%s8 + $0x8] sm:$0xff]
    %v2283 = vld [vmem:[%s8 + $0x10] sm:$0xff]
    %v2284 = vld [vmem:[%s8 + $0x18] sm:$0xff]
    %v2285 = vld [vmem:[%s8 + $0x20] sm:$0xff]
    %v2286 = vld [vmem:[%s8 + $0x28] sm:$0xff]
    %v2287 = vld [vmem:[%s8 + $0x30] sm:$0xff]
    %v2288 = vld [vmem:[%s8 + $0x38] sm:$0xff]
    %v2289 = vld [vmem:[%s8 + $0x40] sm:$0xff]
    %v2290 = vld [vmem:[#allocation3] sm:$0xff]
    %v2291 = vld [vmem:[#allocation3 + $0x8] sm:$0xff]
    %v2292 = vld [vmem:[#allocation3 + $0x10] sm:$0xff]
    %v2294 = vsel %vm392, %v2281, 0
    %v2297 = vsel %vm392, %v2282, 0
    %v2300 = vsel %vm392, %v2283, 0
    %v2303 = vsel %vm392, %v2284, 0
    %v2306 = vsel %vm392, %v2285, 0
    %v2309 = vsel %vm392, %v2286, 0
    %v2312 = vsel %vm392, %v2287, 0
    %v2315 = vsel %vm392, %v2288, 0
    %v2318 = vsel %vm392, %v2289, 0
    %2320 = vmatprep.subr.mxu0 0.0
    %2321 = vmatpush1.msra.mxu0 0.0
    %2322 = vmatprep.subr.mxu0 0.0
    %2323 = vmatpush1.msra.mxu0 0.0
    %2324 = vmatprep.subr.mxu0 0.0
    %2325 = vmatpush1.msra.mxu0 0.0
    %2326 = vmatprep.subr.mxu0 0.0
    %2327 = vmatpush1.msra.mxu0 0.0
    %2328 = vmatprep.subr.mxu0 0.0
    %2329 = vmatpush1.msra.mxu0 0.0
    %2330 = vmatprep.subr.mxu0 0.0
    %2331 = vmatpush1.msra.mxu0 0.0
    %2332 = vmatprep.subr.mxu0 0.0
    %2333 = vmatpush1.msra.mxu0 0.0
    %2334 = vmatprep.subr.mxu0 0.0
    %2335 = vmatpush1.msra.mxu0 0.0
    %2336 = vmatprep.subr.mxu0 0.0
    %2337 = vmatpush1.msra.mxu0 0.0
    %2338 = vmatprep.subr.mxu0 0.0
    %2339 = vmatpush1.msra.mxu0 0.0
    %2340 = vmatprep.subr.mxu0 0.0
    %2341 = vmatpush1.msra.mxu0 0.0
    %2342 = vmatprep.subr.mxu0 0.0
    %2343 = vmatpush1.msra.mxu0 0.0
    %2344 = vmatprep.subr.mxu0 0.0
    %2345 = vmatpush1.msra.mxu0 0.0
    %2346 = vmatprep.subr.mxu0 0.0
    %2347 = vmatpush1.msra.mxu0 0.0
    %2348 = vmatprep.subr.mxu0 0.0
    %2349 = vmatpush1.msra.mxu0 0.0
    %2350 = vmatprep.subr.mxu0 %v2291
    %2351 = vmatpush1.msra.mxu0 %v2290
    %2352 = vmatprep.subr.mxu0 0.0
    %2353 = vmatpush2.msra.mxu0 0.0
    %2354 = vmatprep.subr.mxu0 0.0
    %2355 = vmatpush2.msra.mxu0 0.0
    %2356 = vmatprep.subr.mxu0 0.0
    %2357 = vmatpush2.msra.mxu0 0.0
    %2358 = vmatprep.subr.mxu0 0.0
    %2359 = vmatpush2.msra.mxu0 0.0
    %2360 = vmatprep.subr.mxu0 0.0
    %2361 = vmatpush2.msra.mxu0 0.0
    %2362 = vmatprep.subr.mxu0 0.0
    %2363 = vmatpush2.msra.mxu0 0.0
    %2364 = vmatprep.subr.mxu0 0.0
    %2365 = vmatpush2.msra.mxu0 0.0
    %2366 = vmatprep.subr.mxu0 0.0
    %2367 = vmatpush2.msra.mxu0 0.0
    %2368 = vmatprep.subr.mxu0 0.0
    %2369 = vmatpush2.msra.mxu0 0.0
    %2370 = vmatprep.subr.mxu0 0.0
    %2371 = vmatpush2.msra.mxu0 0.0
    %2372 = vmatprep.subr.mxu0 0.0
    %2373 = vmatpush2.msra.mxu0 0.0
    %2374 = vmatprep.subr.mxu0 0.0
    %2375 = vmatpush2.msra.mxu0 0.0
    %2376 = vmatprep.subr.mxu0 0.0
    %2377 = vmatpush2.msra.mxu0 0.0
    %2378 = vmatprep.subr.mxu0 0.0
    %2379 = vmatpush2.msra.mxu0 0.0
    %2380 = vmatprep.subr.mxu0 0.0
    %2381 = vmatpush2.msra.mxu0 0.0
    %2382 = vmatprep.subr.mxu0 0.0
    %2383 = vmatpush2.msra.mxu0 0.0
    %2384 = vmatprep.mubr.f32.mxu0 0.0
    %2385 = vmatmul.mubr.f32.gmra.mxu0 %v2294
    %v2386 = vpop.f32.mrf.mxu0
    %v2387 = vadd.f32 0.0, %v2386
    %v2388 = vpop.f32.mrf.mxu0
    %v2389 = vadd.f32 0.0, %v2388
    %2390 = vmatprep.mubr.f32.mxu0 0.0
    %2391 = vmatmul.mubr.f32.gmra.mxu0 %v2297
    %v2392 = vpop.f32.mrf.mxu0
    %v2393 = vadd.f32 0.0, %v2392
    %v2394 = vpop.f32.mrf.mxu0
    %v2395 = vadd.f32 0.0, %v2394
    %2396 = vmatprep.mubr.f32.mxu0 0.0
    %2397 = vmatmul.mubr.f32.gmra.mxu0 %v2300
    %v2398 = vpop.f32.mrf.mxu0
    %v2399 = vadd.f32 0.0, %v2398
    %v2400 = vpop.f32.mrf.mxu0
    %v2401 = vadd.f32 0.0, %v2400
    %2402 = vmatprep.mubr.f32.mxu0 0.0
    %2403 = vmatmul.mubr.f32.gmra.mxu0 %v2303
    %v2404 = vpop.f32.mrf.mxu0
    %v2405 = vadd.f32 0.0, %v2404
    %v2406 = vpop.f32.mrf.mxu0
    %v2407 = vadd.f32 0.0, %v2406
    %2408 = vmatprep.mubr.f32.mxu0 0.0
    %2409 = vmatmul.mubr.f32.gmra.mxu0 %v2306
    %v2410 = vpop.f32.mrf.mxu0
    %v2411 = vadd.f32 0.0, %v2410
    %v2412 = vpop.f32.mrf.mxu0
    %v2413 = vadd.f32 0.0, %v2412
    %2414 = vmatprep.mubr.f32.mxu0 0.0
    %2415 = vmatmul.mubr.f32.gmra.mxu0 %v2309
    %v2416 = vpop.f32.mrf.mxu0
    %v2417 = vadd.f32 0.0, %v2416
    %v2418 = vpop.f32.mrf.mxu0
    %v2419 = vadd.f32 0.0, %v2418
    %2420 = vmatprep.mubr.f32.mxu0 0.0
    %2421 = vmatmul.mubr.f32.gmra.mxu0 %v2312
    %v2422 = vpop.f32.mrf.mxu0
    %v2423 = vadd.f32 0.0, %v2422
    %v2424 = vpop.f32.mrf.mxu0
    %v2425 = vadd.f32 0.0, %v2424
    %2426 = vmatprep.mubr.f32.mxu0 0.0
    %2427 = vmatmul.mubr.f32.gmra.mxu0 %v2315
    %v2428 = vpop.f32.mrf.mxu0
    %v2429 = vadd.f32 0.0, %v2428
    %v2430 = vpop.f32.mrf.mxu0
    %v2431 = vadd.f32 0.0, %v2430
    %2432 = vmatprep.mubr.f32.mxu0 0.0
    %2433 = vmatmul.mubr.f32.gmra.mxu0 %v2318
    %v2434 = vpop.f32.mrf.mxu0
    %v2435 = vadd.f32 0.0, %v2434
    %v2436 = vpop.f32.mrf.mxu0
    %v2437 = vadd.f32 0.0, %v2436
    %2438 = vdwg.mxu0
    %2439 = vmatprep.subr.mxu0 0.0
    %2440 = vmatpush1.msra.mxu0 0.0
    %2441 = vmatprep.subr.mxu0 0.0
    %2442 = vmatpush1.msra.mxu0 0.0
    %2443 = vmatprep.subr.mxu0 0.0
    %2444 = vmatpush1.msra.mxu0 0.0
    %2445 = vmatprep.subr.mxu0 0.0
    %2446 = vmatpush1.msra.mxu0 0.0
    %2447 = vmatprep.subr.mxu0 0.0
    %2448 = vmatpush1.msra.mxu0 0.0
    %2449 = vmatprep.subr.mxu0 0.0
    %2450 = vmatpush1.msra.mxu0 0.0
    %2451 = vmatprep.subr.mxu0 0.0
    %2452 = vmatpush1.msra.mxu0 0.0
    %2453 = vmatprep.subr.mxu0 0.0
    %2454 = vmatpush1.msra.mxu0 0.0
    %2455 = vmatprep.subr.mxu0 0.0
    %2456 = vmatpush1.msra.mxu0 0.0
    %2457 = vmatprep.subr.mxu0 0.0
    %2458 = vmatpush1.msra.mxu0 0.0
    %2459 = vmatprep.subr.mxu0 0.0
    %2460 = vmatpush1.msra.mxu0 0.0
    %2461 = vmatprep.subr.mxu0 0.0
    %2462 = vmatpush1.msra.mxu0 0.0
    %2463 = vmatprep.subr.mxu0 0.0
    %2464 = vmatpush1.msra.mxu0 0.0
    %2465 = vmatprep.subr.mxu0 0.0
    %2466 = vmatpush1.msra.mxu0 0.0
    %2467 = vmatprep.subr.mxu0 0.0
    %2468 = vmatpush1.msra.mxu0 0.0
    %2469 = vmatprep.subr.mxu0 0.0
    %2470 = vmatpush1.msra.mxu0 %v2292
    %2471 = vmatprep.subr.mxu0 0.0
    %2472 = vmatpush2.msra.mxu0 0.0
    %2473 = vmatprep.subr.mxu0 0.0
    %2474 = vmatpush2.msra.mxu0 0.0
    %2475 = vmatprep.subr.mxu0 0.0
    %2476 = vmatpush2.msra.mxu0 0.0
    %2477 = vmatprep.subr.mxu0 0.0
    %2478 = vmatpush2.msra.mxu0 0.0
    %2479 = vmatprep.subr.mxu0 0.0
    %2480 = vmatpush2.msra.mxu0 0.0
    %2481 = vmatprep.subr.mxu0 0.0
    %2482 = vmatpush2.msra.mxu0 0.0
    %2483 = vmatprep.subr.mxu0 0.0
    %2484 = vmatpush2.msra.mxu0 0.0
    %2485 = vmatprep.subr.mxu0 0.0
    %2486 = vmatpush2.msra.mxu0 0.0
    %2487 = vmatprep.subr.mxu0 0.0
    %2488 = vmatpush2.msra.mxu0 0.0
    %2489 = vmatprep.subr.mxu0 0.0
    %2490 = vmatpush2.msra.mxu0 0.0
    %2491 = vmatprep.subr.mxu0 0.0
    %2492 = vmatpush2.msra.mxu0 0.0
    %2493 = vmatprep.subr.mxu0 0.0
    %2494 = vmatpush2.msra.mxu0 0.0
    %2495 = vmatprep.subr.mxu0 0.0
    %2496 = vmatpush2.msra.mxu0 0.0
    %2497 = vmatprep.subr.mxu0 0.0
    %2498 = vmatpush2.msra.mxu0 0.0
    %2499 = vmatprep.subr.mxu0 0.0
    %2500 = vmatpush2.msra.mxu0 0.0
    %2501 = vmatprep.subr.mxu0 0.0
    %2502 = vmatpush2.msra.mxu0 0.0
    %2503 = vmatprep.mubr.f32.mxu0 0.0
    %2504 = vmatmul.mubr.f32.gmra.mxu0 %v2294
    %v2505 = vpop.f32.mrf.mxu0
    %v2506 = vpop.f32.mrf.mxu0
    %2507 = vmatprep.mubr.f32.mxu0 0.0
    %2508 = vmatmul.mubr.f32.gmra.mxu0 %v2297
    %v2509 = vpop.f32.mrf.mxu0
    %v2510 = vpop.f32.mrf.mxu0
    %2511 = vmatprep.mubr.f32.mxu0 0.0
    %2512 = vmatmul.mubr.f32.gmra.mxu0 %v2300
    %v2513 = vpop.f32.mrf.mxu0
    %v2514 = vpop.f32.mrf.mxu0
    %2515 = vmatprep.mubr.f32.mxu0 0.0
    %2516 = vmatmul.mubr.f32.gmra.mxu0 %v2303
    %v2517 = vpop.f32.mrf.mxu0
    %v2518 = vpop.f32.mrf.mxu0
    %2519 = vmatprep.mubr.f32.mxu0 0.0
    %2520 = vmatmul.mubr.f32.gmra.mxu0 %v2306
    %v2521 = vpop.f32.mrf.mxu0
    %v2522 = vpop.f32.mrf.mxu0
    %2523 = vmatprep.mubr.f32.mxu0 0.0
    %2524 = vmatmul.mubr.f32.gmra.mxu0 %v2309
    %v2525 = vpop.f32.mrf.mxu0
    %v2526 = vpop.f32.mrf.mxu0
    %2527 = vmatprep.mubr.f32.mxu0 0.0
    %2528 = vmatmul.mubr.f32.gmra.mxu0 %v2312
    %v2529 = vpop.f32.mrf.mxu0
    %v2530 = vadd.f32 0.0, %v2529
    %v2531 = vpop.f32.mrf.mxu0
    %2532 = vmatprep.mubr.f32.mxu0 0.0
    %2533 = vmatmul.mubr.f32.gmra.mxu0 %v2315
    %v2534 = vpop.f32.mrf.mxu0
    %v2535 = vadd.f32 0.0, %v2534
    %v2536 = vpop.f32.mrf.mxu0
    %2537 = vmatprep.mubr.f32.mxu0 0.0
    %2538 = vmatmul.mubr.f32.gmra.mxu0 %v2318
    %v2539 = vpop.f32.mrf.mxu0
    %v2540 = vadd.f32 0.0, %v2539
    %v2541 = vpop.f32.mrf.mxu0
    %2542 = vdwg.mxu0
    %2545 = vrot.lane.b32.xlu0 %v2393, 127
    %v2546 = vpop.permute.xlu0 %2545
    %2547 = vrot.lane.b32.xlu0 %v2395, 127
    %v2548 = vpop.permute.xlu0 %2547
    %v2549 = vsel %vm914, %v2546, %v2548
    %v2552 = vadd.f32 %v2387, %v2549
    %v2553 = vadd.f32 %v2389, %v2548
    %2556 = vrot.lane.b32.xlu0 %v2399, 126
    %v2557 = vpop.permute.xlu0 %2556
    %2558 = vrot.lane.b32.xlu0 %v2401, 126
    %v2559 = vpop.permute.xlu0 %2558
    %v2560 = vsel %vm956, %v2557, %v2559
    %v2563 = vadd.f32 %v2552, %v2560
    %v2564 = vadd.f32 %v2553, %v2559
    %2567 = vrot.lane.b32.xlu0 %v2405, 117
    %v2568 = vpop.permute.xlu0 %2567
    %2569 = vrot.lane.b32.xlu0 %v2407, 117
    %v2570 = vpop.permute.xlu0 %2569
    %v2571 = vsel %vm2060, %v2568, %v2570
    %v2574 = vadd.f32 %v2563, %v2571
    %v2575 = vadd.f32 %v2564, %v2570
    %2578 = vrot.lane.b32.xlu0 %v2411, 116
    %v2579 = vpop.permute.xlu0 %2578
    %2580 = vrot.lane.b32.xlu0 %v2413, 116
    %v2581 = vpop.permute.xlu0 %2580
    %vm2582 = vcmask 949248
    %v2583 = vsel %vm2582, %v2579, %v2581
    %v2586 = vadd.f32 %v2574, %v2583
    %v2587 = vadd.f32 %v2575, %v2581
    %2590 = vrot.lane.b32.xlu0 %v2417, 115
    %v2591 = vpop.permute.xlu0 %2590
    %2592 = vrot.lane.b32.xlu0 %v2419, 115
    %v2593 = vpop.permute.xlu0 %2592
    %vm2594 = vcmask 941056
    %v2595 = vsel %vm2594, %v2591, %v2593
    %v2598 = vadd.f32 %v2586, %v2595
    %v2599 = vadd.f32 %v2587, %v2593
    %2603 = vrot.lane.b32.xlu0 %v2423, 106
    %v2604 = vpop.permute.xlu0 %2603
    %2605 = vrot.lane.b32.xlu0 %v2425, 106
    %v2606 = vpop.permute.xlu0 %2605
    %2607 = vrot.lane.b32.xlu0 %v2530, 106
    %v2608 = vpop.permute.xlu0 %2607
    %v2609 = vsel %vm1047, %v2604, %v2606
    %v2610 = vsel %vm1047, %v2606, %v2608
    %v2613 = vadd.f32 %v2598, %v2609
    %v2614 = vadd.f32 %v2599, %v2610
    %2618 = vrot.lane.b32.xlu0 %v2429, 105
    %v2619 = vpop.permute.xlu0 %2618
    %2620 = vrot.lane.b32.xlu0 %v2431, 105
    %v2621 = vpop.permute.xlu0 %2620
    %2622 = vrot.lane.b32.xlu0 %v2535, 105
    %v2623 = vpop.permute.xlu0 %2622
    %v2624 = vsel %vm1093, %v2619, %v2621
    %v2625 = vsel %vm1093, %v2621, %v2623
    %v2628 = vadd.f32 %v2613, %v2624
    %v2629 = vadd.f32 %v2614, %v2625
    %2633 = vrot.lane.b32.xlu0 %v2435, 104
    %v2634 = vpop.permute.xlu0 %2633
    %2635 = vrot.lane.b32.xlu0 %v2437, 104
    %v2636 = vpop.permute.xlu0 %2635
    %2637 = vrot.lane.b32.xlu0 %v2540, 104
    %v2638 = vpop.permute.xlu0 %2637
    %vm2639 = vcmask 850944
    %v2640 = vsel %vm2639, %v2634, %v2636
    %v2641 = vsel %vm2639, %v2636, %v2638
    %v2644 = vadd.f32 %v2628, %v2640
    %v2645 = vadd.f32 %v2629, %v2641
    %v2646 = vld [vmem:[%s10] sm:$0xff]
    %v2647 = vld [vmem:[%s10 + $0x8] sm:$0xff]
    %v2648 = vld [vmem:[%s10 + $0x10] sm:$0xff]
    %v2649 = vld [vmem:[%s10 + $0x18] sm:$0xff]
    %v2650 = vld [vmem:[%s10 + $0x20] sm:$0xff]
    %v2651 = vld [vmem:[%s10 + $0x28] sm:$0xff]
    %v2652 = vld [vmem:[%s10 + $0x30] sm:$0xff]
    %v2653 = vld [vmem:[%s10 + $0x38] sm:$0xff]
    %v2654 = vld [vmem:[%s10 + $0x40] sm:$0xff]
    %v2655 = vld [vmem:[%s10 + $0x48] sm:$0xff]
    %v2656 = vld [vmem:[%s10 + $0x50] sm:$0xff]
    %v2657 = vld [vmem:[%s10 + $0x58] sm:$0xff]
    %v2658 = vld [vmem:[%s10 + $0x60] sm:$0xff]
    %v2659 = vld [vmem:[%s10 + $0x68] sm:$0xff]
    %v2660 = vld [vmem:[%s10 + $0x70] sm:$0xff]
    %v2661 = vld [vmem:[%s10 + $0x78] sm:$0xff]
    %v2662 = vld [vmem:[%s10 + $0x80] sm:$0xff]
    %v2663 = vld [vmem:[%s10 + $0x88] sm:$0xff]
    %v2664 = vld [vmem:[%s10 + $0x90] sm:$0xff]
    %v2665 = vld [vmem:[%s10 + $0x98] sm:$0xff]
    %v2666 = vld [vmem:[%s10 + $0xa0] sm:$0xff]
    %v2667 = vld [vmem:[%s10 + $0xa8] sm:$0xff]
    %v2668 = vld [vmem:[%s10 + $0xb0] sm:$0xff]
    %v2669 = vld [vmem:[%s10 + $0xb8] sm:$0xff]
    %v2670 = vld [vmem:[%s10 + $0xc0] sm:$0xff]
    %v2671 = vld [vmem:[%s10 + $0xc8] sm:$0xff]
    %v2672 = vld [vmem:[%s10 + $0xd0] sm:$0xff]
    %v2673 = vld [vmem:[%s10 + $0xd8] sm:$0xff]
    %v2674 = vld [vmem:[%s10 + $0xe0] sm:$0xff]
    %v2675 = vld [vmem:[%s10 + $0xe8] sm:$0xff]
    %v2676 = vld [vmem:[%s10 + $0xf0] sm:$0x3]
    %v2678 = vsel %vm1475, %v2645, 0
    %v2681 = vsel %vm66, %v2676, 0
    %2683 = vmatprep.subr.mxu0 0.0
    %2684 = vmatpush1.msra.mxu0 %v2661
    %2685 = vmatprep.subr.mxu0 0.0
    %2686 = vmatpush1.msra.mxu0 %v2660
    %2687 = vmatprep.subr.mxu0 0.0
    %2688 = vmatpush1.msra.mxu0 %v2659
    %2689 = vmatprep.subr.mxu0 0.0
    %2690 = vmatpush1.msra.mxu0 %v2658
    %2691 = vmatprep.subr.mxu0 0.0
    %2692 = vmatpush1.msra.mxu0 %v2657
    %2693 = vmatprep.subr.mxu0 0.0
    %2694 = vmatpush1.msra.mxu0 %v2656
    %2695 = vmatprep.subr.mxu0 0.0
    %2696 = vmatpush1.msra.mxu0 %v2655
    %2697 = vmatprep.subr.mxu0 0.0
    %2698 = vmatpush1.msra.mxu0 %v2654
    %2699 = vmatprep.subr.mxu0 0.0
    %2700 = vmatpush1.msra.mxu0 %v2653
    %2701 = vmatprep.subr.mxu0 0.0
    %2702 = vmatpush1.msra.mxu0 %v2652
    %2703 = vmatprep.subr.mxu0 0.0
    %2704 = vmatpush1.msra.mxu0 %v2651
    %2705 = vmatprep.subr.mxu0 0.0
    %2706 = vmatpush1.msra.mxu0 %v2650
    %2707 = vmatprep.subr.mxu0 0.0
    %2708 = vmatpush1.msra.mxu0 %v2649
    %2709 = vmatprep.subr.mxu0 0.0
    %2710 = vmatpush1.msra.mxu0 %v2648
    %2711 = vmatprep.subr.mxu0 0.0
    %2712 = vmatpush1.msra.mxu0 %v2647
    %2713 = vmatprep.subr.mxu0 0.0
    %2714 = vmatpush1.msra.mxu0 %v2646
    %2715 = vmatprep.subr.mxu0 0.0
    %2716 = vmatpush2.msra.mxu0 0.0
    %2717 = vmatprep.subr.mxu0 0.0
    %2718 = vmatpush2.msra.mxu0 %v2681
    %2719 = vmatprep.subr.mxu0 0.0
    %2720 = vmatpush2.msra.mxu0 %v2675
    %2721 = vmatprep.subr.mxu0 0.0
    %2722 = vmatpush2.msra.mxu0 %v2674
    %2723 = vmatprep.subr.mxu0 0.0
    %2724 = vmatpush2.msra.mxu0 %v2673
    %2725 = vmatprep.subr.mxu0 0.0
    %2726 = vmatpush2.msra.mxu0 %v2672
    %2727 = vmatprep.subr.mxu0 0.0
    %2728 = vmatpush2.msra.mxu0 %v2671
    %2729 = vmatprep.subr.mxu0 0.0
    %2730 = vmatpush2.msra.mxu0 %v2670
    %2731 = vmatprep.subr.mxu0 0.0
    %2732 = vmatpush2.msra.mxu0 %v2669
    %2733 = vmatprep.subr.mxu0 0.0
    %2734 = vmatpush2.msra.mxu0 %v2668
    %2735 = vmatprep.subr.mxu0 0.0
    %2736 = vmatpush2.msra.mxu0 %v2667
    %2737 = vmatprep.subr.mxu0 0.0
    %2738 = vmatpush2.msra.mxu0 %v2666
    %2739 = vmatprep.subr.mxu0 0.0
    %2740 = vmatpush2.msra.mxu0 %v2665
    %2741 = vmatprep.subr.mxu0 0.0
    %2742 = vmatpush2.msra.mxu0 %v2664
    %2743 = vmatprep.subr.mxu0 0.0
    %2744 = vmatpush2.msra.mxu0 %v2663
    %2745 = vmatprep.subr.mxu0 0.0
    %2746 = vmatpush2.msra.mxu0 %v2662
    %2747 = vmatprep.mubr.f32.mxu0 %v2678
    %2748 = vmatmul.mubr.f32.gmra.mxu0 %v2644
    %v2749 = vpop.f32.mrf.mxu0
    %v2750 = vadd.f32 0.0, %v2749
    %v2751 = vpop.f32.mrf.mxu0
    %2752 = vdwg.mxu0
    %2754 = vrot.lane.b32.xlu0 %v2750, 96
    %v2755 = vpop.permute.xlu0 %2754
    %v2757 = vmax.f32 %v2750, %v2755
    %2759 = vrot.lane.b32.xlu0 %v2757, 64
    %v2760 = vpop.permute.xlu0 %2759
    %v2762 = vmax.f32 %v2757, %v2760
    %v2763 = vld [vmem:[%s9] sm:$0xff]
    %2765 = vset.pattern.permute.xlu0 0
    %2766 = vperm.xlu0 %2765, %v2763
    %v2767 = vpop.permute.xlu0 %2766
    %v2769 = vadd.f32 %v2762, %v2767
    %v2770 = vmax.f32 %v2769, 0.0
    %vm2771 = vcmask 122880
    %2772 = vst.msk [vmem:[#allocation4] sm:$0x1] %vm2771, %v2770
    %2774 = vrot.lane.b32.xlu0 %v2770, 16
    %v2775 = vpop.permute.xlu0 %2774
    %vm2777 = vcmask 255105
    %2778 = vst.msk [vmem:[#allocation4 - $0x1] sm:$0x2] %vm2777, %v2775
    %2779 = vrot.lane.b32.xlu0 %v2770, 32
    %v2780 = vpop.permute.xlu0 %2779
    %vm2782 = vcmask 387330
    %2783 = vst.msk [vmem:[#allocation4 - $0x2] sm:$0x4] %vm2782, %v2780
    %2784 = vrot.lane.b32.xlu0 %v2770, 48
    %v2785 = vpop.permute.xlu0 %2784
    %vm2787 = vcmask 519555
    %2788 = vst.msk [vmem:[#allocation4 - $0x3] sm:$0x8] %vm2787, %v2785
    %2789 = vrot.lane.b32.xlu0 %v2770, 64
    %v2790 = vpop.permute.xlu0 %2789
    %vm2792 = vcmask 651780
    %2793 = vst.msk [vmem:[#allocation4 - $0x4] sm:$0x10] %vm2792, %v2790
    %2794 = vrot.lane.b32.xlu0 %v2770, 80
    %v2795 = vpop.permute.xlu0 %2794
    %vm2797 = vcmask 784005
    %2798 = vst.msk [vmem:[#allocation4 - $0x5] sm:$0x20] %vm2797, %v2795
    %2799 = vrot.lane.b32.xlu0 %v2770, 96
    %v2800 = vpop.permute.xlu0 %2799
    %vm2802 = vcmask 916230
    %2803 = vst.msk [vmem:[#allocation4 - $0x6] sm:$0x40] %vm2802, %v2800
    %2804 = vrot.lane.b32.xlu0 %v2770, 112
    %v2805 = vpop.permute.xlu0 %2804
    %vm2807 = vcmask 1048455
    %2808 = vst.msk [vmem:[#allocation4 - $0x7] sm:$0x80] %vm2807, %v2805
    %2809 = vst.msk [vmem:[#allocation4 + $0x1] sm:$0x1] %vm2771, %v2805
    %2810 = vst.msk [vmem:[#allocation4] sm:$0x2] %vm2777, %v2770
    %2811 = vst.msk [vmem:[#allocation4 - $0x1] sm:$0x4] %vm2782, %v2775
    %2812 = vst.msk [vmem:[#allocation4 - $0x2] sm:$0x8] %vm2787, %v2780
    %2813 = vst.msk [vmem:[#allocation4 - $0x3] sm:$0x10] %vm2792, %v2785
    %2814 = vst.msk [vmem:[#allocation4 - $0x4] sm:$0x20] %vm2797, %v2790
    %2815 = vst.msk [vmem:[#allocation4 - $0x5] sm:$0x40] %vm2802, %v2795
    %2816 = vst.msk [vmem:[#allocation4 - $0x6] sm:$0x80] %vm2807, %v2800
    %v2817 = vld [vmem:[#allocation4] sm:$0x3]
    %v2818 = vld [vmem:[%s11] sm:$0xff]
    %v2819 = vld [vmem:[%s11 + $0x8] sm:$0xff]
    %v2820 = vld [vmem:[%s11 + $0x10] sm:$0xff]
    %v2821 = vld [vmem:[%s11 + $0x18] sm:$0xff]
    %v2822 = vld [vmem:[%s11 + $0x20] sm:$0xff]
    %v2823 = vld [vmem:[%s11 + $0x28] sm:$0xff]
    %v2824 = vld [vmem:[%s11 + $0x30] sm:$0xff]
    %v2825 = vld [vmem:[%s11 + $0x38] sm:$0xff]
    %v2826 = vld [vmem:[%s11 + $0x40] sm:$0xff]
    %v2827 = vld [vmem:[%s11 + $0x48] sm:$0xff]
    %v2828 = vld [vmem:[%s11 + $0x50] sm:$0xff]
    %v2829 = vld [vmem:[%s11 + $0x58] sm:$0xff]
    %v2830 = vld [vmem:[%s11 + $0x60] sm:$0xff]
    %v2831 = vld [vmem:[%s11 + $0x68] sm:$0xff]
    %v2832 = vld [vmem:[%s11 + $0x70] sm:$0xff]
    %v2833 = vld [vmem:[%s11 + $0x78] sm:$0xff]
    %v2834 = vld [vmem:[%s12] sm:$0x1]
    %v2836 = vlaneseq
    %v2837 = vshrl.u32 %v2836, 7
    %v2838 = vsub.s32 0, %v2837
    %v2839 = vrot.slane %v2834, %v2838
    %2841 = vmatprep.subr.mxu0 0.0
    %2842 = vmatpush1.msra.mxu0 %v2833
    %2843 = vmatprep.subr.mxu0 0.0
    %2844 = vmatpush1.msra.mxu0 %v2832
    %2845 = vmatprep.subr.mxu0 0.0
    %2846 = vmatpush1.msra.mxu0 %v2831
    %2847 = vmatprep.subr.mxu0 0.0
    %2848 = vmatpush1.msra.mxu0 %v2830
    %2849 = vmatprep.subr.mxu0 0.0
    %2850 = vmatpush1.msra.mxu0 %v2829
    %2851 = vmatprep.subr.mxu0 0.0
    %2852 = vmatpush1.msra.mxu0 %v2828
    %2853 = vmatprep.subr.mxu0 0.0
    %2854 = vmatpush1.msra.mxu0 %v2827
    %2855 = vmatprep.subr.mxu0 0.0
    %2856 = vmatpush1.msra.mxu0 %v2826
    %2857 = vmatprep.subr.mxu0 0.0
    %2858 = vmatpush1.msra.mxu0 %v2825
    %2859 = vmatprep.subr.mxu0 0.0
    %2860 = vmatpush1.msra.mxu0 %v2824
    %2861 = vmatprep.subr.mxu0 0.0
    %2862 = vmatpush1.msra.mxu0 %v2823
    %2863 = vmatprep.subr.mxu0 0.0
    %2864 = vmatpush1.msra.mxu0 %v2822
    %2865 = vmatprep.subr.mxu0 0.0
    %2866 = vmatpush1.msra.mxu0 %v2821
    %2867 = vmatprep.subr.mxu0 0.0
    %2868 = vmatpush1.msra.mxu0 %v2820
    %2869 = vmatprep.subr.mxu0 0.0
    %2870 = vmatpush1.msra.mxu0 %v2819
    %2871 = vmatprep.subr.mxu0 0.0
    %2872 = vmatpush1.msra.mxu0 %v2818
    %2873 = vmatprep.subr.mxu0 0.0
    %2874 = vmatpush2.msra.mxu0 0.0
    %2875 = vmatprep.subr.mxu0 0.0
    %2876 = vmatpush2.msra.mxu0 0.0
    %2877 = vmatprep.subr.mxu0 0.0
    %2878 = vmatpush2.msra.mxu0 0.0
    %2879 = vmatprep.subr.mxu0 0.0
    %2880 = vmatpush2.msra.mxu0 0.0
    %2881 = vmatprep.subr.mxu0 0.0
    %2882 = vmatpush2.msra.mxu0 0.0
    %2883 = vmatprep.subr.mxu0 0.0
    %2884 = vmatpush2.msra.mxu0 0.0
    %2885 = vmatprep.subr.mxu0 0.0
    %2886 = vmatpush2.msra.mxu0 0.0
    %2887 = vmatprep.subr.mxu0 0.0
    %2888 = vmatpush2.msra.mxu0 0.0
    %2889 = vmatprep.subr.mxu0 0.0
    %2890 = vmatpush2.msra.mxu0 0.0
    %2891 = vmatprep.subr.mxu0 0.0
    %2892 = vmatpush2.msra.mxu0 0.0
    %2893 = vmatprep.subr.mxu0 0.0
    %2894 = vmatpush2.msra.mxu0 0.0
    %2895 = vmatprep.subr.mxu0 0.0
    %2896 = vmatpush2.msra.mxu0 0.0
    %2897 = vmatprep.subr.mxu0 0.0
    %2898 = vmatpush2.msra.mxu0 0.0
    %2899 = vmatprep.subr.mxu0 0.0
    %2900 = vmatpush2.msra.mxu0 0.0
    %2901 = vmatprep.subr.mxu0 0.0
    %2902 = vmatpush2.msra.mxu0 0.0
    %2903 = vmatprep.subr.mxu0 0.0
    %2904 = vmatpush2.msra.mxu0 0.0
    %2905 = vmatprep.mubr.f32.mxu0 0.0
    %2906 = vmatmul.mubr.f32.gmra.mxu0 %v2817
    %v2907 = vpop.f32.mrf.mxu0
    %v2908 = vadd.f32 %v2839, %v2907
    %v2909 = vpop.f32.mrf.mxu0
    %2910 = vdwg.mxu0
    %vm2911 = vcmask 74752
    %2912 = vst.msk [vmem:[#allocation5] sm:$0x3] %vm2911, %v2908
    // Predicated region
    $region54: #{forward.1} parent=1 // pred_check
      _
    $region55: #{forward.1} parent=1 // pred_check_branch
      %2914 = sbr.rel (0) target = $region57
    $region56: #{forward.1} parent=1 // pred_region
      %s2916 = ssub.s32 32, 32
      %2917 = vsyncadd [#allocation6], %s2916
      %s2919 = sshll.u32 [#allocation5], 4
      %s2920 = int_to_ptr.vmem [resolvable:$true] %s2919
      %2922 = dma.vmem_to_hbm [thread:$0]  %s2920, 32, %s13, [#allocation6]
    $region57: #{forward.1} parent=1 // pred_fallthru
      _
    // Predicated region
    $region58: #{forward.1} parent=1 // pred_check
      _
    $region59: #{forward.1} parent=1 // pred_check_branch
      %2924 = sbr.rel (0) target = $region61
    $region60: #{forward.1} parent=1 // pred_region
      %2925 = dma.done [#allocation6], 32
    $region61: #{forward.1} parent=1 // pred_fallthru
      _
    %2926 = vsyncpa [#allocation6], 1

</llo_original>
